<compile_context>
chip_gen: v7x
topology: tpu7x:2x2x1
jax: 0.10.0
libtpu: 0.0.40
codegen_flags: <defaults>
</compile_context>

<pallas_src>
import functools
import math

import jax
import jax.numpy as jnp
from jax.experimental import pallas as pl
from jax.experimental.pallas import tpu as pltpu


# ---------------------------------------------------------------------------
# Fused kernel: the full num_layers encoder stack on a (M=B*S, E) token slab.
# All refs are whole arrays resident in VMEM; the body runs once (no grid).
# ---------------------------------------------------------------------------
def _fused_encoder_stack_kernel(
    x_ref,
    wq_ref, bq_ref, wk_ref, bk_ref, wv_ref, bv_ref,
    wo_ref, bo_ref,
    w1_ref, b1_ref, w2_ref, b2_ref,
    ln1w_ref, ln1b_ref, ln2w_ref, ln2b_ref,
    o_ref,
    *, num_layers, batch, seq, heads, eps):
  M, E = x_ref.shape
  D = E // heads
  scale = 1.0 / math.sqrt(D)

  # ---- constant masks, built once and reused by every layer -------------
  # Head masks: (1, E) float, ones on head h's D feature columns.
  col_e = jax.lax.broadcasted_iota(jnp.int32, (1, E), 1)
  head_masks = [
      jnp.logical_and(col_e >= h * D, col_e < (h + 1) * D).astype(jnp.float32)
      for h in range(heads)
  ]
  # Same-batch mask: (M, M) bool, True iff tokens i, j belong to the same
  # batch element (built with comparisons only -- no integer division).
  row = jax.lax.broadcasted_iota(jnp.int32, (M, M), 0)
  col = jax.lax.broadcasted_iota(jnp.int32, (M, M), 1)

  def _block(b):
    lo, hi = b * seq, (b + 1) * seq
    return ((row >= lo) & (row < hi)) & ((col >= lo) & (col < hi))

  same_batch = _block(0)
  for b in range(1, batch):
    same_batch = jnp.logical_or(same_batch, _block(b))

  # ---- small helpers -----------------------------------------------------
  def matmul_nt(a, w):
    # a: (M, K), w: (N, K)  ->  a @ w^T, f32 accumulate, default MXU precision.
    return jax.lax.dot_general(
        a, w,
        dimension_numbers=(((1,), (1,)), ((), ())),
        preferred_element_type=jnp.float32)

  def layer_norm(t, g, b):
    mean = jnp.mean(t, axis=-1, keepdims=True)
    c = t - mean
    var = jnp.mean(c * c, axis=-1, keepdims=True)
    return c * jax.lax.rsqrt(var + eps) * g + b

  # ---- encoder stack (static unroll over layers) --------------------------
  y = x_ref[...].astype(jnp.float32)                       # (M, E)
  for l in range(num_layers):
    # --- self-attention block ---
    q = (matmul_nt(y, wq_ref[l]) + bq_ref[l]) * scale      # scale folded into Q
    k = matmul_nt(y, wk_ref[l]) + bk_ref[l]
    v = matmul_nt(y, wv_ref[l]) + bv_ref[l]

    attn = jnp.zeros((M, E), jnp.float32)
    for hm in head_masks:
      # Per-head scores via full-E contraction with the head mask on Q.
      s = matmul_nt(q * hm, k)                             # (M, M)
      s = jnp.where(same_batch, s, -1e30)                  # no cross-batch attn
      s = s - jnp.max(s, axis=-1, keepdims=True)
      p = jnp.exp(s)
      p = p * pl.reciprocal(jnp.sum(p, axis=-1, keepdims=True), approx=True)
      # P @ V, then keep only this head's feature columns.
      attn = attn + jnp.dot(p, v, preferred_element_type=jnp.float32) * hm

    attn = matmul_nt(attn, wo_ref[l]) + bo_ref[l]          # out projection
    y = layer_norm(y + attn, ln1w_ref[l], ln1b_ref[l])

    # --- feed-forward block ---
    h1 = jnp.maximum(matmul_nt(y, w1_ref[l]) + b1_ref[l], 0.0)
    h2 = matmul_nt(h1, w2_ref[l]) + b2_ref[l]
    y = layer_norm(y + h2, ln2w_ref[l], ln2b_ref[l])

  o_ref[...] = y.astype(o_ref.dtype)


@functools.partial(jax.jit, static_argnames=("num_heads", "eps"))
def transformer_layer(x, params, *, num_heads, eps=1e-5):
  """Equivalent of Transformer_layer.forward (eval mode). x: (B, S, E)."""
  B, S, E = x.shape
  M = B * S
  L = params["wq"].shape[0]

  kernel = functools.partial(
      _fused_encoder_stack_kernel,
      num_layers=L, batch=B, seq=S, heads=num_heads, eps=eps)

  args = (
      x.reshape(M, E),
      params["wq"], params["bq"], params["wk"], params["bk"],
      params["wv"], params["bv"],
      params["wo"], params["bo"],
      params["w1"], params["b1"], params["w2"], params["b2"],
      params["ln1w"], params["ln1b"], params["ln2w"], params["ln2b"],
  )
  vmem_specs = [pl.BlockSpec(memory_space=pltpu.MemorySpace.VMEM)
                for _ in range(len(args))]

  out = pl.pallas_call(
      kernel,
      out_shape=jax.ShapeDtypeStruct((M, E), x.dtype),
      in_specs=vmem_specs,
      out_specs=pl.BlockSpec(memory_space=pltpu.MemorySpace.VMEM),
  )(*args)
  return out.reshape(B, S, E)


# ---------------------------------------------------------------------------
# Deterministic parameter init (PyTorch-style), stacked over the layer axis.
# The fused in_proj (3E, E) is split into Wq/Wk/Wv here (host-side, one-time)
# so the kernel never has to lane-slice the qkv activation.
# ---------------------------------------------------------------------------
def init_stacked_params(key, num_layers, emb_dim, dim_feedforward):
  E, F, L = emb_dim, dim_feedforward, num_layers

  def lin(kk, n_out, n_in):
    bound = 1.0 / math.sqrt(n_in)
    kw, kb = jax.random.split(kk)
    w = jax.random.uniform(kw, (n_out, n_in), minval=-bound, maxval=bound,
                           dtype=jnp.float32)
    b = jax.random.uniform(kb, (n_out,), minval=-bound, maxval=bound,
                           dtype=jnp.float32)
    return w, b

  per_layer = []
  for lk in jax.random.split(key, L):
    ks = jax.random.split(lk, 8)
    in_w, in_b = lin(ks[0], 3 * E, E)
    out_w, out_b = lin(ks[1], E, E)
    w1, b1 = lin(ks[2], F, E)
    w2, b2 = lin(ks[3], E, F)
    ln1w = 1.0 + 0.1 * jax.random.normal(ks[4], (E,), dtype=jnp.float32)
    ln1b = 0.1 * jax.random.normal(ks[5], (E,), dtype=jnp.float32)
    ln2w = 1.0 + 0.1 * jax.random.normal(ks[6], (E,), dtype=jnp.float32)
    ln2b = 0.1 * jax.random.normal(ks[7], (E,), dtype=jnp.float32)
    per_layer.append(dict(
        wq=in_w[:E], wk=in_w[E:2 * E], wv=in_w[2 * E:],
        bq=in_b[:E], bk=in_b[E:2 * E], bv=in_b[2 * E:],
        wo=out_w, bo=out_b, w1=w1, b1=b1, w2=w2, b2=b2,
        ln1w=ln1w, ln1b=ln1b, ln2w=ln2w, ln2b=ln2b))

  def stack(name, as_row=False):
    arr = jnp.stack([p[name] for p in per_layer], axis=0)
    if as_row:                       # biases / LN params -> (L, 1, N) rows
      arr = arr.reshape(L, 1, -1)
    return arr

  return dict(
      wq=stack("wq"), bq=stack("bq", True),
      wk=stack("wk"), bk=stack("bk", True),
      wv=stack("wv"), bv=stack("bv", True),
      wo=stack("wo"), bo=stack("bo", True),
      w1=stack("w1"), b1=stack("b1", True),
      w2=stack("w2"), b2=stack("b2", True),
      ln1w=stack("ln1w", True), ln1b=stack("ln1b", True),
      ln2w=stack("ln2w", True), ln2b=stack("ln2b", True))


# ---------------------------------------------------------------------------
# Pure-JAX reference (strict f32 math) for the correctness check.
# ---------------------------------------------------------------------------
def _ref_layer_norm(x, g, b, eps=1e-5):
  mean = jnp.mean(x, axis=-1, keepdims=True)
  var = jnp.mean((x - mean) ** 2, axis=-1, keepdims=True)
  return (x - mean) / jnp.sqrt(var + eps) * g + b


def _ref_forward(x, p, num_heads, eps=1e-5):
  B, S, E = x.shape
  H = num_heads
  D = E // H
  L = p["wq"].shape[0]
  y = x.reshape(B * S, E)
  for l in range(L):
    q = y @ p["wq"][l].T + p["bq"][l][0]
    k = y @ p["wk"][l].T + p["bk"][l][0]
    v = y @ p["wv"][l].T + p["bv"][l][0]

    def heads(t):
      return t.reshape(B, S, H, D).transpose(0, 2, 1, 3)

    qh, kh, vh = heads(q), heads(k), heads(v)
    s = jnp.einsum("bhqd,bhkd->bhqk", qh, kh) / math.sqrt(D)
    a = jax.nn.softmax(s, axis=-1)
    o = jnp.einsum("bhqk,bhkd->bhqd", a, vh)
    o = o.transpose(0, 2, 1, 3).reshape(B * S, E)
    attn = o @ p["wo"][l].T + p["bo"][l][0]
    y = _ref_layer_norm(y + attn, p["ln1w"][l][0], p["ln1b"][l][0], eps)
    h1 = jnp.maximum(y @ p["w1"][l].T + p["b1"][l][0], 0.0)
    h2 = h1 @ p["w2"][l].T + p["b2"][l][0]
    y = _ref_layer_norm(y + h2, p["ln2w"][l][0], p["ln2b"][l][0], eps)
  return y.reshape(B, S, E)


if __name__ == "__main__":
  batch, seq_len, emb_dim = 2, 8, 32
  num_heads, dim_feedforward, num_layers = 4, 64, 2

  key = jax.random.PRNGKey(0)
  kx, kp = jax.random.split(key)
  x = jax.random.normal(kx, (batch, seq_len, emb_dim), dtype=jnp.float32)
  params = init_stacked_params(kp, num_layers, emb_dim, dim_feedforward)

  out = transformer_layer(x, params, num_heads=num_heads)
  out = jax.block_until_ready(out)

  with jax.default_matmul_precision("highest"):
    ref = jax.block_until_ready(_ref_forward(x, params, num_heads))

  assert out.shape == (batch, seq_len, emb_dim)
  max_err = float(jnp.max(jnp.abs(out - ref)))
  # Kernel uses default single-pass MXU precision (per perf review) vs. a
  # strict-f32 reference, so allow bf16-pass-level deviation.
  assert max_err < 2e-2, f"max_err={max_err}"

  print("KERNEL_OK")
</pallas_src>

<mosaic_0001>
module attributes {stable_mosaic.version = 11 : i64} {
  func.func @_fused_encoder_stack_kernel(%arg0: memref<16x32xf32, #tpu.memory_space<vmem>>, %arg1: memref<2x32x32xf32, #tpu.memory_space<vmem>>, %arg2: memref<2x1x32xf32, #tpu.memory_space<vmem>>, %arg3: memref<2x32x32xf32, #tpu.memory_space<vmem>>, %arg4: memref<2x1x32xf32, #tpu.memory_space<vmem>>, %arg5: memref<2x32x32xf32, #tpu.memory_space<vmem>>, %arg6: memref<2x1x32xf32, #tpu.memory_space<vmem>>, %arg7: memref<2x32x32xf32, #tpu.memory_space<vmem>>, %arg8: memref<2x1x32xf32, #tpu.memory_space<vmem>>, %arg9: memref<2x64x32xf32, #tpu.memory_space<vmem>>, %arg10: memref<2x1x64xf32, #tpu.memory_space<vmem>>, %arg11: memref<2x32x64xf32, #tpu.memory_space<vmem>>, %arg12: memref<2x1x32xf32, #tpu.memory_space<vmem>>, %arg13: memref<2x1x32xf32, #tpu.memory_space<vmem>>, %arg14: memref<2x1x32xf32, #tpu.memory_space<vmem>>, %arg15: memref<2x1x32xf32, #tpu.memory_space<vmem>>, %arg16: memref<2x1x32xf32, #tpu.memory_space<vmem>>, %arg17: memref<16x32xf32, #tpu.memory_space<vmem>>) attributes {dimension_semantics = [], scalar_prefetch = 0 : i64, scratch_operands = 0 : i64, tpu.core_type = #tpu.core_type<tc>} {
    %0 = tpu.iota {dimensions = array<i32: 1>} : vector<1x32xi32>
    %c0_i32 = arith.constant 0 : i32
    %1 = vector.broadcast %c0_i32 : i32 to vector<1x32xi32>
    %2 = arith.cmpi sge, %0, %1 : vector<1x32xi32>
    %c8_i32 = arith.constant 8 : i32
    %3 = vector.broadcast %c8_i32 : i32 to vector<1x32xi32>
    %4 = arith.cmpi slt, %0, %3 : vector<1x32xi32>
    %5 = arith.andi %2, %4 : vector<1x32xi1>
    %6 = arith.extui %5 : vector<1x32xi1> to vector<1x32xi32>
    %7 = arith.sitofp %6 : vector<1x32xi32> to vector<1x32xf32>
    %c8_i32_0 = arith.constant 8 : i32
    %8 = vector.broadcast %c8_i32_0 : i32 to vector<1x32xi32>
    %9 = arith.cmpi sge, %0, %8 : vector<1x32xi32>
    %c16_i32 = arith.constant 16 : i32
    %10 = vector.broadcast %c16_i32 : i32 to vector<1x32xi32>
    %11 = arith.cmpi slt, %0, %10 : vector<1x32xi32>
    %12 = arith.andi %9, %11 : vector<1x32xi1>
    %13 = arith.extui %12 : vector<1x32xi1> to vector<1x32xi32>
    %14 = arith.sitofp %13 : vector<1x32xi32> to vector<1x32xf32>
    %c16_i32_1 = arith.constant 16 : i32
    %15 = vector.broadcast %c16_i32_1 : i32 to vector<1x32xi32>
    %16 = arith.cmpi sge, %0, %15 : vector<1x32xi32>
    %c24_i32 = arith.constant 24 : i32
    %17 = vector.broadcast %c24_i32 : i32 to vector<1x32xi32>
    %18 = arith.cmpi slt, %0, %17 : vector<1x32xi32>
    %19 = arith.andi %16, %18 : vector<1x32xi1>
    %20 = arith.extui %19 : vector<1x32xi1> to vector<1x32xi32>
    %21 = arith.sitofp %20 : vector<1x32xi32> to vector<1x32xf32>
    %c24_i32_2 = arith.constant 24 : i32
    %22 = vector.broadcast %c24_i32_2 : i32 to vector<1x32xi32>
    %23 = arith.cmpi sge, %0, %22 : vector<1x32xi32>
    %c32_i32 = arith.constant 32 : i32
    %24 = vector.broadcast %c32_i32 : i32 to vector<1x32xi32>
    %25 = arith.cmpi slt, %0, %24 : vector<1x32xi32>
    %26 = arith.andi %23, %25 : vector<1x32xi1>
    %27 = arith.extui %26 : vector<1x32xi1> to vector<1x32xi32>
    %28 = arith.sitofp %27 : vector<1x32xi32> to vector<1x32xf32>
    %29 = tpu.iota {dimensions = array<i32: 0>} : vector<16x16xi32>
    %30 = tpu.iota {dimensions = array<i32: 1>} : vector<16x16xi32>
    %c0_i32_3 = arith.constant 0 : i32
    %31 = vector.broadcast %c0_i32_3 : i32 to vector<16x16xi32>
    %32 = arith.cmpi sge, %29, %31 : vector<16x16xi32>
    %c8_i32_4 = arith.constant 8 : i32
    %33 = vector.broadcast %c8_i32_4 : i32 to vector<16x16xi32>
    %34 = arith.cmpi slt, %29, %33 : vector<16x16xi32>
    %35 = arith.andi %32, %34 : vector<16x16xi1>
    %c0_i32_5 = arith.constant 0 : i32
    %36 = vector.broadcast %c0_i32_5 : i32 to vector<16x16xi32>
    %37 = arith.cmpi sge, %30, %36 : vector<16x16xi32>
    %c8_i32_6 = arith.constant 8 : i32
    %38 = vector.broadcast %c8_i32_6 : i32 to vector<16x16xi32>
    %39 = arith.cmpi slt, %30, %38 : vector<16x16xi32>
    %40 = arith.andi %37, %39 : vector<16x16xi1>
    %41 = arith.andi %35, %40 : vector<16x16xi1>
    %c8_i32_7 = arith.constant 8 : i32
    %42 = vector.broadcast %c8_i32_7 : i32 to vector<16x16xi32>
    %43 = arith.cmpi sge, %29, %42 : vector<16x16xi32>
    %c16_i32_8 = arith.constant 16 : i32
    %44 = vector.broadcast %c16_i32_8 : i32 to vector<16x16xi32>
    %45 = arith.cmpi slt, %29, %44 : vector<16x16xi32>
    %46 = arith.andi %43, %45 : vector<16x16xi1>
    %c8_i32_9 = arith.constant 8 : i32
    %47 = vector.broadcast %c8_i32_9 : i32 to vector<16x16xi32>
    %48 = arith.cmpi sge, %30, %47 : vector<16x16xi32>
    %c16_i32_10 = arith.constant 16 : i32
    %49 = vector.broadcast %c16_i32_10 : i32 to vector<16x16xi32>
    %50 = arith.cmpi slt, %30, %49 : vector<16x16xi32>
    %51 = arith.andi %48, %50 : vector<16x16xi1>
    %52 = arith.andi %46, %51 : vector<16x16xi1>
    %53 = arith.ori %41, %52 : vector<16x16xi1>
    %c0 = arith.constant 0 : index
    %c0_11 = arith.constant 0 : index
    %54 = vector.load %arg0[%c0, %c0_11] : memref<16x32xf32, #tpu.memory_space<vmem>>, vector<16x32xf32>
    %c0_12 = arith.constant 0 : index
    %c0_13 = arith.constant 0 : index
    %c0_14 = arith.constant 0 : index
    %55 = vector.load %arg1[%c0_12, %c0_13, %c0_14] : memref<2x32x32xf32, #tpu.memory_space<vmem>>, vector<1x32x32xf32>
    %56 = vector.shape_cast %55 : vector<1x32x32xf32> to vector<32x32xf32>
    %cst = arith.constant dense<0.000000e+00> : vector<16x32xf32>
    %57 = tpu.matmul %54, %56, %cst {dimension_numbers = #tpu.dot_dimension_numbers<[1], [1], [0], [0], [0, 0, 1, 0], [], []>} : vector<16x32xf32>, vector<32x32xf32>, vector<16x32xf32> -> vector<16x32xf32>
    %c0_15 = arith.constant 0 : index
    %c0_16 = arith.constant 0 : index
    %c0_17 = arith.constant 0 : index
    %58 = vector.load %arg2[%c0_15, %c0_16, %c0_17] : memref<2x1x32xf32, #tpu.memory_space<vmem>>, vector<1x1x32xf32>
    %59 = vector.shape_cast %58 : vector<1x1x32xf32> to vector<1x32xf32>
    %60 = vector.broadcast %59 : vector<1x32xf32> to vector<16x32xf32>
    %61 = arith.addf %57, %60 : vector<16x32xf32>
    %cst_18 = arith.constant 0.353553385 : f32
    %62 = vector.broadcast %cst_18 : f32 to vector<16x32xf32>
    %63 = arith.mulf %61, %62 : vector<16x32xf32>
    %c0_19 = arith.constant 0 : index
    %c0_20 = arith.constant 0 : index
    %c0_21 = arith.constant 0 : index
    %64 = vector.load %arg3[%c0_19, %c0_20, %c0_21] : memref<2x32x32xf32, #tpu.memory_space<vmem>>, vector<1x32x32xf32>
    %65 = vector.shape_cast %64 : vector<1x32x32xf32> to vector<32x32xf32>
    %cst_22 = arith.constant dense<0.000000e+00> : vector<16x32xf32>
    %66 = tpu.matmul %54, %65, %cst_22 {dimension_numbers = #tpu.dot_dimension_numbers<[1], [1], [0], [0], [0, 0, 1, 0], [], []>} : vector<16x32xf32>, vector<32x32xf32>, vector<16x32xf32> -> vector<16x32xf32>
    %c0_23 = arith.constant 0 : index
    %c0_24 = arith.constant 0 : index
    %c0_25 = arith.constant 0 : index
    %67 = vector.load %arg4[%c0_23, %c0_24, %c0_25] : memref<2x1x32xf32, #tpu.memory_space<vmem>>, vector<1x1x32xf32>
    %68 = vector.shape_cast %67 : vector<1x1x32xf32> to vector<1x32xf32>
    %69 = vector.broadcast %68 : vector<1x32xf32> to vector<16x32xf32>
    %70 = arith.addf %66, %69 : vector<16x32xf32>
    %c0_26 = arith.constant 0 : index
    %c0_27 = arith.constant 0 : index
    %c0_28 = arith.constant 0 : index
    %71 = vector.load %arg5[%c0_26, %c0_27, %c0_28] : memref<2x32x32xf32, #tpu.memory_space<vmem>>, vector<1x32x32xf32>
    %72 = vector.shape_cast %71 : vector<1x32x32xf32> to vector<32x32xf32>
    %cst_29 = arith.constant dense<0.000000e+00> : vector<16x32xf32>
    %73 = tpu.matmul %54, %72, %cst_29 {dimension_numbers = #tpu.dot_dimension_numbers<[1], [1], [0], [0], [0, 0, 1, 0], [], []>} : vector<16x32xf32>, vector<32x32xf32>, vector<16x32xf32> -> vector<16x32xf32>
    %c0_30 = arith.constant 0 : index
    %c0_31 = arith.constant 0 : index
    %c0_32 = arith.constant 0 : index
    %74 = vector.load %arg6[%c0_30, %c0_31, %c0_32] : memref<2x1x32xf32, #tpu.memory_space<vmem>>, vector<1x1x32xf32>
    %75 = vector.shape_cast %74 : vector<1x1x32xf32> to vector<1x32xf32>
    %76 = vector.broadcast %75 : vector<1x32xf32> to vector<16x32xf32>
    %77 = arith.addf %73, %76 : vector<16x32xf32>
    %cst_33 = arith.constant 0.000000e+00 : f32
    %78 = vector.broadcast %cst_33 : f32 to vector<16x32xf32>
    %79 = vector.broadcast %7 : vector<1x32xf32> to vector<16x32xf32>
    %80 = arith.mulf %63, %79 : vector<16x32xf32>
    %cst_34 = arith.constant dense<0.000000e+00> : vector<16x16xf32>
    %81 = tpu.matmul %80, %70, %cst_34 {dimension_numbers = #tpu.dot_dimension_numbers<[1], [1], [0], [0], [0, 0, 1, 0], [], []>} : vector<16x32xf32>, vector<16x32xf32>, vector<16x16xf32> -> vector<16x16xf32>
    %cst_35 = arith.constant -1.000000e+30 : f32
    %82 = vector.broadcast %cst_35 : f32 to vector<16x16xf32>
    %83 = arith.select %53, %81, %82 : vector<16x16xi1>, vector<16x16xf32>
    %cst_36 = arith.constant dense<0xFF800000> : vector<16xf32>
    %84 = vector.multi_reduction <maximumf>, %83, %cst_36 [1] : vector<16x16xf32> to vector<16xf32>
    %85 = vector.shape_cast %84 : vector<16xf32> to vector<16x1xf32>
    %86 = vector.broadcast %85 : vector<16x1xf32> to vector<16x16xf32>
    %87 = arith.subf %83, %86 : vector<16x16xf32>
    %88 = math.exp %87 : vector<16x16xf32>
    %cst_37 = arith.constant dense<0.000000e+00> : vector<16xf32>
    %89 = vector.multi_reduction <add>, %88, %cst_37 [1] : vector<16x16xf32> to vector<16xf32>
    %90 = vector.shape_cast %89 : vector<16xf32> to vector<16x1xf32>
    %91 = tpu.reciprocal %90 {approx = true} : vector<16x1xf32> -> vector<16x1xf32>
    %92 = vector.broadcast %91 : vector<16x1xf32> to vector<16x16xf32>
    %93 = arith.mulf %88, %92 : vector<16x16xf32>
    %cst_38 = arith.constant dense<0.000000e+00> : vector<16x32xf32>
    %94 = tpu.matmul %93, %77, %cst_38 {dimension_numbers = #tpu.dot_dimension_numbers<[1], [0], [0], [1], [0, 0, 1, 1], [], []>} : vector<16x16xf32>, vector<16x32xf32>, vector<16x32xf32> -> vector<16x32xf32>
    %95 = vector.broadcast %7 : vector<1x32xf32> to vector<16x32xf32>
    %96 = arith.mulf %94, %95 : vector<16x32xf32>
    %97 = arith.addf %78, %96 : vector<16x32xf32>
    %98 = vector.broadcast %14 : vector<1x32xf32> to vector<16x32xf32>
    %99 = arith.mulf %63, %98 : vector<16x32xf32>
    %cst_39 = arith.constant dense<0.000000e+00> : vector<16x16xf32>
    %100 = tpu.matmul %99, %70, %cst_39 {dimension_numbers = #tpu.dot_dimension_numbers<[1], [1], [0], [0], [0, 0, 1, 0], [], []>} : vector<16x32xf32>, vector<16x32xf32>, vector<16x16xf32> -> vector<16x16xf32>
    %cst_40 = arith.constant -1.000000e+30 : f32
    %101 = vector.broadcast %cst_40 : f32 to vector<16x16xf32>
    %102 = arith.select %53, %100, %101 : vector<16x16xi1>, vector<16x16xf32>
    %cst_41 = arith.constant dense<0xFF800000> : vector<16xf32>
    %103 = vector.multi_reduction <maximumf>, %102, %cst_41 [1] : vector<16x16xf32> to vector<16xf32>
    %104 = vector.shape_cast %103 : vector<16xf32> to vector<16x1xf32>
    %105 = vector.broadcast %104 : vector<16x1xf32> to vector<16x16xf32>
    %106 = arith.subf %102, %105 : vector<16x16xf32>
    %107 = math.exp %106 : vector<16x16xf32>
    %cst_42 = arith.constant dense<0.000000e+00> : vector<16xf32>
    %108 = vector.multi_reduction <add>, %107, %cst_42 [1] : vector<16x16xf32> to vector<16xf32>
    %109 = vector.shape_cast %108 : vector<16xf32> to vector<16x1xf32>
    %110 = tpu.reciprocal %109 {approx = true} : vector<16x1xf32> -> vector<16x1xf32>
    %111 = vector.broadcast %110 : vector<16x1xf32> to vector<16x16xf32>
    %112 = arith.mulf %107, %111 : vector<16x16xf32>
    %cst_43 = arith.constant dense<0.000000e+00> : vector<16x32xf32>
    %113 = tpu.matmul %112, %77, %cst_43 {dimension_numbers = #tpu.dot_dimension_numbers<[1], [0], [0], [1], [0, 0, 1, 1], [], []>} : vector<16x16xf32>, vector<16x32xf32>, vector<16x32xf32> -> vector<16x32xf32>
    %114 = vector.broadcast %14 : vector<1x32xf32> to vector<16x32xf32>
    %115 = arith.mulf %113, %114 : vector<16x32xf32>
    %116 = arith.addf %97, %115 : vector<16x32xf32>
    %117 = vector.broadcast %21 : vector<1x32xf32> to vector<16x32xf32>
    %118 = arith.mulf %63, %117 : vector<16x32xf32>
    %cst_44 = arith.constant dense<0.000000e+00> : vector<16x16xf32>
    %119 = tpu.matmul %118, %70, %cst_44 {dimension_numbers = #tpu.dot_dimension_numbers<[1], [1], [0], [0], [0, 0, 1, 0], [], []>} : vector<16x32xf32>, vector<16x32xf32>, vector<16x16xf32> -> vector<16x16xf32>
    %cst_45 = arith.constant -1.000000e+30 : f32
    %120 = vector.broadcast %cst_45 : f32 to vector<16x16xf32>
    %121 = arith.select %53, %119, %120 : vector<16x16xi1>, vector<16x16xf32>
    %cst_46 = arith.constant dense<0xFF800000> : vector<16xf32>
    %122 = vector.multi_reduction <maximumf>, %121, %cst_46 [1] : vector<16x16xf32> to vector<16xf32>
    %123 = vector.shape_cast %122 : vector<16xf32> to vector<16x1xf32>
    %124 = vector.broadcast %123 : vector<16x1xf32> to vector<16x16xf32>
    %125 = arith.subf %121, %124 : vector<16x16xf32>
    %126 = math.exp %125 : vector<16x16xf32>
    %cst_47 = arith.constant dense<0.000000e+00> : vector<16xf32>
    %127 = vector.multi_reduction <add>, %126, %cst_47 [1] : vector<16x16xf32> to vector<16xf32>
    %128 = vector.shape_cast %127 : vector<16xf32> to vector<16x1xf32>
    %129 = tpu.reciprocal %128 {approx = true} : vector<16x1xf32> -> vector<16x1xf32>
    %130 = vector.broadcast %129 : vector<16x1xf32> to vector<16x16xf32>
    %131 = arith.mulf %126, %130 : vector<16x16xf32>
    %cst_48 = arith.constant dense<0.000000e+00> : vector<16x32xf32>
    %132 = tpu.matmul %131, %77, %cst_48 {dimension_numbers = #tpu.dot_dimension_numbers<[1], [0], [0], [1], [0, 0, 1, 1], [], []>} : vector<16x16xf32>, vector<16x32xf32>, vector<16x32xf32> -> vector<16x32xf32>
    %133 = vector.broadcast %21 : vector<1x32xf32> to vector<16x32xf32>
    %134 = arith.mulf %132, %133 : vector<16x32xf32>
    %135 = arith.addf %116, %134 : vector<16x32xf32>
    %136 = vector.broadcast %28 : vector<1x32xf32> to vector<16x32xf32>
    %137 = arith.mulf %63, %136 : vector<16x32xf32>
    %cst_49 = arith.constant dense<0.000000e+00> : vector<16x16xf32>
    %138 = tpu.matmul %137, %70, %cst_49 {dimension_numbers = #tpu.dot_dimension_numbers<[1], [1], [0], [0], [0, 0, 1, 0], [], []>} : vector<16x32xf32>, vector<16x32xf32>, vector<16x16xf32> -> vector<16x16xf32>
    %cst_50 = arith.constant -1.000000e+30 : f32
    %139 = vector.broadcast %cst_50 : f32 to vector<16x16xf32>
    %140 = arith.select %53, %138, %139 : vector<16x16xi1>, vector<16x16xf32>
    %cst_51 = arith.constant dense<0xFF800000> : vector<16xf32>
    %141 = vector.multi_reduction <maximumf>, %140, %cst_51 [1] : vector<16x16xf32> to vector<16xf32>
    %142 = vector.shape_cast %141 : vector<16xf32> to vector<16x1xf32>
    %143 = vector.broadcast %142 : vector<16x1xf32> to vector<16x16xf32>
    %144 = arith.subf %140, %143 : vector<16x16xf32>
    %145 = math.exp %144 : vector<16x16xf32>
    %cst_52 = arith.constant dense<0.000000e+00> : vector<16xf32>
    %146 = vector.multi_reduction <add>, %145, %cst_52 [1] : vector<16x16xf32> to vector<16xf32>
    %147 = vector.shape_cast %146 : vector<16xf32> to vector<16x1xf32>
    %148 = tpu.reciprocal %147 {approx = true} : vector<16x1xf32> -> vector<16x1xf32>
    %149 = vector.broadcast %148 : vector<16x1xf32> to vector<16x16xf32>
    %150 = arith.mulf %145, %149 : vector<16x16xf32>
    %cst_53 = arith.constant dense<0.000000e+00> : vector<16x32xf32>
    %151 = tpu.matmul %150, %77, %cst_53 {dimension_numbers = #tpu.dot_dimension_numbers<[1], [0], [0], [1], [0, 0, 1, 1], [], []>} : vector<16x16xf32>, vector<16x32xf32>, vector<16x32xf32> -> vector<16x32xf32>
    %152 = vector.broadcast %28 : vector<1x32xf32> to vector<16x32xf32>
    %153 = arith.mulf %151, %152 : vector<16x32xf32>
    %154 = arith.addf %135, %153 : vector<16x32xf32>
    %c0_54 = arith.constant 0 : index
    %c0_55 = arith.constant 0 : index
    %c0_56 = arith.constant 0 : index
    %155 = vector.load %arg7[%c0_54, %c0_55, %c0_56] : memref<2x32x32xf32, #tpu.memory_space<vmem>>, vector<1x32x32xf32>
    %156 = vector.shape_cast %155 : vector<1x32x32xf32> to vector<32x32xf32>
    %cst_57 = arith.constant dense<0.000000e+00> : vector<16x32xf32>
    %157 = tpu.matmul %154, %156, %cst_57 {dimension_numbers = #tpu.dot_dimension_numbers<[1], [1], [0], [0], [0, 0, 1, 0], [], []>} : vector<16x32xf32>, vector<32x32xf32>, vector<16x32xf32> -> vector<16x32xf32>
    %c0_58 = arith.constant 0 : index
    %c0_59 = arith.constant 0 : index
    %c0_60 = arith.constant 0 : index
    %158 = vector.load %arg8[%c0_58, %c0_59, %c0_60] : memref<2x1x32xf32, #tpu.memory_space<vmem>>, vector<1x1x32xf32>
    %159 = vector.shape_cast %158 : vector<1x1x32xf32> to vector<1x32xf32>
    %160 = vector.broadcast %159 : vector<1x32xf32> to vector<16x32xf32>
    %161 = arith.addf %157, %160 : vector<16x32xf32>
    %162 = arith.addf %54, %161 : vector<16x32xf32>
    %c0_61 = arith.constant 0 : index
    %c0_62 = arith.constant 0 : index
    %c0_63 = arith.constant 0 : index
    %163 = vector.load %arg13[%c0_61, %c0_62, %c0_63] : memref<2x1x32xf32, #tpu.memory_space<vmem>>, vector<1x1x32xf32>
    %164 = vector.shape_cast %163 : vector<1x1x32xf32> to vector<1x32xf32>
    %c0_64 = arith.constant 0 : index
    %c0_65 = arith.constant 0 : index
    %c0_66 = arith.constant 0 : index
    %165 = vector.load %arg14[%c0_64, %c0_65, %c0_66] : memref<2x1x32xf32, #tpu.memory_space<vmem>>, vector<1x1x32xf32>
    %166 = vector.shape_cast %165 : vector<1x1x32xf32> to vector<1x32xf32>
    %cst_67 = arith.constant dense<0.000000e+00> : vector<16xf32>
    %167 = vector.multi_reduction <add>, %162, %cst_67 [1] : vector<16x32xf32> to vector<16xf32>
    %168 = vector.shape_cast %167 : vector<16xf32> to vector<16x1xf32>
    %cst_68 = arith.constant 3.200000e+01 : f32
    %169 = vector.broadcast %cst_68 : f32 to vector<16x1xf32>
    %170 = arith.divf %168, %169 : vector<16x1xf32>
    %171 = vector.broadcast %170 : vector<16x1xf32> to vector<16x32xf32>
    %172 = arith.subf %162, %171 : vector<16x32xf32>
    %173 = arith.mulf %172, %172 : vector<16x32xf32>
    %cst_69 = arith.constant dense<0.000000e+00> : vector<16xf32>
    %174 = vector.multi_reduction <add>, %173, %cst_69 [1] : vector<16x32xf32> to vector<16xf32>
    %175 = vector.shape_cast %174 : vector<16xf32> to vector<16x1xf32>
    %cst_70 = arith.constant 3.200000e+01 : f32
    %176 = vector.broadcast %cst_70 : f32 to vector<16x1xf32>
    %177 = arith.divf %175, %176 : vector<16x1xf32>
    %cst_71 = arith.constant 9.99999974E-6 : f32
    %178 = vector.broadcast %cst_71 : f32 to vector<16x1xf32>
    %179 = arith.addf %177, %178 : vector<16x1xf32>
    %180 = math.rsqrt %179 : vector<16x1xf32>
    %181 = vector.broadcast %180 : vector<16x1xf32> to vector<16x32xf32>
    %182 = arith.mulf %172, %181 : vector<16x32xf32>
    %183 = vector.broadcast %164 : vector<1x32xf32> to vector<16x32xf32>
    %184 = arith.mulf %182, %183 : vector<16x32xf32>
    %185 = vector.broadcast %166 : vector<1x32xf32> to vector<16x32xf32>
    %186 = arith.addf %184, %185 : vector<16x32xf32>
    %c0_72 = arith.constant 0 : index
    %c0_73 = arith.constant 0 : index
    %c0_74 = arith.constant 0 : index
    %187 = vector.load %arg9[%c0_72, %c0_73, %c0_74] : memref<2x64x32xf32, #tpu.memory_space<vmem>>, vector<1x64x32xf32>
    %188 = vector.shape_cast %187 : vector<1x64x32xf32> to vector<64x32xf32>
    %cst_75 = arith.constant dense<0.000000e+00> : vector<16x64xf32>
    %189 = tpu.matmul %186, %188, %cst_75 {dimension_numbers = #tpu.dot_dimension_numbers<[1], [1], [0], [0], [0, 0, 1, 0], [], []>} : vector<16x32xf32>, vector<64x32xf32>, vector<16x64xf32> -> vector<16x64xf32>
    %c0_76 = arith.constant 0 : index
    %c0_77 = arith.constant 0 : index
    %c0_78 = arith.constant 0 : index
    %190 = vector.load %arg10[%c0_76, %c0_77, %c0_78] : memref<2x1x64xf32, #tpu.memory_space<vmem>>, vector<1x1x64xf32>
    %191 = vector.shape_cast %190 : vector<1x1x64xf32> to vector<1x64xf32>
    %192 = vector.broadcast %191 : vector<1x64xf32> to vector<16x64xf32>
    %193 = arith.addf %189, %192 : vector<16x64xf32>
    %cst_79 = arith.constant 0.000000e+00 : f32
    %194 = vector.broadcast %cst_79 : f32 to vector<16x64xf32>
    %195 = arith.maximumf %193, %194 : vector<16x64xf32>
    %c0_80 = arith.constant 0 : index
    %c0_81 = arith.constant 0 : index
    %c0_82 = arith.constant 0 : index
    %196 = vector.load %arg11[%c0_80, %c0_81, %c0_82] : memref<2x32x64xf32, #tpu.memory_space<vmem>>, vector<1x32x64xf32>
    %197 = vector.shape_cast %196 : vector<1x32x64xf32> to vector<32x64xf32>
    %cst_83 = arith.constant dense<0.000000e+00> : vector<16x32xf32>
    %198 = tpu.matmul %195, %197, %cst_83 {dimension_numbers = #tpu.dot_dimension_numbers<[1], [1], [0], [0], [0, 0, 1, 0], [], []>} : vector<16x64xf32>, vector<32x64xf32>, vector<16x32xf32> -> vector<16x32xf32>
    %c0_84 = arith.constant 0 : index
    %c0_85 = arith.constant 0 : index
    %c0_86 = arith.constant 0 : index
    %199 = vector.load %arg12[%c0_84, %c0_85, %c0_86] : memref<2x1x32xf32, #tpu.memory_space<vmem>>, vector<1x1x32xf32>
    %200 = vector.shape_cast %199 : vector<1x1x32xf32> to vector<1x32xf32>
    %201 = vector.broadcast %200 : vector<1x32xf32> to vector<16x32xf32>
    %202 = arith.addf %198, %201 : vector<16x32xf32>
    %203 = arith.addf %186, %202 : vector<16x32xf32>
    %c0_87 = arith.constant 0 : index
    %c0_88 = arith.constant 0 : index
    %c0_89 = arith.constant 0 : index
    %204 = vector.load %arg15[%c0_87, %c0_88, %c0_89] : memref<2x1x32xf32, #tpu.memory_space<vmem>>, vector<1x1x32xf32>
    %205 = vector.shape_cast %204 : vector<1x1x32xf32> to vector<1x32xf32>
    %c0_90 = arith.constant 0 : index
    %c0_91 = arith.constant 0 : index
    %c0_92 = arith.constant 0 : index
    %206 = vector.load %arg16[%c0_90, %c0_91, %c0_92] : memref<2x1x32xf32, #tpu.memory_space<vmem>>, vector<1x1x32xf32>
    %207 = vector.shape_cast %206 : vector<1x1x32xf32> to vector<1x32xf32>
    %cst_93 = arith.constant dense<0.000000e+00> : vector<16xf32>
    %208 = vector.multi_reduction <add>, %203, %cst_93 [1] : vector<16x32xf32> to vector<16xf32>
    %209 = vector.shape_cast %208 : vector<16xf32> to vector<16x1xf32>
    %cst_94 = arith.constant 3.200000e+01 : f32
    %210 = vector.broadcast %cst_94 : f32 to vector<16x1xf32>
    %211 = arith.divf %209, %210 : vector<16x1xf32>
    %212 = vector.broadcast %211 : vector<16x1xf32> to vector<16x32xf32>
    %213 = arith.subf %203, %212 : vector<16x32xf32>
    %214 = arith.mulf %213, %213 : vector<16x32xf32>
    %cst_95 = arith.constant dense<0.000000e+00> : vector<16xf32>
    %215 = vector.multi_reduction <add>, %214, %cst_95 [1] : vector<16x32xf32> to vector<16xf32>
    %216 = vector.shape_cast %215 : vector<16xf32> to vector<16x1xf32>
    %cst_96 = arith.constant 3.200000e+01 : f32
    %217 = vector.broadcast %cst_96 : f32 to vector<16x1xf32>
    %218 = arith.divf %216, %217 : vector<16x1xf32>
    %cst_97 = arith.constant 9.99999974E-6 : f32
    %219 = vector.broadcast %cst_97 : f32 to vector<16x1xf32>
    %220 = arith.addf %218, %219 : vector<16x1xf32>
    %221 = math.rsqrt %220 : vector<16x1xf32>
    %222 = vector.broadcast %221 : vector<16x1xf32> to vector<16x32xf32>
    %223 = arith.mulf %213, %222 : vector<16x32xf32>
    %224 = vector.broadcast %205 : vector<1x32xf32> to vector<16x32xf32>
    %225 = arith.mulf %223, %224 : vector<16x32xf32>
    %226 = vector.broadcast %207 : vector<1x32xf32> to vector<16x32xf32>
    %227 = arith.addf %225, %226 : vector<16x32xf32>
    %c1 = arith.constant 1 : index
    %c0_98 = arith.constant 0 : index
    %c0_99 = arith.constant 0 : index
    %228 = vector.load %arg1[%c1, %c0_98, %c0_99] : memref<2x32x32xf32, #tpu.memory_space<vmem>>, vector<1x32x32xf32>
    %229 = vector.shape_cast %228 : vector<1x32x32xf32> to vector<32x32xf32>
    %cst_100 = arith.constant dense<0.000000e+00> : vector<16x32xf32>
    %230 = tpu.matmul %227, %229, %cst_100 {dimension_numbers = #tpu.dot_dimension_numbers<[1], [1], [0], [0], [0, 0, 1, 0], [], []>} : vector<16x32xf32>, vector<32x32xf32>, vector<16x32xf32> -> vector<16x32xf32>
    %c1_101 = arith.constant 1 : index
    %c0_102 = arith.constant 0 : index
    %c0_103 = arith.constant 0 : index
    %231 = vector.load %arg2[%c1_101, %c0_102, %c0_103] : memref<2x1x32xf32, #tpu.memory_space<vmem>>, vector<1x1x32xf32>
    %232 = vector.shape_cast %231 : vector<1x1x32xf32> to vector<1x32xf32>
    %233 = vector.broadcast %232 : vector<1x32xf32> to vector<16x32xf32>
    %234 = arith.addf %230, %233 : vector<16x32xf32>
    %cst_104 = arith.constant 0.353553385 : f32
    %235 = vector.broadcast %cst_104 : f32 to vector<16x32xf32>
    %236 = arith.mulf %234, %235 : vector<16x32xf32>
    %c1_105 = arith.constant 1 : index
    %c0_106 = arith.constant 0 : index
    %c0_107 = arith.constant 0 : index
    %237 = vector.load %arg3[%c1_105, %c0_106, %c0_107] : memref<2x32x32xf32, #tpu.memory_space<vmem>>, vector<1x32x32xf32>
    %238 = vector.shape_cast %237 : vector<1x32x32xf32> to vector<32x32xf32>
    %cst_108 = arith.constant dense<0.000000e+00> : vector<16x32xf32>
    %239 = tpu.matmul %227, %238, %cst_108 {dimension_numbers = #tpu.dot_dimension_numbers<[1], [1], [0], [0], [0, 0, 1, 0], [], []>} : vector<16x32xf32>, vector<32x32xf32>, vector<16x32xf32> -> vector<16x32xf32>
    %c1_109 = arith.constant 1 : index
    %c0_110 = arith.constant 0 : index
    %c0_111 = arith.constant 0 : index
    %240 = vector.load %arg4[%c1_109, %c0_110, %c0_111] : memref<2x1x32xf32, #tpu.memory_space<vmem>>, vector<1x1x32xf32>
    %241 = vector.shape_cast %240 : vector<1x1x32xf32> to vector<1x32xf32>
    %242 = vector.broadcast %241 : vector<1x32xf32> to vector<16x32xf32>
    %243 = arith.addf %239, %242 : vector<16x32xf32>
    %c1_112 = arith.constant 1 : index
    %c0_113 = arith.constant 0 : index
    %c0_114 = arith.constant 0 : index
    %244 = vector.load %arg5[%c1_112, %c0_113, %c0_114] : memref<2x32x32xf32, #tpu.memory_space<vmem>>, vector<1x32x32xf32>
    %245 = vector.shape_cast %244 : vector<1x32x32xf32> to vector<32x32xf32>
    %cst_115 = arith.constant dense<0.000000e+00> : vector<16x32xf32>
    %246 = tpu.matmul %227, %245, %cst_115 {dimension_numbers = #tpu.dot_dimension_numbers<[1], [1], [0], [0], [0, 0, 1, 0], [], []>} : vector<16x32xf32>, vector<32x32xf32>, vector<16x32xf32> -> vector<16x32xf32>
    %c1_116 = arith.constant 1 : index
    %c0_117 = arith.constant 0 : index
    %c0_118 = arith.constant 0 : index
    %247 = vector.load %arg6[%c1_116, %c0_117, %c0_118] : memref<2x1x32xf32, #tpu.memory_space<vmem>>, vector<1x1x32xf32>
    %248 = vector.shape_cast %247 : vector<1x1x32xf32> to vector<1x32xf32>
    %249 = vector.broadcast %248 : vector<1x32xf32> to vector<16x32xf32>
    %250 = arith.addf %246, %249 : vector<16x32xf32>
    %cst_119 = arith.constant 0.000000e+00 : f32
    %251 = vector.broadcast %cst_119 : f32 to vector<16x32xf32>
    %252 = vector.broadcast %7 : vector<1x32xf32> to vector<16x32xf32>
    %253 = arith.mulf %236, %252 : vector<16x32xf32>
    %cst_120 = arith.constant dense<0.000000e+00> : vector<16x16xf32>
    %254 = tpu.matmul %253, %243, %cst_120 {dimension_numbers = #tpu.dot_dimension_numbers<[1], [1], [0], [0], [0, 0, 1, 0], [], []>} : vector<16x32xf32>, vector<16x32xf32>, vector<16x16xf32> -> vector<16x16xf32>
    %cst_121 = arith.constant -1.000000e+30 : f32
    %255 = vector.broadcast %cst_121 : f32 to vector<16x16xf32>
    %256 = arith.select %53, %254, %255 : vector<16x16xi1>, vector<16x16xf32>
    %cst_122 = arith.constant dense<0xFF800000> : vector<16xf32>
    %257 = vector.multi_reduction <maximumf>, %256, %cst_122 [1] : vector<16x16xf32> to vector<16xf32>
    %258 = vector.shape_cast %257 : vector<16xf32> to vector<16x1xf32>
    %259 = vector.broadcast %258 : vector<16x1xf32> to vector<16x16xf32>
    %260 = arith.subf %256, %259 : vector<16x16xf32>
    %261 = math.exp %260 : vector<16x16xf32>
    %cst_123 = arith.constant dense<0.000000e+00> : vector<16xf32>
    %262 = vector.multi_reduction <add>, %261, %cst_123 [1] : vector<16x16xf32> to vector<16xf32>
    %263 = vector.shape_cast %262 : vector<16xf32> to vector<16x1xf32>
    %264 = tpu.reciprocal %263 {approx = true} : vector<16x1xf32> -> vector<16x1xf32>
    %265 = vector.broadcast %264 : vector<16x1xf32> to vector<16x16xf32>
    %266 = arith.mulf %261, %265 : vector<16x16xf32>
    %cst_124 = arith.constant dense<0.000000e+00> : vector<16x32xf32>
    %267 = tpu.matmul %266, %250, %cst_124 {dimension_numbers = #tpu.dot_dimension_numbers<[1], [0], [0], [1], [0, 0, 1, 1], [], []>} : vector<16x16xf32>, vector<16x32xf32>, vector<16x32xf32> -> vector<16x32xf32>
    %268 = vector.broadcast %7 : vector<1x32xf32> to vector<16x32xf32>
    %269 = arith.mulf %267, %268 : vector<16x32xf32>
    %270 = arith.addf %251, %269 : vector<16x32xf32>
    %271 = vector.broadcast %14 : vector<1x32xf32> to vector<16x32xf32>
    %272 = arith.mulf %236, %271 : vector<16x32xf32>
    %cst_125 = arith.constant dense<0.000000e+00> : vector<16x16xf32>
    %273 = tpu.matmul %272, %243, %cst_125 {dimension_numbers = #tpu.dot_dimension_numbers<[1], [1], [0], [0], [0, 0, 1, 0], [], []>} : vector<16x32xf32>, vector<16x32xf32>, vector<16x16xf32> -> vector<16x16xf32>
    %cst_126 = arith.constant -1.000000e+30 : f32
    %274 = vector.broadcast %cst_126 : f32 to vector<16x16xf32>
    %275 = arith.select %53, %273, %274 : vector<16x16xi1>, vector<16x16xf32>
    %cst_127 = arith.constant dense<0xFF800000> : vector<16xf32>
    %276 = vector.multi_reduction <maximumf>, %275, %cst_127 [1] : vector<16x16xf32> to vector<16xf32>
    %277 = vector.shape_cast %276 : vector<16xf32> to vector<16x1xf32>
    %278 = vector.broadcast %277 : vector<16x1xf32> to vector<16x16xf32>
    %279 = arith.subf %275, %278 : vector<16x16xf32>
    %280 = math.exp %279 : vector<16x16xf32>
    %cst_128 = arith.constant dense<0.000000e+00> : vector<16xf32>
    %281 = vector.multi_reduction <add>, %280, %cst_128 [1] : vector<16x16xf32> to vector<16xf32>
    %282 = vector.shape_cast %281 : vector<16xf32> to vector<16x1xf32>
    %283 = tpu.reciprocal %282 {approx = true} : vector<16x1xf32> -> vector<16x1xf32>
    %284 = vector.broadcast %283 : vector<16x1xf32> to vector<16x16xf32>
    %285 = arith.mulf %280, %284 : vector<16x16xf32>
    %cst_129 = arith.constant dense<0.000000e+00> : vector<16x32xf32>
    %286 = tpu.matmul %285, %250, %cst_129 {dimension_numbers = #tpu.dot_dimension_numbers<[1], [0], [0], [1], [0, 0, 1, 1], [], []>} : vector<16x16xf32>, vector<16x32xf32>, vector<16x32xf32> -> vector<16x32xf32>
    %287 = vector.broadcast %14 : vector<1x32xf32> to vector<16x32xf32>
    %288 = arith.mulf %286, %287 : vector<16x32xf32>
    %289 = arith.addf %270, %288 : vector<16x32xf32>
    %290 = vector.broadcast %21 : vector<1x32xf32> to vector<16x32xf32>
    %291 = arith.mulf %236, %290 : vector<16x32xf32>
    %cst_130 = arith.constant dense<0.000000e+00> : vector<16x16xf32>
    %292 = tpu.matmul %291, %243, %cst_130 {dimension_numbers = #tpu.dot_dimension_numbers<[1], [1], [0], [0], [0, 0, 1, 0], [], []>} : vector<16x32xf32>, vector<16x32xf32>, vector<16x16xf32> -> vector<16x16xf32>
    %cst_131 = arith.constant -1.000000e+30 : f32
    %293 = vector.broadcast %cst_131 : f32 to vector<16x16xf32>
    %294 = arith.select %53, %292, %293 : vector<16x16xi1>, vector<16x16xf32>
    %cst_132 = arith.constant dense<0xFF800000> : vector<16xf32>
    %295 = vector.multi_reduction <maximumf>, %294, %cst_132 [1] : vector<16x16xf32> to vector<16xf32>
    %296 = vector.shape_cast %295 : vector<16xf32> to vector<16x1xf32>
    %297 = vector.broadcast %296 : vector<16x1xf32> to vector<16x16xf32>
    %298 = arith.subf %294, %297 : vector<16x16xf32>
    %299 = math.exp %298 : vector<16x16xf32>
    %cst_133 = arith.constant dense<0.000000e+00> : vector<16xf32>
    %300 = vector.multi_reduction <add>, %299, %cst_133 [1] : vector<16x16xf32> to vector<16xf32>
    %301 = vector.shape_cast %300 : vector<16xf32> to vector<16x1xf32>
    %302 = tpu.reciprocal %301 {approx = true} : vector<16x1xf32> -> vector<16x1xf32>
    %303 = vector.broadcast %302 : vector<16x1xf32> to vector<16x16xf32>
    %304 = arith.mulf %299, %303 : vector<16x16xf32>
    %cst_134 = arith.constant dense<0.000000e+00> : vector<16x32xf32>
    %305 = tpu.matmul %304, %250, %cst_134 {dimension_numbers = #tpu.dot_dimension_numbers<[1], [0], [0], [1], [0, 0, 1, 1], [], []>} : vector<16x16xf32>, vector<16x32xf32>, vector<16x32xf32> -> vector<16x32xf32>
    %306 = vector.broadcast %21 : vector<1x32xf32> to vector<16x32xf32>
    %307 = arith.mulf %305, %306 : vector<16x32xf32>
    %308 = arith.addf %289, %307 : vector<16x32xf32>
    %309 = vector.broadcast %28 : vector<1x32xf32> to vector<16x32xf32>
    %310 = arith.mulf %236, %309 : vector<16x32xf32>
    %cst_135 = arith.constant dense<0.000000e+00> : vector<16x16xf32>
    %311 = tpu.matmul %310, %243, %cst_135 {dimension_numbers = #tpu.dot_dimension_numbers<[1], [1], [0], [0], [0, 0, 1, 0], [], []>} : vector<16x32xf32>, vector<16x32xf32>, vector<16x16xf32> -> vector<16x16xf32>
    %cst_136 = arith.constant -1.000000e+30 : f32
    %312 = vector.broadcast %cst_136 : f32 to vector<16x16xf32>
    %313 = arith.select %53, %311, %312 : vector<16x16xi1>, vector<16x16xf32>
    %cst_137 = arith.constant dense<0xFF800000> : vector<16xf32>
    %314 = vector.multi_reduction <maximumf>, %313, %cst_137 [1] : vector<16x16xf32> to vector<16xf32>
    %315 = vector.shape_cast %314 : vector<16xf32> to vector<16x1xf32>
    %316 = vector.broadcast %315 : vector<16x1xf32> to vector<16x16xf32>
    %317 = arith.subf %313, %316 : vector<16x16xf32>
    %318 = math.exp %317 : vector<16x16xf32>
    %cst_138 = arith.constant dense<0.000000e+00> : vector<16xf32>
    %319 = vector.multi_reduction <add>, %318, %cst_138 [1] : vector<16x16xf32> to vector<16xf32>
    %320 = vector.shape_cast %319 : vector<16xf32> to vector<16x1xf32>
    %321 = tpu.reciprocal %320 {approx = true} : vector<16x1xf32> -> vector<16x1xf32>
    %322 = vector.broadcast %321 : vector<16x1xf32> to vector<16x16xf32>
    %323 = arith.mulf %318, %322 : vector<16x16xf32>
    %cst_139 = arith.constant dense<0.000000e+00> : vector<16x32xf32>
    %324 = tpu.matmul %323, %250, %cst_139 {dimension_numbers = #tpu.dot_dimension_numbers<[1], [0], [0], [1], [0, 0, 1, 1], [], []>} : vector<16x16xf32>, vector<16x32xf32>, vector<16x32xf32> -> vector<16x32xf32>
    %325 = vector.broadcast %28 : vector<1x32xf32> to vector<16x32xf32>
    %326 = arith.mulf %324, %325 : vector<16x32xf32>
    %327 = arith.addf %308, %326 : vector<16x32xf32>
    %c1_140 = arith.constant 1 : index
    %c0_141 = arith.constant 0 : index
    %c0_142 = arith.constant 0 : index
    %328 = vector.load %arg7[%c1_140, %c0_141, %c0_142] : memref<2x32x32xf32, #tpu.memory_space<vmem>>, vector<1x32x32xf32>
    %329 = vector.shape_cast %328 : vector<1x32x32xf32> to vector<32x32xf32>
    %cst_143 = arith.constant dense<0.000000e+00> : vector<16x32xf32>
    %330 = tpu.matmul %327, %329, %cst_143 {dimension_numbers = #tpu.dot_dimension_numbers<[1], [1], [0], [0], [0, 0, 1, 0], [], []>} : vector<16x32xf32>, vector<32x32xf32>, vector<16x32xf32> -> vector<16x32xf32>
    %c1_144 = arith.constant 1 : index
    %c0_145 = arith.constant 0 : index
    %c0_146 = arith.constant 0 : index
    %331 = vector.load %arg8[%c1_144, %c0_145, %c0_146] : memref<2x1x32xf32, #tpu.memory_space<vmem>>, vector<1x1x32xf32>
    %332 = vector.shape_cast %331 : vector<1x1x32xf32> to vector<1x32xf32>
    %333 = vector.broadcast %332 : vector<1x32xf32> to vector<16x32xf32>
    %334 = arith.addf %330, %333 : vector<16x32xf32>
    %335 = arith.addf %227, %334 : vector<16x32xf32>
    %c1_147 = arith.constant 1 : index
    %c0_148 = arith.constant 0 : index
    %c0_149 = arith.constant 0 : index
    %336 = vector.load %arg13[%c1_147, %c0_148, %c0_149] : memref<2x1x32xf32, #tpu.memory_space<vmem>>, vector<1x1x32xf32>
    %337 = vector.shape_cast %336 : vector<1x1x32xf32> to vector<1x32xf32>
    %c1_150 = arith.constant 1 : index
    %c0_151 = arith.constant 0 : index
    %c0_152 = arith.constant 0 : index
    %338 = vector.load %arg14[%c1_150, %c0_151, %c0_152] : memref<2x1x32xf32, #tpu.memory_space<vmem>>, vector<1x1x32xf32>
    %339 = vector.shape_cast %338 : vector<1x1x32xf32> to vector<1x32xf32>
    %cst_153 = arith.constant dense<0.000000e+00> : vector<16xf32>
    %340 = vector.multi_reduction <add>, %335, %cst_153 [1] : vector<16x32xf32> to vector<16xf32>
    %341 = vector.shape_cast %340 : vector<16xf32> to vector<16x1xf32>
    %cst_154 = arith.constant 3.200000e+01 : f32
    %342 = vector.broadcast %cst_154 : f32 to vector<16x1xf32>
    %343 = arith.divf %341, %342 : vector<16x1xf32>
    %344 = vector.broadcast %343 : vector<16x1xf32> to vector<16x32xf32>
    %345 = arith.subf %335, %344 : vector<16x32xf32>
    %346 = arith.mulf %345, %345 : vector<16x32xf32>
    %cst_155 = arith.constant dense<0.000000e+00> : vector<16xf32>
    %347 = vector.multi_reduction <add>, %346, %cst_155 [1] : vector<16x32xf32> to vector<16xf32>
    %348 = vector.shape_cast %347 : vector<16xf32> to vector<16x1xf32>
    %cst_156 = arith.constant 3.200000e+01 : f32
    %349 = vector.broadcast %cst_156 : f32 to vector<16x1xf32>
    %350 = arith.divf %348, %349 : vector<16x1xf32>
    %cst_157 = arith.constant 9.99999974E-6 : f32
    %351 = vector.broadcast %cst_157 : f32 to vector<16x1xf32>
    %352 = arith.addf %350, %351 : vector<16x1xf32>
    %353 = math.rsqrt %352 : vector<16x1xf32>
    %354 = vector.broadcast %353 : vector<16x1xf32> to vector<16x32xf32>
    %355 = arith.mulf %345, %354 : vector<16x32xf32>
    %356 = vector.broadcast %337 : vector<1x32xf32> to vector<16x32xf32>
    %357 = arith.mulf %355, %356 : vector<16x32xf32>
    %358 = vector.broadcast %339 : vector<1x32xf32> to vector<16x32xf32>
    %359 = arith.addf %357, %358 : vector<16x32xf32>
    %c1_158 = arith.constant 1 : index
    %c0_159 = arith.constant 0 : index
    %c0_160 = arith.constant 0 : index
    %360 = vector.load %arg9[%c1_158, %c0_159, %c0_160] : memref<2x64x32xf32, #tpu.memory_space<vmem>>, vector<1x64x32xf32>
    %361 = vector.shape_cast %360 : vector<1x64x32xf32> to vector<64x32xf32>
    %cst_161 = arith.constant dense<0.000000e+00> : vector<16x64xf32>
    %362 = tpu.matmul %359, %361, %cst_161 {dimension_numbers = #tpu.dot_dimension_numbers<[1], [1], [0], [0], [0, 0, 1, 0], [], []>} : vector<16x32xf32>, vector<64x32xf32>, vector<16x64xf32> -> vector<16x64xf32>
    %c1_162 = arith.constant 1 : index
    %c0_163 = arith.constant 0 : index
    %c0_164 = arith.constant 0 : index
    %363 = vector.load %arg10[%c1_162, %c0_163, %c0_164] : memref<2x1x64xf32, #tpu.memory_space<vmem>>, vector<1x1x64xf32>
    %364 = vector.shape_cast %363 : vector<1x1x64xf32> to vector<1x64xf32>
    %365 = vector.broadcast %364 : vector<1x64xf32> to vector<16x64xf32>
    %366 = arith.addf %362, %365 : vector<16x64xf32>
    %cst_165 = arith.constant 0.000000e+00 : f32
    %367 = vector.broadcast %cst_165 : f32 to vector<16x64xf32>
    %368 = arith.maximumf %366, %367 : vector<16x64xf32>
    %c1_166 = arith.constant 1 : index
    %c0_167 = arith.constant 0 : index
    %c0_168 = arith.constant 0 : index
    %369 = vector.load %arg11[%c1_166, %c0_167, %c0_168] : memref<2x32x64xf32, #tpu.memory_space<vmem>>, vector<1x32x64xf32>
    %370 = vector.shape_cast %369 : vector<1x32x64xf32> to vector<32x64xf32>
    %cst_169 = arith.constant dense<0.000000e+00> : vector<16x32xf32>
    %371 = tpu.matmul %368, %370, %cst_169 {dimension_numbers = #tpu.dot_dimension_numbers<[1], [1], [0], [0], [0, 0, 1, 0], [], []>} : vector<16x64xf32>, vector<32x64xf32>, vector<16x32xf32> -> vector<16x32xf32>
    %c1_170 = arith.constant 1 : index
    %c0_171 = arith.constant 0 : index
    %c0_172 = arith.constant 0 : index
    %372 = vector.load %arg12[%c1_170, %c0_171, %c0_172] : memref<2x1x32xf32, #tpu.memory_space<vmem>>, vector<1x1x32xf32>
    %373 = vector.shape_cast %372 : vector<1x1x32xf32> to vector<1x32xf32>
    %374 = vector.broadcast %373 : vector<1x32xf32> to vector<16x32xf32>
    %375 = arith.addf %371, %374 : vector<16x32xf32>
    %376 = arith.addf %359, %375 : vector<16x32xf32>
    %c1_173 = arith.constant 1 : index
    %c0_174 = arith.constant 0 : index
    %c0_175 = arith.constant 0 : index
    %377 = vector.load %arg15[%c1_173, %c0_174, %c0_175] : memref<2x1x32xf32, #tpu.memory_space<vmem>>, vector<1x1x32xf32>
    %378 = vector.shape_cast %377 : vector<1x1x32xf32> to vector<1x32xf32>
    %c1_176 = arith.constant 1 : index
    %c0_177 = arith.constant 0 : index
    %c0_178 = arith.constant 0 : index
    %379 = vector.load %arg16[%c1_176, %c0_177, %c0_178] : memref<2x1x32xf32, #tpu.memory_space<vmem>>, vector<1x1x32xf32>
    %380 = vector.shape_cast %379 : vector<1x1x32xf32> to vector<1x32xf32>
    %cst_179 = arith.constant dense<0.000000e+00> : vector<16xf32>
    %381 = vector.multi_reduction <add>, %376, %cst_179 [1] : vector<16x32xf32> to vector<16xf32>
    %382 = vector.shape_cast %381 : vector<16xf32> to vector<16x1xf32>
    %cst_180 = arith.constant 3.200000e+01 : f32
    %383 = vector.broadcast %cst_180 : f32 to vector<16x1xf32>
    %384 = arith.divf %382, %383 : vector<16x1xf32>
    %385 = vector.broadcast %384 : vector<16x1xf32> to vector<16x32xf32>
    %386 = arith.subf %376, %385 : vector<16x32xf32>
    %387 = arith.mulf %386, %386 : vector<16x32xf32>
    %cst_181 = arith.constant dense<0.000000e+00> : vector<16xf32>
    %388 = vector.multi_reduction <add>, %387, %cst_181 [1] : vector<16x32xf32> to vector<16xf32>
    %389 = vector.shape_cast %388 : vector<16xf32> to vector<16x1xf32>
    %cst_182 = arith.constant 3.200000e+01 : f32
    %390 = vector.broadcast %cst_182 : f32 to vector<16x1xf32>
    %391 = arith.divf %389, %390 : vector<16x1xf32>
    %cst_183 = arith.constant 9.99999974E-6 : f32
    %392 = vector.broadcast %cst_183 : f32 to vector<16x1xf32>
    %393 = arith.addf %391, %392 : vector<16x1xf32>
    %394 = math.rsqrt %393 : vector<16x1xf32>
    %395 = vector.broadcast %394 : vector<16x1xf32> to vector<16x32xf32>
    %396 = arith.mulf %386, %395 : vector<16x32xf32>
    %397 = vector.broadcast %378 : vector<1x32xf32> to vector<16x32xf32>
    %398 = arith.mulf %396, %397 : vector<16x32xf32>
    %399 = vector.broadcast %380 : vector<1x32xf32> to vector<16x32xf32>
    %400 = arith.addf %398, %399 : vector<16x32xf32>
    %c0_184 = arith.constant 0 : index
    %c0_185 = arith.constant 0 : index
    %401 = vector.load %arg17[%c0_184, %c0_185] : memref<16x32xf32, #tpu.memory_space<vmem>>, vector<16x32xf32>
    tpu.vector_store %arg17[%c0_184, %c0_185], %400 {strides = array<i32>} : memref<16x32xf32, #tpu.memory_space<vmem>>, vector<16x32xf32>,
    return
  }
}

</mosaic_0001>

<llo_original>
// kernel: transformer_layer.1
$region0: #{transformer_layer.1}
  #allocation0 [shape = 'u32[]', space=smem, size = 0x4, offset = 0x4, fixed_abs, tag = 'smem constant byte address 0x4 - core index']
  #allocation1 [shape = 'u32[144,128]{1,0:T(1,128)}', space=vmem, size = 0x12000, scoped, tag = 'internal scratch']
  %s0 = inlined_call_operand.hbm [shape: f32[16,32], index: 0, kind: input, shape index: {}]
  %s1 = inlined_call_operand.vmem [shape: f32[2,32,32], index: 1, kind: input, shape index: {}]
  %s2 = inlined_call_operand.vmem [shape: f32[2,1,32], index: 2, kind: input, shape index: {}]
  %s3 = inlined_call_operand.vmem [shape: f32[2,32,32], index: 3, kind: input, shape index: {}]
  %s4 = inlined_call_operand.vmem [shape: f32[2,1,32], index: 4, kind: input, shape index: {}]
  %s5 = inlined_call_operand.vmem [shape: f32[2,32,32], index: 5, kind: input, shape index: {}]
  %s6 = inlined_call_operand.vmem [shape: f32[2,1,32], index: 6, kind: input, shape index: {}]
  %s7 = inlined_call_operand.hbm [shape: f32[2,32,32], index: 7, kind: input, shape index: {}]
  %s8 = inlined_call_operand.vmem [shape: f32[2,1,32], index: 8, kind: input, shape index: {}]
  %s9 = inlined_call_operand.vmem [shape: f32[2,64,32], index: 9, kind: input, shape index: {}]
  %s10 = inlined_call_operand.hbm [shape: f32[2,1,64], index: 10, kind: input, shape index: {}]
  %s11 = inlined_call_operand.hbm [shape: f32[2,32,64], index: 11, kind: input, shape index: {}]
  %s12 = inlined_call_operand.vmem [shape: f32[2,1,32], index: 12, kind: input, shape index: {}]
  %s13 = inlined_call_operand.vmem [shape: f32[2,1,32], index: 13, kind: input, shape index: {}]
  %s14 = inlined_call_operand.vmem [shape: f32[2,1,32], index: 14, kind: input, shape index: {}]
  %s15 = inlined_call_operand.vmem [shape: f32[2,1,32], index: 15, kind: input, shape index: {}]
  %s16 = inlined_call_operand.vmem [shape: f32[2,1,32], index: 16, kind: input, shape index: {}]
  %s17 = inlined_call_operand.hbm [shape: f32[16,32], index: 17, kind: output, shape index: {}]
  %s18 = sld [smem:[#allocation0]]
  $region94: #{transformer_layer.1} parent=0
    _
  %s20 = ssub.s32 1, %s18
  %s21 = scalar_select 0, %s20, %s18
  $region1: #{transformer_layer.1} parent=0
    #allocation2 [shape = 'u8[8192]{0}', space=vmem, size = 0x2000, scoped, tag = 'input window, operand 0, single buffered']
    #allocation3 [shape = 's32[1]{0}', space=sflag, size = 0x4, scoped, tag = 'scoped memory for transformer_layer.1']
    #allocation4 [shape = 's32[1]{0}', space=sflag, size = 0x4, scoped, tag = 'scoped memory for transformer_layer.1']
    #allocation5 [shape = 'u8[32768]{0}', space=vmem, size = 0x8000, scoped, tag = 'input window, operand 7, single buffered']
    #allocation6 [shape = 's32[1]{0}', space=sflag, size = 0x4, scoped, tag = 'scoped memory for transformer_layer.1']
    #allocation7 [shape = 'u8[1024]{0}', space=vmem, size = 0x400, scoped, tag = 'input window, operand 10, single buffered']
    #allocation8 [shape = 'u8[32768]{0}', space=vmem, size = 0x8000, scoped, tag = 'input window, operand 11, single buffered']
    #allocation9 [shape = 's32[1]{0}', space=sflag, size = 0x4, scoped, tag = 'scoped memory for transformer_layer.1']
    #allocation10 [shape = 'u8[8192]{0}', space=vmem, size = 0x2000, scoped, tag = 'output window, operand 0, single buffered']
    %22 = vsyncpa [#allocation3], 0
    %23 = vsyncpa [#allocation6], 0
    %24 = vsyncpa [#allocation9], 0
    %25 = vsyncpa [#allocation4], 0
    // Predicated region
    $region2: #{transformer_layer.1} parent=1 // pred_check
      _
    $region3: #{transformer_layer.1} parent=1 // pred_check_branch
      %27 = sbr.rel (0) target = $region5
    $region4: #{transformer_layer.1} parent=1 // pred_region
      %s29 = ssub.s32 256, 256
      %30 = vsyncadd [#allocation3], %s29
      %s31 = sshll.u32 [#allocation2], 4
      %s32 = int_to_ptr.vmem [resolvable:$true] %s31
      %37 = dma.hbm_to_vmem [thread:$0]  %s0, 256, %s32, [#allocation3], 128, 128, 8
    $region5: #{transformer_layer.1} parent=1 // pred_fallthru
      _
    // Predicated region
    $region6: #{transformer_layer.1} parent=1 // pred_check
      _
    $region7: #{transformer_layer.1} parent=1 // pred_check_branch
      %39 = sbr.rel (0) target = $region9
    $region8: #{transformer_layer.1} parent=1 // pred_region
      _
    $region9: #{transformer_layer.1} parent=1 // pred_fallthru
      _
    // Predicated region
    $region10: #{transformer_layer.1} parent=1 // pred_check
      _
    $region11: #{transformer_layer.1} parent=1 // pred_check_branch
      %41 = sbr.rel (0) target = $region13
    $region12: #{transformer_layer.1} parent=1 // pred_region
      _
    $region13: #{transformer_layer.1} parent=1 // pred_fallthru
      _
    // Predicated region
    $region14: #{transformer_layer.1} parent=1 // pred_check
      _
    $region15: #{transformer_layer.1} parent=1 // pred_check_branch
      %43 = sbr.rel (0) target = $region17
    $region16: #{transformer_layer.1} parent=1 // pred_region
      _
    $region17: #{transformer_layer.1} parent=1 // pred_fallthru
      _
    // Predicated region
    $region18: #{transformer_layer.1} parent=1 // pred_check
      _
    $region19: #{transformer_layer.1} parent=1 // pred_check_branch
      %45 = sbr.rel (0) target = $region21
    $region20: #{transformer_layer.1} parent=1 // pred_region
      _
    $region21: #{transformer_layer.1} parent=1 // pred_fallthru
      _
    // Predicated region
    $region22: #{transformer_layer.1} parent=1 // pred_check
      _
    $region23: #{transformer_layer.1} parent=1 // pred_check_branch
      %47 = sbr.rel (0) target = $region25
    $region24: #{transformer_layer.1} parent=1 // pred_region
      _
    $region25: #{transformer_layer.1} parent=1 // pred_fallthru
      _
    // Predicated region
    $region26: #{transformer_layer.1} parent=1 // pred_check
      _
    $region27: #{transformer_layer.1} parent=1 // pred_check_branch
      %49 = sbr.rel (0) target = $region29
    $region28: #{transformer_layer.1} parent=1 // pred_region
      _
    $region29: #{transformer_layer.1} parent=1 // pred_fallthru
      _
    // Predicated region
    $region30: #{transformer_layer.1} parent=1 // pred_check
      _
    $region31: #{transformer_layer.1} parent=1 // pred_check_branch
      %51 = sbr.rel (0) target = $region33
    $region32: #{transformer_layer.1} parent=1 // pred_region
      %s53 = ssub.s32 1024, 1024
      %54 = vsyncadd [#allocation6], %s53
      %s55 = sshll.u32 [#allocation5], 4
      %s56 = int_to_ptr.vmem [resolvable:$true] %s55
      %61 = dma.hbm_to_vmem [thread:$0]  %s7, 1024, %s56, [#allocation6], 128, 128, 8
    $region33: #{transformer_layer.1} parent=1 // pred_fallthru
      _
    // Predicated region
    $region34: #{transformer_layer.1} parent=1 // pred_check
      _
    $region35: #{transformer_layer.1} parent=1 // pred_check_branch
      %63 = sbr.rel (0) target = $region37
    $region36: #{transformer_layer.1} parent=1 // pred_region
      _
    $region37: #{transformer_layer.1} parent=1 // pred_fallthru
      _
    // Predicated region
    $region38: #{transformer_layer.1} parent=1 // pred_check
      _
    $region39: #{transformer_layer.1} parent=1 // pred_check_branch
      %65 = sbr.rel (0) target = $region41
    $region40: #{transformer_layer.1} parent=1 // pred_region
      _
    $region41: #{transformer_layer.1} parent=1 // pred_fallthru
      _
    // Predicated region
    $region42: #{transformer_layer.1} parent=1 // pred_check
      _
    $region43: #{transformer_layer.1} parent=1 // pred_check_branch
      %67 = sbr.rel (0) target = $region45
    $region44: #{transformer_layer.1} parent=1 // pred_region
      %s69 = ssub.s32 32, 32
      %70 = vsyncadd [#allocation6], %s69
      %s71 = sshll.u32 [#allocation7], 4
      %s72 = int_to_ptr.vmem [resolvable:$true] %s71
      %77 = dma.hbm_to_vmem [thread:$0]  %s10, 32, %s72, [#allocation6], 16, 16, 1
    $region45: #{transformer_layer.1} parent=1 // pred_fallthru
      _
    // Predicated region
    $region46: #{transformer_layer.1} parent=1 // pred_check
      _
    $region47: #{transformer_layer.1} parent=1 // pred_check_branch
      %79 = sbr.rel (0) target = $region49
    $region48: #{transformer_layer.1} parent=1 // pred_region
      %s81 = ssub.s32 1024, 1024
      %82 = vsyncadd [#allocation9], %s81
      %s83 = sshll.u32 [#allocation8], 4
      %s84 = int_to_ptr.vmem [resolvable:$true] %s83
      %89 = dma.hbm_to_vmem [thread:$0]  %s11, 1024, %s84, [#allocation9], 128, 128, 8
    $region49: #{transformer_layer.1} parent=1 // pred_fallthru
      _
    // Predicated region
    $region50: #{transformer_layer.1} parent=1 // pred_check
      _
    $region51: #{transformer_layer.1} parent=1 // pred_check_branch
      %91 = sbr.rel (0) target = $region53
    $region52: #{transformer_layer.1} parent=1 // pred_region
      _
    $region53: #{transformer_layer.1} parent=1 // pred_fallthru
      _
    // Predicated region
    $region54: #{transformer_layer.1} parent=1 // pred_check
      _
    $region55: #{transformer_layer.1} parent=1 // pred_check_branch
      %93 = sbr.rel (0) target = $region57
    $region56: #{transformer_layer.1} parent=1 // pred_region
      _
    $region57: #{transformer_layer.1} parent=1 // pred_fallthru
      _
    // Predicated region
    $region58: #{transformer_layer.1} parent=1 // pred_check
      _
    $region59: #{transformer_layer.1} parent=1 // pred_check_branch
      %95 = sbr.rel (0) target = $region61
    $region60: #{transformer_layer.1} parent=1 // pred_region
      _
    $region61: #{transformer_layer.1} parent=1 // pred_fallthru
      _
    // Predicated region
    $region62: #{transformer_layer.1} parent=1 // pred_check
      _
    $region63: #{transformer_layer.1} parent=1 // pred_check_branch
      %97 = sbr.rel (0) target = $region65
    $region64: #{transformer_layer.1} parent=1 // pred_region
      _
    $region65: #{transformer_layer.1} parent=1 // pred_fallthru
      _
    // Predicated region
    $region66: #{transformer_layer.1} parent=1 // pred_check
      _
    $region67: #{transformer_layer.1} parent=1 // pred_check_branch
      %99 = sbr.rel (0) target = $region69
    $region68: #{transformer_layer.1} parent=1 // pred_region
      _
    $region69: #{transformer_layer.1} parent=1 // pred_fallthru
      _
    // Predicated region
    $region70: #{transformer_layer.1} parent=1 // pred_check
      _
    $region71: #{transformer_layer.1} parent=1 // pred_check_branch
      %101 = sbr.rel (0) target = $region73
    $region72: #{transformer_layer.1} parent=1 // pred_region
      %102 = dma.done [#allocation3], 256
    $region73: #{transformer_layer.1} parent=1 // pred_fallthru
      _
    // Predicated region
    $region74: #{transformer_layer.1} parent=1 // pred_check
      _
    $region75: #{transformer_layer.1} parent=1 // pred_check_branch
      %104 = sbr.rel (0) target = $region77
    $region76: #{transformer_layer.1} parent=1 // pred_region
      %105 = dma.done [#allocation6], 1024
    $region77: #{transformer_layer.1} parent=1 // pred_fallthru
      _
    // Predicated region
    $region78: #{transformer_layer.1} parent=1 // pred_check
      _
    $region79: #{transformer_layer.1} parent=1 // pred_check_branch
      %107 = sbr.rel (0) target = $region81
    $region80: #{transformer_layer.1} parent=1 // pred_region
      %108 = dma.done [#allocation6], 32
    $region81: #{transformer_layer.1} parent=1 // pred_fallthru
      _
    // Predicated region
    $region82: #{transformer_layer.1} parent=1 // pred_check
      _
    $region83: #{transformer_layer.1} parent=1 // pred_check_branch
      %110 = sbr.rel (0) target = $region85
    $region84: #{transformer_layer.1} parent=1 // pred_region
      %111 = dma.done [#allocation9], 1024
    $region85: #{transformer_layer.1} parent=1 // pred_fallthru
      _
    %v112 = vlaneseq
    %v113 = vand.u32 %v112, 127
    %vm114 = vcmp.ge.s32.totalorder %v113, 0
    %vm115 = vcmp.lt.s32.totalorder %v113, 8
    %vm116 = vmand %vm114, %vm115
    %v117 = vsel %vm116, 1, 0
    %v118 = vcvt.s32.f32 %v117
    %vm119 = vcmp.ge.s32.totalorder %v113, 8
    %vm120 = vcmp.lt.s32.totalorder %v113, 16
    %vm121 = vmand %vm119, %vm120
    %v122 = vsel %vm121, 1, 0
    %v123 = vcvt.s32.f32 %v122
    %vm124 = vcmp.ge.s32.totalorder %v113, 16
    %vm125 = vcmp.lt.s32.totalorder %v113, 24
    %vm126 = vmand %vm124, %vm125
    %v127 = vsel %vm126, 1, 0
    %v128 = vcvt.s32.f32 %v127
    %vm129 = vcmp.ge.s32.totalorder %v113, 24
    %vm130 = vcmp.lt.s32.totalorder %v113, 32
    %vm131 = vmand %vm129, %vm130
    %v132 = vsel %vm131, 1, 0
    %v133 = vcvt.s32.f32 %v132
    %v134 = vlaneseq
    %v135 = vshrl.u32 %v134, 7
    %v136 = vadd.s32 %v135, 8
    %vm137 = vcmp.ge.s32.totalorder %v135, 0
    %vm138 = vcmp.ge.s32.totalorder %v136, 0
    %vm139 = vcmp.lt.s32.totalorder %v135, 8
    %vm140 = vcmp.lt.s32.totalorder %v136, 8
    %vm141 = vmand %vm137, %vm139
    %vm142 = vmand %vm138, %vm140
    %vm143 = vmand %vm141, %vm116
    %vm144 = vmand %vm142, %vm116
    %vm145 = vcmp.ge.s32.totalorder %v135, 8
    %vm146 = vcmp.ge.s32.totalorder %v136, 8
    %vm147 = vcmp.lt.s32.totalorder %v135, 16
    %vm148 = vcmp.lt.s32.totalorder %v136, 16
    %vm149 = vmand %vm145, %vm147
    %vm150 = vmand %vm146, %vm148
    %vm151 = vmand %vm149, %vm121
    %vm152 = vmand %vm150, %vm121
    %vm153 = vmor %vm143, %vm151
    %vm154 = vmor %vm144, %vm152
    %v155 = vld [vmem:[#allocation2] sm:$0xff]
    %v156 = vld [vmem:[#allocation2 + $0x8] sm:$0xff]
    %v157 = vld [vmem:[%s1] sm:$0xff]
    %v158 = vld [vmem:[%s1 + $0x8] sm:$0xff]
    %v159 = vld [vmem:[%s1 + $0x10] sm:$0xff]
    %v160 = vld [vmem:[%s1 + $0x18] sm:$0xff]
    %v161 = vld [vmem:[%s2] sm:$0x1]
    %v163 = vlaneseq
    %v164 = vshrl.u32 %v163, 7
    %v165 = vsub.s32 0, %v164
    %v166 = vrot.slane %v161, %v165
    %vm168 = vcmask 261120
    %v170 = vsel %vm168, %v155, 0
    %v173 = vsel %vm168, %v156, 0
    %v176 = vsel %vm168, %v157, 0
    %v179 = vsel %vm168, %v158, 0
    %v182 = vsel %vm168, %v159, 0
    %v185 = vsel %vm168, %v160, 0
    %187 = vmatprep.subr.mxu0 0.0
    %188 = vmatpush1.xpose.msra.mxu0 %v176
    %189 = vmatprep.subr.mxu0 0.0
    %190 = vmatpush1.xpose.msra.mxu0 %v179
    %191 = vmatprep.subr.mxu0 0.0
    %192 = vmatpush1.xpose.msra.mxu0 %v182
    %193 = vmatprep.subr.mxu0 0.0
    %194 = vmatpush1.xpose.msra.mxu0 %v185
    %195 = vmatprep.subr.mxu0 0.0
    %196 = vmatpush1.xpose.msra.mxu0 0.0
    %197 = vmatprep.subr.mxu0 0.0
    %198 = vmatpush1.xpose.msra.mxu0 0.0
    %199 = vmatprep.subr.mxu0 0.0
    %200 = vmatpush1.xpose.msra.mxu0 0.0
    %201 = vmatprep.subr.mxu0 0.0
    %202 = vmatpush1.xpose.msra.mxu0 0.0
    %203 = vmatprep.subr.mxu0 0.0
    %204 = vmatpush1.xpose.msra.mxu0 0.0
    %205 = vmatprep.subr.mxu0 0.0
    %206 = vmatpush1.xpose.msra.mxu0 0.0
    %207 = vmatprep.subr.mxu0 0.0
    %208 = vmatpush1.xpose.msra.mxu0 0.0
    %209 = vmatprep.subr.mxu0 0.0
    %210 = vmatpush1.xpose.msra.mxu0 0.0
    %211 = vmatprep.subr.mxu0 0.0
    %212 = vmatpush1.xpose.msra.mxu0 0.0
    %213 = vmatprep.subr.mxu0 0.0
    %214 = vmatpush1.xpose.msra.mxu0 0.0
    %215 = vmatprep.subr.mxu0 0.0
    %216 = vmatpush1.xpose.msra.mxu0 0.0
    %217 = vmatprep.subr.mxu0 0.0
    %218 = vmatpush1.xpose.msra.mxu0 0.0
    %219 = vmatprep.subr.mxu0 0.0
    %220 = vmatpush1.xpose.msra.mxu0 0.0
    %221 = vmatprep.subr.mxu0 0.0
    %222 = vmatpush1.xpose.msra.mxu0 0.0
    %223 = vmatprep.subr.mxu0 0.0
    %224 = vmatpush1.xpose.msra.mxu0 0.0
    %225 = vmatprep.subr.mxu0 0.0
    %226 = vmatpush1.xpose.msra.mxu0 0.0
    %227 = vmatprep.subr.mxu0 0.0
    %228 = vmatpush1.xpose.msra.mxu0 0.0
    %229 = vmatprep.subr.mxu0 0.0
    %230 = vmatpush1.xpose.msra.mxu0 0.0
    %231 = vmatprep.subr.mxu0 0.0
    %232 = vmatpush1.xpose.msra.mxu0 0.0
    %233 = vmatprep.subr.mxu0 0.0
    %234 = vmatpush1.xpose.msra.mxu0 0.0
    %235 = vmatprep.subr.mxu0 0.0
    %236 = vmatpush1.xpose.msra.mxu0 0.0
    %237 = vmatprep.subr.mxu0 0.0
    %238 = vmatpush1.xpose.msra.mxu0 0.0
    %239 = vmatprep.subr.mxu0 0.0
    %240 = vmatpush1.xpose.msra.mxu0 0.0
    %241 = vmatprep.subr.mxu0 0.0
    %242 = vmatpush1.xpose.msra.mxu0 0.0
    %243 = vmatprep.subr.mxu0 0.0
    %244 = vmatpush1.xpose.msra.mxu0 0.0
    %245 = vmatprep.subr.mxu0 0.0
    %246 = vmatpush1.xpose.msra.mxu0 0.0
    %247 = vmatprep.subr.mxu0 0.0
    %248 = vmatpush1.xpose.msra.mxu0 0.0
    %249 = vmatprep.subr.mxu0 0.0
    %250 = vmatpush1.xpose.msra.mxu0 0.0
    %251 = vmatprep.mubr.f32.mxu0 0.0
    %252 = vmatmul.mubr.f32.gmra.mrb[0].mxu0 %v170
    %v253 = vpop.f32.mrb[0].mxu0
    %v254 = vadd.f32 %v166, %v253
    %v255 = vpop.f32.mrb[0].mxu0
    %256 = vmatprep.mubr.f32.mxu0 0.0
    %257 = vmatmul.mubr.f32.gmra.mrb[0].mxu0 %v173
    %v258 = vpop.f32.mrb[0].mxu0
    %v259 = vadd.f32 %v166, %v258
    %v260 = vpop.f32.mrb[0].mxu0
    %261 = vdwg.mxu0
    %v262 = vmul.f32 %v254, 0.35355338
    %v263 = vmul.f32 %v259, 0.35355338
    %v264 = vld [vmem:[%s3] sm:$0xff]
    %v265 = vld [vmem:[%s3 + $0x8] sm:$0xff]
    %v266 = vld [vmem:[%s3 + $0x10] sm:$0xff]
    %v267 = vld [vmem:[%s3 + $0x18] sm:$0xff]
    %v268 = vld [vmem:[%s4] sm:$0x1]
    %v270 = vlaneseq
    %v271 = vshrl.u32 %v270, 7
    %v272 = vsub.s32 0, %v271
    %v273 = vrot.slane %v268, %v272
    %v276 = vsel %vm168, %v264, 0
    %v279 = vsel %vm168, %v265, 0
    %v282 = vsel %vm168, %v266, 0
    %v285 = vsel %vm168, %v267, 0
    %287 = vmatprep.subr.mxu0 0.0
    %288 = vmatpush1.xpose.msra.mxu0 %v276
    %289 = vmatprep.subr.mxu0 0.0
    %290 = vmatpush1.xpose.msra.mxu0 %v279
    %291 = vmatprep.subr.mxu0 0.0
    %292 = vmatpush1.xpose.msra.mxu0 %v282
    %293 = vmatprep.subr.mxu0 0.0
    %294 = vmatpush1.xpose.msra.mxu0 %v285
    %295 = vmatprep.subr.mxu0 0.0
    %296 = vmatpush1.xpose.msra.mxu0 0.0
    %297 = vmatprep.subr.mxu0 0.0
    %298 = vmatpush1.xpose.msra.mxu0 0.0
    %299 = vmatprep.subr.mxu0 0.0
    %300 = vmatpush1.xpose.msra.mxu0 0.0
    %301 = vmatprep.subr.mxu0 0.0
    %302 = vmatpush1.xpose.msra.mxu0 0.0
    %303 = vmatprep.subr.mxu0 0.0
    %304 = vmatpush1.xpose.msra.mxu0 0.0
    %305 = vmatprep.subr.mxu0 0.0
    %306 = vmatpush1.xpose.msra.mxu0 0.0
    %307 = vmatprep.subr.mxu0 0.0
    %308 = vmatpush1.xpose.msra.mxu0 0.0
    %309 = vmatprep.subr.mxu0 0.0
    %310 = vmatpush1.xpose.msra.mxu0 0.0
    %311 = vmatprep.subr.mxu0 0.0
    %312 = vmatpush1.xpose.msra.mxu0 0.0
    %313 = vmatprep.subr.mxu0 0.0
    %314 = vmatpush1.xpose.msra.mxu0 0.0
    %315 = vmatprep.subr.mxu0 0.0
    %316 = vmatpush1.xpose.msra.mxu0 0.0
    %317 = vmatprep.subr.mxu0 0.0
    %318 = vmatpush1.xpose.msra.mxu0 0.0
    %319 = vmatprep.subr.mxu0 0.0
    %320 = vmatpush1.xpose.msra.mxu0 0.0
    %321 = vmatprep.subr.mxu0 0.0
    %322 = vmatpush1.xpose.msra.mxu0 0.0
    %323 = vmatprep.subr.mxu0 0.0
    %324 = vmatpush1.xpose.msra.mxu0 0.0
    %325 = vmatprep.subr.mxu0 0.0
    %326 = vmatpush1.xpose.msra.mxu0 0.0
    %327 = vmatprep.subr.mxu0 0.0
    %328 = vmatpush1.xpose.msra.mxu0 0.0
    %329 = vmatprep.subr.mxu0 0.0
    %330 = vmatpush1.xpose.msra.mxu0 0.0
    %331 = vmatprep.subr.mxu0 0.0
    %332 = vmatpush1.xpose.msra.mxu0 0.0
    %333 = vmatprep.subr.mxu0 0.0
    %334 = vmatpush1.xpose.msra.mxu0 0.0
    %335 = vmatprep.subr.mxu0 0.0
    %336 = vmatpush1.xpose.msra.mxu0 0.0
    %337 = vmatprep.subr.mxu0 0.0
    %338 = vmatpush1.xpose.msra.mxu0 0.0
    %339 = vmatprep.subr.mxu0 0.0
    %340 = vmatpush1.xpose.msra.mxu0 0.0
    %341 = vmatprep.subr.mxu0 0.0
    %342 = vmatpush1.xpose.msra.mxu0 0.0
    %343 = vmatprep.subr.mxu0 0.0
    %344 = vmatpush1.xpose.msra.mxu0 0.0
    %345 = vmatprep.subr.mxu0 0.0
    %346 = vmatpush1.xpose.msra.mxu0 0.0
    %347 = vmatprep.subr.mxu0 0.0
    %348 = vmatpush1.xpose.msra.mxu0 0.0
    %349 = vmatprep.subr.mxu0 0.0
    %350 = vmatpush1.xpose.msra.mxu0 0.0
    %351 = vmatprep.mubr.f32.mxu0 0.0
    %352 = vmatmul.mubr.f32.gmra.mrb[0].mxu0 %v170
    %v353 = vpop.f32.mrb[0].mxu0
    %v354 = vadd.f32 %v273, %v353
    %v355 = vpop.f32.mrb[0].mxu0
    %356 = vmatprep.mubr.f32.mxu0 0.0
    %357 = vmatmul.mubr.f32.gmra.mrb[0].mxu0 %v173
    %v358 = vpop.f32.mrb[0].mxu0
    %v359 = vadd.f32 %v273, %v358
    %v360 = vpop.f32.mrb[0].mxu0
    %361 = vdwg.mxu0
    %v362 = vld [vmem:[%s5] sm:$0xff]
    %v363 = vld [vmem:[%s5 + $0x8] sm:$0xff]
    %v364 = vld [vmem:[%s5 + $0x10] sm:$0xff]
    %v365 = vld [vmem:[%s5 + $0x18] sm:$0xff]
    %v366 = vld [vmem:[%s6] sm:$0x1]
    %v368 = vlaneseq
    %v369 = vshrl.u32 %v368, 7
    %v370 = vsub.s32 0, %v369
    %v371 = vrot.slane %v366, %v370
    %v374 = vsel %vm168, %v362, 0
    %v377 = vsel %vm168, %v363, 0
    %v380 = vsel %vm168, %v364, 0
    %v383 = vsel %vm168, %v365, 0
    %385 = vmatprep.subr.mxu0 0.0
    %386 = vmatpush1.xpose.msra.mxu0 %v374
    %387 = vmatprep.subr.mxu0 0.0
    %388 = vmatpush1.xpose.msra.mxu0 %v377
    %389 = vmatprep.subr.mxu0 0.0
    %390 = vmatpush1.xpose.msra.mxu0 %v380
    %391 = vmatprep.subr.mxu0 0.0
    %392 = vmatpush1.xpose.msra.mxu0 %v383
    %393 = vmatprep.subr.mxu0 0.0
    %394 = vmatpush1.xpose.msra.mxu0 0.0
    %395 = vmatprep.subr.mxu0 0.0
    %396 = vmatpush1.xpose.msra.mxu0 0.0
    %397 = vmatprep.subr.mxu0 0.0
    %398 = vmatpush1.xpose.msra.mxu0 0.0
    %399 = vmatprep.subr.mxu0 0.0
    %400 = vmatpush1.xpose.msra.mxu0 0.0
    %401 = vmatprep.subr.mxu0 0.0
    %402 = vmatpush1.xpose.msra.mxu0 0.0
    %403 = vmatprep.subr.mxu0 0.0
    %404 = vmatpush1.xpose.msra.mxu0 0.0
    %405 = vmatprep.subr.mxu0 0.0
    %406 = vmatpush1.xpose.msra.mxu0 0.0
    %407 = vmatprep.subr.mxu0 0.0
    %408 = vmatpush1.xpose.msra.mxu0 0.0
    %409 = vmatprep.subr.mxu0 0.0
    %410 = vmatpush1.xpose.msra.mxu0 0.0
    %411 = vmatprep.subr.mxu0 0.0
    %412 = vmatpush1.xpose.msra.mxu0 0.0
    %413 = vmatprep.subr.mxu0 0.0
    %414 = vmatpush1.xpose.msra.mxu0 0.0
    %415 = vmatprep.subr.mxu0 0.0
    %416 = vmatpush1.xpose.msra.mxu0 0.0
    %417 = vmatprep.subr.mxu0 0.0
    %418 = vmatpush1.xpose.msra.mxu0 0.0
    %419 = vmatprep.subr.mxu0 0.0
    %420 = vmatpush1.xpose.msra.mxu0 0.0
    %421 = vmatprep.subr.mxu0 0.0
    %422 = vmatpush1.xpose.msra.mxu0 0.0
    %423 = vmatprep.subr.mxu0 0.0
    %424 = vmatpush1.xpose.msra.mxu0 0.0
    %425 = vmatprep.subr.mxu0 0.0
    %426 = vmatpush1.xpose.msra.mxu0 0.0
    %427 = vmatprep.subr.mxu0 0.0
    %428 = vmatpush1.xpose.msra.mxu0 0.0
    %429 = vmatprep.subr.mxu0 0.0
    %430 = vmatpush1.xpose.msra.mxu0 0.0
    %431 = vmatprep.subr.mxu0 0.0
    %432 = vmatpush1.xpose.msra.mxu0 0.0
    %433 = vmatprep.subr.mxu0 0.0
    %434 = vmatpush1.xpose.msra.mxu0 0.0
    %435 = vmatprep.subr.mxu0 0.0
    %436 = vmatpush1.xpose.msra.mxu0 0.0
    %437 = vmatprep.subr.mxu0 0.0
    %438 = vmatpush1.xpose.msra.mxu0 0.0
    %439 = vmatprep.subr.mxu0 0.0
    %440 = vmatpush1.xpose.msra.mxu0 0.0
    %441 = vmatprep.subr.mxu0 0.0
    %442 = vmatpush1.xpose.msra.mxu0 0.0
    %443 = vmatprep.subr.mxu0 0.0
    %444 = vmatpush1.xpose.msra.mxu0 0.0
    %445 = vmatprep.subr.mxu0 0.0
    %446 = vmatpush1.xpose.msra.mxu0 0.0
    %447 = vmatprep.subr.mxu0 0.0
    %448 = vmatpush1.xpose.msra.mxu0 0.0
    %449 = vmatprep.mubr.f32.mxu0 0.0
    %450 = vmatmul.mubr.f32.gmra.mrb[0].mxu0 %v170
    %v451 = vpop.f32.mrb[0].mxu0
    %v452 = vadd.f32 %v371, %v451
    %v453 = vpop.f32.mrb[0].mxu0
    %454 = vmatprep.mubr.f32.mxu0 0.0
    %455 = vmatmul.mubr.f32.gmra.mrb[0].mxu0 %v173
    %v456 = vpop.f32.mrb[0].mxu0
    %v457 = vadd.f32 %v371, %v456
    %v458 = vpop.f32.mrb[0].mxu0
    %459 = vdwg.mxu0
    %v460 = vmul.f32 %v262, %v118
    %v461 = vmul.f32 %v263, %v118
    %v463 = vsel %vm168, %v460, 0
    %v466 = vsel %vm168, %v461, 0
    %v469 = vsel %vm168, %v354, 0
    %v472 = vsel %vm168, %v359, 0
    %474 = vmatprep.subr.mxu0 0.0
    %475 = vmatpush1.xpose.msra.mxu0 %v469
    %476 = vmatprep.subr.mxu0 0.0
    %477 = vmatpush1.xpose.msra.mxu0 %v472
    %478 = vmatprep.subr.mxu0 0.0
    %479 = vmatpush1.xpose.msra.mxu0 0.0
    %480 = vmatprep.subr.mxu0 0.0
    %481 = vmatpush1.xpose.msra.mxu0 0.0
    %482 = vmatprep.subr.mxu0 0.0
    %483 = vmatpush1.xpose.msra.mxu0 0.0
    %484 = vmatprep.subr.mxu0 0.0
    %485 = vmatpush1.xpose.msra.mxu0 0.0
    %486 = vmatprep.subr.mxu0 0.0
    %487 = vmatpush1.xpose.msra.mxu0 0.0
    %488 = vmatprep.subr.mxu0 0.0
    %489 = vmatpush1.xpose.msra.mxu0 0.0
    %490 = vmatprep.subr.mxu0 0.0
    %491 = vmatpush1.xpose.msra.mxu0 0.0
    %492 = vmatprep.subr.mxu0 0.0
    %493 = vmatpush1.xpose.msra.mxu0 0.0
    %494 = vmatprep.subr.mxu0 0.0
    %495 = vmatpush1.xpose.msra.mxu0 0.0
    %496 = vmatprep.subr.mxu0 0.0
    %497 = vmatpush1.xpose.msra.mxu0 0.0
    %498 = vmatprep.subr.mxu0 0.0
    %499 = vmatpush1.xpose.msra.mxu0 0.0
    %500 = vmatprep.subr.mxu0 0.0
    %501 = vmatpush1.xpose.msra.mxu0 0.0
    %502 = vmatprep.subr.mxu0 0.0
    %503 = vmatpush1.xpose.msra.mxu0 0.0
    %504 = vmatprep.subr.mxu0 0.0
    %505 = vmatpush1.xpose.msra.mxu0 0.0
    %506 = vmatprep.subr.mxu0 0.0
    %507 = vmatpush1.xpose.msra.mxu0 0.0
    %508 = vmatprep.subr.mxu0 0.0
    %509 = vmatpush1.xpose.msra.mxu0 0.0
    %510 = vmatprep.subr.mxu0 0.0
    %511 = vmatpush1.xpose.msra.mxu0 0.0
    %512 = vmatprep.subr.mxu0 0.0
    %513 = vmatpush1.xpose.msra.mxu0 0.0
    %514 = vmatprep.subr.mxu0 0.0
    %515 = vmatpush1.xpose.msra.mxu0 0.0
    %516 = vmatprep.subr.mxu0 0.0
    %517 = vmatpush1.xpose.msra.mxu0 0.0
    %518 = vmatprep.subr.mxu0 0.0
    %519 = vmatpush1.xpose.msra.mxu0 0.0
    %520 = vmatprep.subr.mxu0 0.0
    %521 = vmatpush1.xpose.msra.mxu0 0.0
    %522 = vmatprep.subr.mxu0 0.0
    %523 = vmatpush1.xpose.msra.mxu0 0.0
    %524 = vmatprep.subr.mxu0 0.0
    %525 = vmatpush1.xpose.msra.mxu0 0.0
    %526 = vmatprep.subr.mxu0 0.0
    %527 = vmatpush1.xpose.msra.mxu0 0.0
    %528 = vmatprep.subr.mxu0 0.0
    %529 = vmatpush1.xpose.msra.mxu0 0.0
    %530 = vmatprep.subr.mxu0 0.0
    %531 = vmatpush1.xpose.msra.mxu0 0.0
    %532 = vmatprep.subr.mxu0 0.0
    %533 = vmatpush1.xpose.msra.mxu0 0.0
    %534 = vmatprep.subr.mxu0 0.0
    %535 = vmatpush1.xpose.msra.mxu0 0.0
    %536 = vmatprep.subr.mxu0 0.0
    %537 = vmatpush1.xpose.msra.mxu0 0.0
    %538 = vmatprep.mubr.f32.mxu0 0.0
    %539 = vmatmul.mubr.f32.gmra.mrb[0].mxu0 %v463
    %v540 = vpop.f32.mrb[0].mxu0
    %v541 = vadd.f32 0.0, %v540
    %v542 = vpop.f32.mrb[0].mxu0
    %543 = vmatprep.mubr.f32.mxu0 0.0
    %544 = vmatmul.mubr.f32.gmra.mrb[0].mxu0 %v466
    %v545 = vpop.f32.mrb[0].mxu0
    %v546 = vadd.f32 0.0, %v545
    %v547 = vpop.f32.mrb[0].mxu0
    %548 = vdwg.mxu0
    %v549 = vsel %vm153, %v541, -1e+30
    %v550 = vsel %vm154, %v546, -1e+30
    %vm551 = vcmask 130048
    %v552 = vsel %vm551, %v549, -inf
    %553 = vmax.xlane.f32.xlu0 %v552
    %v554 = vpop.xlane.xlu0 %553
    %v555 = vsel %vm551, %v550, -inf
    %556 = vmax.xlane.f32.xlu0 %v555
    %v557 = vpop.xlane.xlu0 %556
    %v558 = vsub.f32 %v549, %v554
    %v559 = vsub.f32 %v550, %v557
    %v560 = vmul.f32 %v558, 1.442695
    %v561 = vpow.pop %v560
    %v562 = vmul.f32 %v559, 1.442695
    %v563 = vpow.pop %v562
    %v564 = vsel %vm551, %v561, 0.0
    %565 = vadd.xlane.f32.xlu0 %v564
    %v566 = vpop.xlane.xlu0 %565
    %v567 = vsel %vm551, %v563, 0.0
    %568 = vadd.xlane.f32.xlu0 %v567
    %v569 = vpop.xlane.xlu0 %568
    %v570 = vrcp.pop %v566
    %v571 = vrcp.pop %v569
    %v572 = vmul.f32 %v561, %v570
    %v573 = vmul.f32 %v563, %v571
    %v575 = vsel %vm551, %v572, 0
    %v578 = vsel %vm551, %v573, 0
    %580 = vmatprep.subr.mxu0 0.0
    %581 = vmatpush1.msra.mxu0 %v452
    %582 = vmatprep.subr.mxu0 0.0
    %583 = vmatpush1.msra.mxu0 %v457
    %584 = vmatprep.subr.mxu0 0.0
    %585 = vmatpush1.msra.mxu0 0.0
    %586 = vmatprep.subr.mxu0 0.0
    %587 = vmatpush1.msra.mxu0 0.0
    %588 = vmatprep.subr.mxu0 0.0
    %589 = vmatpush1.msra.mxu0 0.0
    %590 = vmatprep.subr.mxu0 0.0
    %591 = vmatpush1.msra.mxu0 0.0
    %592 = vmatprep.subr.mxu0 0.0
    %593 = vmatpush1.msra.mxu0 0.0
    %594 = vmatprep.subr.mxu0 0.0
    %595 = vmatpush1.msra.mxu0 0.0
    %596 = vmatprep.subr.mxu0 0.0
    %597 = vmatpush1.msra.mxu0 0.0
    %598 = vmatprep.subr.mxu0 0.0
    %599 = vmatpush1.msra.mxu0 0.0
    %600 = vmatprep.subr.mxu0 0.0
    %601 = vmatpush1.msra.mxu0 0.0
    %602 = vmatprep.subr.mxu0 0.0
    %603 = vmatpush1.msra.mxu0 0.0
    %604 = vmatprep.subr.mxu0 0.0
    %605 = vmatpush1.msra.mxu0 0.0
    %606 = vmatprep.subr.mxu0 0.0
    %607 = vmatpush1.msra.mxu0 0.0
    %608 = vmatprep.subr.mxu0 0.0
    %609 = vmatpush1.msra.mxu0 0.0
    %610 = vmatprep.subr.mxu0 0.0
    %611 = vmatpush1.msra.mxu0 0.0
    %612 = vmatprep.subr.mxu0 0.0
    %613 = vmatpush1.msra.mxu0 0.0
    %614 = vmatprep.subr.mxu0 0.0
    %615 = vmatpush1.msra.mxu0 0.0
    %616 = vmatprep.subr.mxu0 0.0
    %617 = vmatpush1.msra.mxu0 0.0
    %618 = vmatprep.subr.mxu0 0.0
    %619 = vmatpush1.msra.mxu0 0.0
    %620 = vmatprep.subr.mxu0 0.0
    %621 = vmatpush1.msra.mxu0 0.0
    %622 = vmatprep.subr.mxu0 0.0
    %623 = vmatpush1.msra.mxu0 0.0
    %624 = vmatprep.subr.mxu0 0.0
    %625 = vmatpush1.msra.mxu0 0.0
    %626 = vmatprep.subr.mxu0 0.0
    %627 = vmatpush1.msra.mxu0 0.0
    %628 = vmatprep.subr.mxu0 0.0
    %629 = vmatpush1.msra.mxu0 0.0
    %630 = vmatprep.subr.mxu0 0.0
    %631 = vmatpush1.msra.mxu0 0.0
    %632 = vmatprep.subr.mxu0 0.0
    %633 = vmatpush1.msra.mxu0 0.0
    %634 = vmatprep.subr.mxu0 0.0
    %635 = vmatpush1.msra.mxu0 0.0
    %636 = vmatprep.subr.mxu0 0.0
    %637 = vmatpush1.msra.mxu0 0.0
    %638 = vmatprep.subr.mxu0 0.0
    %639 = vmatpush1.msra.mxu0 0.0
    %640 = vmatprep.subr.mxu0 0.0
    %641 = vmatpush1.msra.mxu0 0.0
    %642 = vmatprep.subr.mxu0 0.0
    %643 = vmatpush1.msra.mxu0 0.0
    %644 = vmatprep.mubr.f32.mxu0 0.0
    %645 = vmatmul.mubr.f32.gmra.mrb[0].mxu0 %v575
    %v646 = vpop.f32.mrb[0].mxu0
    %v647 = vadd.f32 0.0, %v646
    %v648 = vpop.f32.mrb[0].mxu0
    %649 = vmatprep.mubr.f32.mxu0 0.0
    %650 = vmatmul.mubr.f32.gmra.mrb[0].mxu0 %v578
    %v651 = vpop.f32.mrb[0].mxu0
    %v652 = vadd.f32 0.0, %v651
    %v653 = vpop.f32.mrb[0].mxu0
    %654 = vdwg.mxu0
    %v655 = vmul.f32 %v647, %v118
    %v656 = vmul.f32 %v652, %v118
    %v657 = vadd.f32 %v655, 0.0
    %v658 = vadd.f32 %v656, 0.0
    %v659 = vmul.f32 %v262, %v123
    %v660 = vmul.f32 %v263, %v123
    %v662 = vsel %vm168, %v659, 0
    %v665 = vsel %vm168, %v660, 0
    %667 = vmatprep.subr.mxu0 0.0
    %668 = vmatpush1.xpose.msra.mxu0 %v469
    %669 = vmatprep.subr.mxu0 0.0
    %670 = vmatpush1.xpose.msra.mxu0 %v472
    %671 = vmatprep.subr.mxu0 0.0
    %672 = vmatpush1.xpose.msra.mxu0 0.0
    %673 = vmatprep.subr.mxu0 0.0
    %674 = vmatpush1.xpose.msra.mxu0 0.0
    %675 = vmatprep.subr.mxu0 0.0
    %676 = vmatpush1.xpose.msra.mxu0 0.0
    %677 = vmatprep.subr.mxu0 0.0
    %678 = vmatpush1.xpose.msra.mxu0 0.0
    %679 = vmatprep.subr.mxu0 0.0
    %680 = vmatpush1.xpose.msra.mxu0 0.0
    %681 = vmatprep.subr.mxu0 0.0
    %682 = vmatpush1.xpose.msra.mxu0 0.0
    %683 = vmatprep.subr.mxu0 0.0
    %684 = vmatpush1.xpose.msra.mxu0 0.0
    %685 = vmatprep.subr.mxu0 0.0
    %686 = vmatpush1.xpose.msra.mxu0 0.0
    %687 = vmatprep.subr.mxu0 0.0
    %688 = vmatpush1.xpose.msra.mxu0 0.0
    %689 = vmatprep.subr.mxu0 0.0
    %690 = vmatpush1.xpose.msra.mxu0 0.0
    %691 = vmatprep.subr.mxu0 0.0
    %692 = vmatpush1.xpose.msra.mxu0 0.0
    %693 = vmatprep.subr.mxu0 0.0
    %694 = vmatpush1.xpose.msra.mxu0 0.0
    %695 = vmatprep.subr.mxu0 0.0
    %696 = vmatpush1.xpose.msra.mxu0 0.0
    %697 = vmatprep.subr.mxu0 0.0
    %698 = vmatpush1.xpose.msra.mxu0 0.0
    %699 = vmatprep.subr.mxu0 0.0
    %700 = vmatpush1.xpose.msra.mxu0 0.0
    %701 = vmatprep.subr.mxu0 0.0
    %702 = vmatpush1.xpose.msra.mxu0 0.0
    %703 = vmatprep.subr.mxu0 0.0
    %704 = vmatpush1.xpose.msra.mxu0 0.0
    %705 = vmatprep.subr.mxu0 0.0
    %706 = vmatpush1.xpose.msra.mxu0 0.0
    %707 = vmatprep.subr.mxu0 0.0
    %708 = vmatpush1.xpose.msra.mxu0 0.0
    %709 = vmatprep.subr.mxu0 0.0
    %710 = vmatpush1.xpose.msra.mxu0 0.0
    %711 = vmatprep.subr.mxu0 0.0
    %712 = vmatpush1.xpose.msra.mxu0 0.0
    %713 = vmatprep.subr.mxu0 0.0
    %714 = vmatpush1.xpose.msra.mxu0 0.0
    %715 = vmatprep.subr.mxu0 0.0
    %716 = vmatpush1.xpose.msra.mxu0 0.0
    %717 = vmatprep.subr.mxu0 0.0
    %718 = vmatpush1.xpose.msra.mxu0 0.0
    %719 = vmatprep.subr.mxu0 0.0
    %720 = vmatpush1.xpose.msra.mxu0 0.0
    %721 = vmatprep.subr.mxu0 0.0
    %722 = vmatpush1.xpose.msra.mxu0 0.0
    %723 = vmatprep.subr.mxu0 0.0
    %724 = vmatpush1.xpose.msra.mxu0 0.0
    %725 = vmatprep.subr.mxu0 0.0
    %726 = vmatpush1.xpose.msra.mxu0 0.0
    %727 = vmatprep.subr.mxu0 0.0
    %728 = vmatpush1.xpose.msra.mxu0 0.0
    %729 = vmatprep.subr.mxu0 0.0
    %730 = vmatpush1.xpose.msra.mxu0 0.0
    %731 = vmatprep.mubr.f32.mxu0 0.0
    %732 = vmatmul.mubr.f32.gmra.mrb[0].mxu0 %v662
    %v733 = vpop.f32.mrb[0].mxu0
    %v734 = vadd.f32 0.0, %v733
    %v735 = vpop.f32.mrb[0].mxu0
    %736 = vmatprep.mubr.f32.mxu0 0.0
    %737 = vmatmul.mubr.f32.gmra.mrb[0].mxu0 %v665
    %v738 = vpop.f32.mrb[0].mxu0
    %v739 = vadd.f32 0.0, %v738
    %v740 = vpop.f32.mrb[0].mxu0
    %741 = vdwg.mxu0
    %v742 = vsel %vm153, %v734, -1e+30
    %v743 = vsel %vm154, %v739, -1e+30
    %v744 = vsel %vm551, %v742, -inf
    %745 = vmax.xlane.f32.xlu0 %v744
    %v746 = vpop.xlane.xlu0 %745
    %v747 = vsel %vm551, %v743, -inf
    %748 = vmax.xlane.f32.xlu0 %v747
    %v749 = vpop.xlane.xlu0 %748
    %v750 = vsub.f32 %v742, %v746
    %v751 = vsub.f32 %v743, %v749
    %v752 = vmul.f32 %v750, 1.442695
    %v753 = vpow.pop %v752
    %v754 = vmul.f32 %v751, 1.442695
    %v755 = vpow.pop %v754
    %v756 = vsel %vm551, %v753, 0.0
    %757 = vadd.xlane.f32.xlu0 %v756
    %v758 = vpop.xlane.xlu0 %757
    %v759 = vsel %vm551, %v755, 0.0
    %760 = vadd.xlane.f32.xlu0 %v759
    %v761 = vpop.xlane.xlu0 %760
    %v762 = vrcp.pop %v758
    %v763 = vrcp.pop %v761
    %v764 = vmul.f32 %v753, %v762
    %v765 = vmul.f32 %v755, %v763
    %v767 = vsel %vm551, %v764, 0
    %v770 = vsel %vm551, %v765, 0
    %772 = vmatprep.subr.mxu0 0.0
    %773 = vmatpush1.msra.mxu0 %v452
    %774 = vmatprep.subr.mxu0 0.0
    %775 = vmatpush1.msra.mxu0 %v457
    %776 = vmatprep.subr.mxu0 0.0
    %777 = vmatpush1.msra.mxu0 0.0
    %778 = vmatprep.subr.mxu0 0.0
    %779 = vmatpush1.msra.mxu0 0.0
    %780 = vmatprep.subr.mxu0 0.0
    %781 = vmatpush1.msra.mxu0 0.0
    %782 = vmatprep.subr.mxu0 0.0
    %783 = vmatpush1.msra.mxu0 0.0
    %784 = vmatprep.subr.mxu0 0.0
    %785 = vmatpush1.msra.mxu0 0.0
    %786 = vmatprep.subr.mxu0 0.0
    %787 = vmatpush1.msra.mxu0 0.0
    %788 = vmatprep.subr.mxu0 0.0
    %789 = vmatpush1.msra.mxu0 0.0
    %790 = vmatprep.subr.mxu0 0.0
    %791 = vmatpush1.msra.mxu0 0.0
    %792 = vmatprep.subr.mxu0 0.0
    %793 = vmatpush1.msra.mxu0 0.0
    %794 = vmatprep.subr.mxu0 0.0
    %795 = vmatpush1.msra.mxu0 0.0
    %796 = vmatprep.subr.mxu0 0.0
    %797 = vmatpush1.msra.mxu0 0.0
    %798 = vmatprep.subr.mxu0 0.0
    %799 = vmatpush1.msra.mxu0 0.0
    %800 = vmatprep.subr.mxu0 0.0
    %801 = vmatpush1.msra.mxu0 0.0
    %802 = vmatprep.subr.mxu0 0.0
    %803 = vmatpush1.msra.mxu0 0.0
    %804 = vmatprep.subr.mxu0 0.0
    %805 = vmatpush1.msra.mxu0 0.0
    %806 = vmatprep.subr.mxu0 0.0
    %807 = vmatpush1.msra.mxu0 0.0
    %808 = vmatprep.subr.mxu0 0.0
    %809 = vmatpush1.msra.mxu0 0.0
    %810 = vmatprep.subr.mxu0 0.0
    %811 = vmatpush1.msra.mxu0 0.0
    %812 = vmatprep.subr.mxu0 0.0
    %813 = vmatpush1.msra.mxu0 0.0
    %814 = vmatprep.subr.mxu0 0.0
    %815 = vmatpush1.msra.mxu0 0.0
    %816 = vmatprep.subr.mxu0 0.0
    %817 = vmatpush1.msra.mxu0 0.0
    %818 = vmatprep.subr.mxu0 0.0
    %819 = vmatpush1.msra.mxu0 0.0
    %820 = vmatprep.subr.mxu0 0.0
    %821 = vmatpush1.msra.mxu0 0.0
    %822 = vmatprep.subr.mxu0 0.0
    %823 = vmatpush1.msra.mxu0 0.0
    %824 = vmatprep.subr.mxu0 0.0
    %825 = vmatpush1.msra.mxu0 0.0
    %826 = vmatprep.subr.mxu0 0.0
    %827 = vmatpush1.msra.mxu0 0.0
    %828 = vmatprep.subr.mxu0 0.0
    %829 = vmatpush1.msra.mxu0 0.0
    %830 = vmatprep.subr.mxu0 0.0
    %831 = vmatpush1.msra.mxu0 0.0
    %832 = vmatprep.subr.mxu0 0.0
    %833 = vmatpush1.msra.mxu0 0.0
    %834 = vmatprep.subr.mxu0 0.0
    %835 = vmatpush1.msra.mxu0 0.0
    %836 = vmatprep.mubr.f32.mxu0 0.0
    %837 = vmatmul.mubr.f32.gmra.mrb[0].mxu0 %v767
    %v838 = vpop.f32.mrb[0].mxu0
    %v839 = vadd.f32 0.0, %v838
    %v840 = vpop.f32.mrb[0].mxu0
    %841 = vmatprep.mubr.f32.mxu0 0.0
    %842 = vmatmul.mubr.f32.gmra.mrb[0].mxu0 %v770
    %v843 = vpop.f32.mrb[0].mxu0
    %v844 = vadd.f32 0.0, %v843
    %v845 = vpop.f32.mrb[0].mxu0
    %846 = vdwg.mxu0
    %v847 = vmul.f32 %v839, %v123
    %v848 = vmul.f32 %v844, %v123
    %v849 = vadd.f32 %v657, %v847
    %v850 = vadd.f32 %v658, %v848
    %v851 = vmul.f32 %v262, %v128
    %v852 = vmul.f32 %v263, %v128
    %v854 = vsel %vm168, %v851, 0
    %v857 = vsel %vm168, %v852, 0
    %859 = vmatprep.subr.mxu0 0.0
    %860 = vmatpush1.xpose.msra.mxu0 %v469
    %861 = vmatprep.subr.mxu0 0.0
    %862 = vmatpush1.xpose.msra.mxu0 %v472
    %863 = vmatprep.subr.mxu0 0.0
    %864 = vmatpush1.xpose.msra.mxu0 0.0
    %865 = vmatprep.subr.mxu0 0.0
    %866 = vmatpush1.xpose.msra.mxu0 0.0
    %867 = vmatprep.subr.mxu0 0.0
    %868 = vmatpush1.xpose.msra.mxu0 0.0
    %869 = vmatprep.subr.mxu0 0.0
    %870 = vmatpush1.xpose.msra.mxu0 0.0
    %871 = vmatprep.subr.mxu0 0.0
    %872 = vmatpush1.xpose.msra.mxu0 0.0
    %873 = vmatprep.subr.mxu0 0.0
    %874 = vmatpush1.xpose.msra.mxu0 0.0
    %875 = vmatprep.subr.mxu0 0.0
    %876 = vmatpush1.xpose.msra.mxu0 0.0
    %877 = vmatprep.subr.mxu0 0.0
    %878 = vmatpush1.xpose.msra.mxu0 0.0
    %879 = vmatprep.subr.mxu0 0.0
    %880 = vmatpush1.xpose.msra.mxu0 0.0
    %881 = vmatprep.subr.mxu0 0.0
    %882 = vmatpush1.xpose.msra.mxu0 0.0
    %883 = vmatprep.subr.mxu0 0.0
    %884 = vmatpush1.xpose.msra.mxu0 0.0
    %885 = vmatprep.subr.mxu0 0.0
    %886 = vmatpush1.xpose.msra.mxu0 0.0
    %887 = vmatprep.subr.mxu0 0.0
    %888 = vmatpush1.xpose.msra.mxu0 0.0
    %889 = vmatprep.subr.mxu0 0.0
    %890 = vmatpush1.xpose.msra.mxu0 0.0
    %891 = vmatprep.subr.mxu0 0.0
    %892 = vmatpush1.xpose.msra.mxu0 0.0
    %893 = vmatprep.subr.mxu0 0.0
    %894 = vmatpush1.xpose.msra.mxu0 0.0
    %895 = vmatprep.subr.mxu0 0.0
    %896 = vmatpush1.xpose.msra.mxu0 0.0
    %897 = vmatprep.subr.mxu0 0.0
    %898 = vmatpush1.xpose.msra.mxu0 0.0
    %899 = vmatprep.subr.mxu0 0.0
    %900 = vmatpush1.xpose.msra.mxu0 0.0
    %901 = vmatprep.subr.mxu0 0.0
    %902 = vmatpush1.xpose.msra.mxu0 0.0
    %903 = vmatprep.subr.mxu0 0.0
    %904 = vmatpush1.xpose.msra.mxu0 0.0
    %905 = vmatprep.subr.mxu0 0.0
    %906 = vmatpush1.xpose.msra.mxu0 0.0
    %907 = vmatprep.subr.mxu0 0.0
    %908 = vmatpush1.xpose.msra.mxu0 0.0
    %909 = vmatprep.subr.mxu0 0.0
    %910 = vmatpush1.xpose.msra.mxu0 0.0
    %911 = vmatprep.subr.mxu0 0.0
    %912 = vmatpush1.xpose.msra.mxu0 0.0
    %913 = vmatprep.subr.mxu0 0.0
    %914 = vmatpush1.xpose.msra.mxu0 0.0
    %915 = vmatprep.subr.mxu0 0.0
    %916 = vmatpush1.xpose.msra.mxu0 0.0
    %917 = vmatprep.subr.mxu0 0.0
    %918 = vmatpush1.xpose.msra.mxu0 0.0
    %919 = vmatprep.subr.mxu0 0.0
    %920 = vmatpush1.xpose.msra.mxu0 0.0
    %921 = vmatprep.subr.mxu0 0.0
    %922 = vmatpush1.xpose.msra.mxu0 0.0
    %923 = vmatprep.mubr.f32.mxu0 0.0
    %924 = vmatmul.mubr.f32.gmra.mrb[0].mxu0 %v854
    %v925 = vpop.f32.mrb[0].mxu0
    %v926 = vadd.f32 0.0, %v925
    %v927 = vpop.f32.mrb[0].mxu0
    %928 = vmatprep.mubr.f32.mxu0 0.0
    %929 = vmatmul.mubr.f32.gmra.mrb[0].mxu0 %v857
    %v930 = vpop.f32.mrb[0].mxu0
    %v931 = vadd.f32 0.0, %v930
    %v932 = vpop.f32.mrb[0].mxu0
    %933 = vdwg.mxu0
    %v934 = vsel %vm153, %v926, -1e+30
    %v935 = vsel %vm154, %v931, -1e+30
    %v936 = vsel %vm551, %v934, -inf
    %937 = vmax.xlane.f32.xlu0 %v936
    %v938 = vpop.xlane.xlu0 %937
    %v939 = vsel %vm551, %v935, -inf
    %940 = vmax.xlane.f32.xlu0 %v939
    %v941 = vpop.xlane.xlu0 %940
    %v942 = vsub.f32 %v934, %v938
    %v943 = vsub.f32 %v935, %v941
    %v944 = vmul.f32 %v942, 1.442695
    %v945 = vpow.pop %v944
    %v946 = vmul.f32 %v943, 1.442695
    %v947 = vpow.pop %v946
    %v948 = vsel %vm551, %v945, 0.0
    %949 = vadd.xlane.f32.xlu0 %v948
    %v950 = vpop.xlane.xlu0 %949
    %v951 = vsel %vm551, %v947, 0.0
    %952 = vadd.xlane.f32.xlu0 %v951
    %v953 = vpop.xlane.xlu0 %952
    %v954 = vrcp.pop %v950
    %v955 = vrcp.pop %v953
    %v956 = vmul.f32 %v945, %v954
    %v957 = vmul.f32 %v947, %v955
    %v959 = vsel %vm551, %v956, 0
    %v962 = vsel %vm551, %v957, 0
    %964 = vmatprep.subr.mxu0 0.0
    %965 = vmatpush1.msra.mxu0 %v452
    %966 = vmatprep.subr.mxu0 0.0
    %967 = vmatpush1.msra.mxu0 %v457
    %968 = vmatprep.subr.mxu0 0.0
    %969 = vmatpush1.msra.mxu0 0.0
    %970 = vmatprep.subr.mxu0 0.0
    %971 = vmatpush1.msra.mxu0 0.0
    %972 = vmatprep.subr.mxu0 0.0
    %973 = vmatpush1.msra.mxu0 0.0
    %974 = vmatprep.subr.mxu0 0.0
    %975 = vmatpush1.msra.mxu0 0.0
    %976 = vmatprep.subr.mxu0 0.0
    %977 = vmatpush1.msra.mxu0 0.0
    %978 = vmatprep.subr.mxu0 0.0
    %979 = vmatpush1.msra.mxu0 0.0
    %980 = vmatprep.subr.mxu0 0.0
    %981 = vmatpush1.msra.mxu0 0.0
    %982 = vmatprep.subr.mxu0 0.0
    %983 = vmatpush1.msra.mxu0 0.0
    %984 = vmatprep.subr.mxu0 0.0
    %985 = vmatpush1.msra.mxu0 0.0
    %986 = vmatprep.subr.mxu0 0.0
    %987 = vmatpush1.msra.mxu0 0.0
    %988 = vmatprep.subr.mxu0 0.0
    %989 = vmatpush1.msra.mxu0 0.0
    %990 = vmatprep.subr.mxu0 0.0
    %991 = vmatpush1.msra.mxu0 0.0
    %992 = vmatprep.subr.mxu0 0.0
    %993 = vmatpush1.msra.mxu0 0.0
    %994 = vmatprep.subr.mxu0 0.0
    %995 = vmatpush1.msra.mxu0 0.0
    %996 = vmatprep.subr.mxu0 0.0
    %997 = vmatpush1.msra.mxu0 0.0
    %998 = vmatprep.subr.mxu0 0.0
    %999 = vmatpush1.msra.mxu0 0.0
    %1000 = vmatprep.subr.mxu0 0.0
    %1001 = vmatpush1.msra.mxu0 0.0
    %1002 = vmatprep.subr.mxu0 0.0
    %1003 = vmatpush1.msra.mxu0 0.0
    %1004 = vmatprep.subr.mxu0 0.0
    %1005 = vmatpush1.msra.mxu0 0.0
    %1006 = vmatprep.subr.mxu0 0.0
    %1007 = vmatpush1.msra.mxu0 0.0
    %1008 = vmatprep.subr.mxu0 0.0
    %1009 = vmatpush1.msra.mxu0 0.0
    %1010 = vmatprep.subr.mxu0 0.0
    %1011 = vmatpush1.msra.mxu0 0.0
    %1012 = vmatprep.subr.mxu0 0.0
    %1013 = vmatpush1.msra.mxu0 0.0
    %1014 = vmatprep.subr.mxu0 0.0
    %1015 = vmatpush1.msra.mxu0 0.0
    %1016 = vmatprep.subr.mxu0 0.0
    %1017 = vmatpush1.msra.mxu0 0.0
    %1018 = vmatprep.subr.mxu0 0.0
    %1019 = vmatpush1.msra.mxu0 0.0
    %1020 = vmatprep.subr.mxu0 0.0
    %1021 = vmatpush1.msra.mxu0 0.0
    %1022 = vmatprep.subr.mxu0 0.0
    %1023 = vmatpush1.msra.mxu0 0.0
    %1024 = vmatprep.subr.mxu0 0.0
    %1025 = vmatpush1.msra.mxu0 0.0
    %1026 = vmatprep.subr.mxu0 0.0
    %1027 = vmatpush1.msra.mxu0 0.0
    %1028 = vmatprep.mubr.f32.mxu0 0.0
    %1029 = vmatmul.mubr.f32.gmra.mrb[0].mxu0 %v959
    %v1030 = vpop.f32.mrb[0].mxu0
    %v1031 = vadd.f32 0.0, %v1030
    %v1032 = vpop.f32.mrb[0].mxu0
    %1033 = vmatprep.mubr.f32.mxu0 0.0
    %1034 = vmatmul.mubr.f32.gmra.mrb[0].mxu0 %v962
    %v1035 = vpop.f32.mrb[0].mxu0
    %v1036 = vadd.f32 0.0, %v1035
    %v1037 = vpop.f32.mrb[0].mxu0
    %1038 = vdwg.mxu0
    %v1039 = vmul.f32 %v1031, %v128
    %v1040 = vmul.f32 %v1036, %v128
    %v1041 = vadd.f32 %v849, %v1039
    %v1042 = vadd.f32 %v850, %v1040
    %v1043 = vmul.f32 %v262, %v133
    %v1044 = vmul.f32 %v263, %v133
    %v1046 = vsel %vm168, %v1043, 0
    %v1049 = vsel %vm168, %v1044, 0
    %1051 = vmatprep.subr.mxu0 0.0
    %1052 = vmatpush1.xpose.msra.mxu0 %v469
    %1053 = vmatprep.subr.mxu0 0.0
    %1054 = vmatpush1.xpose.msra.mxu0 %v472
    %1055 = vmatprep.subr.mxu0 0.0
    %1056 = vmatpush1.xpose.msra.mxu0 0.0
    %1057 = vmatprep.subr.mxu0 0.0
    %1058 = vmatpush1.xpose.msra.mxu0 0.0
    %1059 = vmatprep.subr.mxu0 0.0
    %1060 = vmatpush1.xpose.msra.mxu0 0.0
    %1061 = vmatprep.subr.mxu0 0.0
    %1062 = vmatpush1.xpose.msra.mxu0 0.0
    %1063 = vmatprep.subr.mxu0 0.0
    %1064 = vmatpush1.xpose.msra.mxu0 0.0
    %1065 = vmatprep.subr.mxu0 0.0
    %1066 = vmatpush1.xpose.msra.mxu0 0.0
    %1067 = vmatprep.subr.mxu0 0.0
    %1068 = vmatpush1.xpose.msra.mxu0 0.0
    %1069 = vmatprep.subr.mxu0 0.0
    %1070 = vmatpush1.xpose.msra.mxu0 0.0
    %1071 = vmatprep.subr.mxu0 0.0
    %1072 = vmatpush1.xpose.msra.mxu0 0.0
    %1073 = vmatprep.subr.mxu0 0.0
    %1074 = vmatpush1.xpose.msra.mxu0 0.0
    %1075 = vmatprep.subr.mxu0 0.0
    %1076 = vmatpush1.xpose.msra.mxu0 0.0
    %1077 = vmatprep.subr.mxu0 0.0
    %1078 = vmatpush1.xpose.msra.mxu0 0.0
    %1079 = vmatprep.subr.mxu0 0.0
    %1080 = vmatpush1.xpose.msra.mxu0 0.0
    %1081 = vmatprep.subr.mxu0 0.0
    %1082 = vmatpush1.xpose.msra.mxu0 0.0
    %1083 = vmatprep.subr.mxu0 0.0
    %1084 = vmatpush1.xpose.msra.mxu0 0.0
    %1085 = vmatprep.subr.mxu0 0.0
    %1086 = vmatpush1.xpose.msra.mxu0 0.0
    %1087 = vmatprep.subr.mxu0 0.0
    %1088 = vmatpush1.xpose.msra.mxu0 0.0
    %1089 = vmatprep.subr.mxu0 0.0
    %1090 = vmatpush1.xpose.msra.mxu0 0.0
    %1091 = vmatprep.subr.mxu0 0.0
    %1092 = vmatpush1.xpose.msra.mxu0 0.0
    %1093 = vmatprep.subr.mxu0 0.0
    %1094 = vmatpush1.xpose.msra.mxu0 0.0
    %1095 = vmatprep.subr.mxu0 0.0
    %1096 = vmatpush1.xpose.msra.mxu0 0.0
    %1097 = vmatprep.subr.mxu0 0.0
    %1098 = vmatpush1.xpose.msra.mxu0 0.0
    %1099 = vmatprep.subr.mxu0 0.0
    %1100 = vmatpush1.xpose.msra.mxu0 0.0
    %1101 = vmatprep.subr.mxu0 0.0
    %1102 = vmatpush1.xpose.msra.mxu0 0.0
    %1103 = vmatprep.subr.mxu0 0.0
    %1104 = vmatpush1.xpose.msra.mxu0 0.0
    %1105 = vmatprep.subr.mxu0 0.0
    %1106 = vmatpush1.xpose.msra.mxu0 0.0
    %1107 = vmatprep.subr.mxu0 0.0
    %1108 = vmatpush1.xpose.msra.mxu0 0.0
    %1109 = vmatprep.subr.mxu0 0.0
    %1110 = vmatpush1.xpose.msra.mxu0 0.0
    %1111 = vmatprep.subr.mxu0 0.0
    %1112 = vmatpush1.xpose.msra.mxu0 0.0
    %1113 = vmatprep.subr.mxu0 0.0
    %1114 = vmatpush1.xpose.msra.mxu0 0.0
    %1115 = vmatprep.mubr.f32.mxu0 0.0
    %1116 = vmatmul.mubr.f32.gmra.mrb[0].mxu0 %v1046
    %v1117 = vpop.f32.mrb[0].mxu0
    %v1118 = vadd.f32 0.0, %v1117
    %v1119 = vpop.f32.mrb[0].mxu0
    %1120 = vmatprep.mubr.f32.mxu0 0.0
    %1121 = vmatmul.mubr.f32.gmra.mrb[0].mxu0 %v1049
    %v1122 = vpop.f32.mrb[0].mxu0
    %v1123 = vadd.f32 0.0, %v1122
    %v1124 = vpop.f32.mrb[0].mxu0
    %1125 = vdwg.mxu0
    %v1126 = vsel %vm153, %v1118, -1e+30
    %v1127 = vsel %vm154, %v1123, -1e+30
    %v1128 = vsel %vm551, %v1126, -inf
    %1129 = vmax.xlane.f32.xlu0 %v1128
    %v1130 = vpop.xlane.xlu0 %1129
    %v1131 = vsel %vm551, %v1127, -inf
    %1132 = vmax.xlane.f32.xlu0 %v1131
    %v1133 = vpop.xlane.xlu0 %1132
    %v1134 = vsub.f32 %v1126, %v1130
    %v1135 = vsub.f32 %v1127, %v1133
    %v1136 = vmul.f32 %v1134, 1.442695
    %v1137 = vpow.pop %v1136
    %v1138 = vmul.f32 %v1135, 1.442695
    %v1139 = vpow.pop %v1138
    %v1140 = vsel %vm551, %v1137, 0.0
    %1141 = vadd.xlane.f32.xlu0 %v1140
    %v1142 = vpop.xlane.xlu0 %1141
    %v1143 = vsel %vm551, %v1139, 0.0
    %1144 = vadd.xlane.f32.xlu0 %v1143
    %v1145 = vpop.xlane.xlu0 %1144
    %v1146 = vrcp.pop %v1142
    %v1147 = vrcp.pop %v1145
    %v1148 = vmul.f32 %v1137, %v1146
    %v1149 = vmul.f32 %v1139, %v1147
    %v1151 = vsel %vm551, %v1148, 0
    %v1154 = vsel %vm551, %v1149, 0
    %1156 = vmatprep.subr.mxu0 0.0
    %1157 = vmatpush1.msra.mxu0 %v452
    %1158 = vmatprep.subr.mxu0 0.0
    %1159 = vmatpush1.msra.mxu0 %v457
    %1160 = vmatprep.subr.mxu0 0.0
    %1161 = vmatpush1.msra.mxu0 0.0
    %1162 = vmatprep.subr.mxu0 0.0
    %1163 = vmatpush1.msra.mxu0 0.0
    %1164 = vmatprep.subr.mxu0 0.0
    %1165 = vmatpush1.msra.mxu0 0.0
    %1166 = vmatprep.subr.mxu0 0.0
    %1167 = vmatpush1.msra.mxu0 0.0
    %1168 = vmatprep.subr.mxu0 0.0
    %1169 = vmatpush1.msra.mxu0 0.0
    %1170 = vmatprep.subr.mxu0 0.0
    %1171 = vmatpush1.msra.mxu0 0.0
    %1172 = vmatprep.subr.mxu0 0.0
    %1173 = vmatpush1.msra.mxu0 0.0
    %1174 = vmatprep.subr.mxu0 0.0
    %1175 = vmatpush1.msra.mxu0 0.0
    %1176 = vmatprep.subr.mxu0 0.0
    %1177 = vmatpush1.msra.mxu0 0.0
    %1178 = vmatprep.subr.mxu0 0.0
    %1179 = vmatpush1.msra.mxu0 0.0
    %1180 = vmatprep.subr.mxu0 0.0
    %1181 = vmatpush1.msra.mxu0 0.0
    %1182 = vmatprep.subr.mxu0 0.0
    %1183 = vmatpush1.msra.mxu0 0.0
    %1184 = vmatprep.subr.mxu0 0.0
    %1185 = vmatpush1.msra.mxu0 0.0
    %1186 = vmatprep.subr.mxu0 0.0
    %1187 = vmatpush1.msra.mxu0 0.0
    %1188 = vmatprep.subr.mxu0 0.0
    %1189 = vmatpush1.msra.mxu0 0.0
    %1190 = vmatprep.subr.mxu0 0.0
    %1191 = vmatpush1.msra.mxu0 0.0
    %1192 = vmatprep.subr.mxu0 0.0
    %1193 = vmatpush1.msra.mxu0 0.0
    %1194 = vmatprep.subr.mxu0 0.0
    %1195 = vmatpush1.msra.mxu0 0.0
    %1196 = vmatprep.subr.mxu0 0.0
    %1197 = vmatpush1.msra.mxu0 0.0
    %1198 = vmatprep.subr.mxu0 0.0
    %1199 = vmatpush1.msra.mxu0 0.0
    %1200 = vmatprep.subr.mxu0 0.0
    %1201 = vmatpush1.msra.mxu0 0.0
    %1202 = vmatprep.subr.mxu0 0.0
    %1203 = vmatpush1.msra.mxu0 0.0
    %1204 = vmatprep.subr.mxu0 0.0
    %1205 = vmatpush1.msra.mxu0 0.0
    %1206 = vmatprep.subr.mxu0 0.0
    %1207 = vmatpush1.msra.mxu0 0.0
    %1208 = vmatprep.subr.mxu0 0.0
    %1209 = vmatpush1.msra.mxu0 0.0
    %1210 = vmatprep.subr.mxu0 0.0
    %1211 = vmatpush1.msra.mxu0 0.0
    %1212 = vmatprep.subr.mxu0 0.0
    %1213 = vmatpush1.msra.mxu0 0.0
    %1214 = vmatprep.subr.mxu0 0.0
    %1215 = vmatpush1.msra.mxu0 0.0
    %1216 = vmatprep.subr.mxu0 0.0
    %1217 = vmatpush1.msra.mxu0 0.0
    %1218 = vmatprep.subr.mxu0 0.0
    %1219 = vmatpush1.msra.mxu0 0.0
    %1220 = vmatprep.mubr.f32.mxu0 0.0
    %1221 = vmatmul.mubr.f32.gmra.mrb[0].mxu0 %v1151
    %v1222 = vpop.f32.mrb[0].mxu0
    %v1223 = vadd.f32 0.0, %v1222
    %v1224 = vpop.f32.mrb[0].mxu0
    %1225 = vmatprep.mubr.f32.mxu0 0.0
    %1226 = vmatmul.mubr.f32.gmra.mrb[0].mxu0 %v1154
    %v1227 = vpop.f32.mrb[0].mxu0
    %v1228 = vadd.f32 0.0, %v1227
    %v1229 = vpop.f32.mrb[0].mxu0
    %1230 = vdwg.mxu0
    %v1231 = vmul.f32 %v1223, %v133
    %v1232 = vmul.f32 %v1228, %v133
    %v1233 = vadd.f32 %v1041, %v1231
    %v1234 = vadd.f32 %v1042, %v1232
    %v1235 = vld [vmem:[#allocation5] sm:$0xff]
    %v1236 = vld [vmem:[#allocation5 + $0x8] sm:$0xff]
    %v1237 = vld [vmem:[#allocation5 + $0x10] sm:$0xff]
    %v1238 = vld [vmem:[#allocation5 + $0x18] sm:$0xff]
    %v1239 = vld [vmem:[%s8] sm:$0x1]
    %v1241 = vlaneseq
    %v1242 = vshrl.u32 %v1241, 7
    %v1243 = vsub.s32 0, %v1242
    %v1244 = vrot.slane %v1239, %v1243
    %v1247 = vsel %vm168, %v1233, 0
    %v1250 = vsel %vm168, %v1234, 0
    %v1253 = vsel %vm168, %v1235, 0
    %v1256 = vsel %vm168, %v1236, 0
    %v1259 = vsel %vm168, %v1237, 0
    %v1262 = vsel %vm168, %v1238, 0
    %1264 = vmatprep.subr.mxu0 0.0
    %1265 = vmatpush1.xpose.msra.mxu0 %v1253
    %1266 = vmatprep.subr.mxu0 0.0
    %1267 = vmatpush1.xpose.msra.mxu0 %v1256
    %1268 = vmatprep.subr.mxu0 0.0
    %1269 = vmatpush1.xpose.msra.mxu0 %v1259
    %1270 = vmatprep.subr.mxu0 0.0
    %1271 = vmatpush1.xpose.msra.mxu0 %v1262
    %1272 = vmatprep.subr.mxu0 0.0
    %1273 = vmatpush1.xpose.msra.mxu0 0.0
    %1274 = vmatprep.subr.mxu0 0.0
    %1275 = vmatpush1.xpose.msra.mxu0 0.0
    %1276 = vmatprep.subr.mxu0 0.0
    %1277 = vmatpush1.xpose.msra.mxu0 0.0
    %1278 = vmatprep.subr.mxu0 0.0
    %1279 = vmatpush1.xpose.msra.mxu0 0.0
    %1280 = vmatprep.subr.mxu0 0.0
    %1281 = vmatpush1.xpose.msra.mxu0 0.0
    %1282 = vmatprep.subr.mxu0 0.0
    %1283 = vmatpush1.xpose.msra.mxu0 0.0
    %1284 = vmatprep.subr.mxu0 0.0
    %1285 = vmatpush1.xpose.msra.mxu0 0.0
    %1286 = vmatprep.subr.mxu0 0.0
    %1287 = vmatpush1.xpose.msra.mxu0 0.0
    %1288 = vmatprep.subr.mxu0 0.0
    %1289 = vmatpush1.xpose.msra.mxu0 0.0
    %1290 = vmatprep.subr.mxu0 0.0
    %1291 = vmatpush1.xpose.msra.mxu0 0.0
    %1292 = vmatprep.subr.mxu0 0.0
    %1293 = vmatpush1.xpose.msra.mxu0 0.0
    %1294 = vmatprep.subr.mxu0 0.0
    %1295 = vmatpush1.xpose.msra.mxu0 0.0
    %1296 = vmatprep.subr.mxu0 0.0
    %1297 = vmatpush1.xpose.msra.mxu0 0.0
    %1298 = vmatprep.subr.mxu0 0.0
    %1299 = vmatpush1.xpose.msra.mxu0 0.0
    %1300 = vmatprep.subr.mxu0 0.0
    %1301 = vmatpush1.xpose.msra.mxu0 0.0
    %1302 = vmatprep.subr.mxu0 0.0
    %1303 = vmatpush1.xpose.msra.mxu0 0.0
    %1304 = vmatprep.subr.mxu0 0.0
    %1305 = vmatpush1.xpose.msra.mxu0 0.0
    %1306 = vmatprep.subr.mxu0 0.0
    %1307 = vmatpush1.xpose.msra.mxu0 0.0
    %1308 = vmatprep.subr.mxu0 0.0
    %1309 = vmatpush1.xpose.msra.mxu0 0.0
    %1310 = vmatprep.subr.mxu0 0.0
    %1311 = vmatpush1.xpose.msra.mxu0 0.0
    %1312 = vmatprep.subr.mxu0 0.0
    %1313 = vmatpush1.xpose.msra.mxu0 0.0
    %1314 = vmatprep.subr.mxu0 0.0
    %1315 = vmatpush1.xpose.msra.mxu0 0.0
    %1316 = vmatprep.subr.mxu0 0.0
    %1317 = vmatpush1.xpose.msra.mxu0 0.0
    %1318 = vmatprep.subr.mxu0 0.0
    %1319 = vmatpush1.xpose.msra.mxu0 0.0
    %1320 = vmatprep.subr.mxu0 0.0
    %1321 = vmatpush1.xpose.msra.mxu0 0.0
    %1322 = vmatprep.subr.mxu0 0.0
    %1323 = vmatpush1.xpose.msra.mxu0 0.0
    %1324 = vmatprep.subr.mxu0 0.0
    %1325 = vmatpush1.xpose.msra.mxu0 0.0
    %1326 = vmatprep.subr.mxu0 0.0
    %1327 = vmatpush1.xpose.msra.mxu0 0.0
    %1328 = vmatprep.mubr.f32.mxu0 0.0
    %1329 = vmatmul.mubr.f32.gmra.mrb[0].mxu0 %v1247
    %v1330 = vpop.f32.mrb[0].mxu0
    %v1331 = vadd.f32 %v1244, %v1330
    %v1332 = vpop.f32.mrb[0].mxu0
    %1333 = vmatprep.mubr.f32.mxu0 0.0
    %1334 = vmatmul.mubr.f32.gmra.mrb[0].mxu0 %v1250
    %v1335 = vpop.f32.mrb[0].mxu0
    %v1336 = vadd.f32 %v1244, %v1335
    %v1337 = vpop.f32.mrb[0].mxu0
    %1338 = vdwg.mxu0
    %v1339 = vadd.f32 %v155, %v1331
    %v1340 = vadd.f32 %v156, %v1336
    %v1341 = vld [vmem:[%s13] sm:$0x1]
    %v1342 = vld [vmem:[%s14] sm:$0x1]
    %v1343 = vsel %vm168, %v1339, 0.0
    %1344 = vadd.xlane.f32.xlu0 %v1343
    %v1345 = vpop.xlane.xlu0 %1344
    %v1346 = vsel %vm168, %v1340, 0.0
    %1347 = vadd.xlane.f32.xlu0 %v1346
    %v1348 = vpop.xlane.xlu0 %1347
    %v1349 = vrcp.pop 32.0
    %v1350 = vmul.f32 %v1345, %v1349
    %v1351 = vmul.f32 %v1348, %v1349
    %v1352 = vsub.f32 %v1339, %v1350
    %v1353 = vsub.f32 %v1340, %v1351
    %v1354 = vmul.f32 %v1352, %v1352
    %v1355 = vmul.f32 %v1353, %v1353
    %v1356 = vsel %vm168, %v1354, 0.0
    %1357 = vadd.xlane.f32.xlu0 %v1356
    %v1358 = vpop.xlane.xlu0 %1357
    %v1359 = vsel %vm168, %v1355, 0.0
    %1360 = vadd.xlane.f32.xlu0 %v1359
    %v1361 = vpop.xlane.xlu0 %1360
    %v1362 = vmul.f32 %v1358, %v1349
    %v1363 = vmul.f32 %v1361, %v1349
    %v1364 = vadd.f32 %v1362, 1e-05
    %v1365 = vadd.f32 %v1363, 1e-05
    %v1366 = vrsqrt.pop %v1364
    %v1367 = vrsqrt.pop %v1365
    %v1368 = vmul.f32 %v1352, %v1366
    %v1369 = vmul.f32 %v1353, %v1367
    %v1371 = vlaneseq
    %v1372 = vshrl.u32 %v1371, 7
    %v1373 = vsub.s32 0, %v1372
    %v1374 = vrot.slane %v1341, %v1373
    %v1376 = vmul.f32 %v1368, %v1374
    %v1377 = vmul.f32 %v1369, %v1374
    %v1379 = vlaneseq
    %v1380 = vshrl.u32 %v1379, 7
    %v1381 = vsub.s32 0, %v1380
    %v1382 = vrot.slane %v1342, %v1381
    %v1384 = vadd.f32 %v1376, %v1382
    %v1385 = vadd.f32 %v1377, %v1382
    %v1386 = vld [vmem:[%s9] sm:$0xff]
    %v1387 = vld [vmem:[%s9 + $0x8] sm:$0xff]
    %v1388 = vld [vmem:[%s9 + $0x10] sm:$0xff]
    %v1389 = vld [vmem:[%s9 + $0x18] sm:$0xff]
    %v1390 = vld [vmem:[%s9 + $0x20] sm:$0xff]
    %v1391 = vld [vmem:[%s9 + $0x28] sm:$0xff]
    %v1392 = vld [vmem:[%s9 + $0x30] sm:$0xff]
    %v1393 = vld [vmem:[%s9 + $0x38] sm:$0xff]
    %v1394 = vld [vmem:[#allocation7] sm:$0x1]
    %v1396 = vlaneseq
    %v1397 = vshrl.u32 %v1396, 7
    %v1398 = vsub.s32 0, %v1397
    %v1399 = vrot.slane %v1394, %v1398
    %v1402 = vsel %vm168, %v1384, 0
    %v1405 = vsel %vm168, %v1385, 0
    %v1408 = vsel %vm168, %v1386, 0
    %v1411 = vsel %vm168, %v1387, 0
    %v1414 = vsel %vm168, %v1388, 0
    %v1417 = vsel %vm168, %v1389, 0
    %v1420 = vsel %vm168, %v1390, 0
    %v1423 = vsel %vm168, %v1391, 0
    %v1426 = vsel %vm168, %v1392, 0
    %v1429 = vsel %vm168, %v1393, 0
    %1431 = vmatprep.subr.mxu0 0.0
    %1432 = vmatpush1.xpose.msra.mxu0 %v1408
    %1433 = vmatprep.subr.mxu0 0.0
    %1434 = vmatpush1.xpose.msra.mxu0 %v1411
    %1435 = vmatprep.subr.mxu0 0.0
    %1436 = vmatpush1.xpose.msra.mxu0 %v1414
    %1437 = vmatprep.subr.mxu0 0.0
    %1438 = vmatpush1.xpose.msra.mxu0 %v1417
    %1439 = vmatprep.subr.mxu0 0.0
    %1440 = vmatpush1.xpose.msra.mxu0 %v1420
    %1441 = vmatprep.subr.mxu0 0.0
    %1442 = vmatpush1.xpose.msra.mxu0 %v1423
    %1443 = vmatprep.subr.mxu0 0.0
    %1444 = vmatpush1.xpose.msra.mxu0 %v1426
    %1445 = vmatprep.subr.mxu0 0.0
    %1446 = vmatpush1.xpose.msra.mxu0 %v1429
    %1447 = vmatprep.subr.mxu0 0.0
    %1448 = vmatpush1.xpose.msra.mxu0 0.0
    %1449 = vmatprep.subr.mxu0 0.0
    %1450 = vmatpush1.xpose.msra.mxu0 0.0
    %1451 = vmatprep.subr.mxu0 0.0
    %1452 = vmatpush1.xpose.msra.mxu0 0.0
    %1453 = vmatprep.subr.mxu0 0.0
    %1454 = vmatpush1.xpose.msra.mxu0 0.0
    %1455 = vmatprep.subr.mxu0 0.0
    %1456 = vmatpush1.xpose.msra.mxu0 0.0
    %1457 = vmatprep.subr.mxu0 0.0
    %1458 = vmatpush1.xpose.msra.mxu0 0.0
    %1459 = vmatprep.subr.mxu0 0.0
    %1460 = vmatpush1.xpose.msra.mxu0 0.0
    %1461 = vmatprep.subr.mxu0 0.0
    %1462 = vmatpush1.xpose.msra.mxu0 0.0
    %1463 = vmatprep.subr.mxu0 0.0
    %1464 = vmatpush1.xpose.msra.mxu0 0.0
    %1465 = vmatprep.subr.mxu0 0.0
    %1466 = vmatpush1.xpose.msra.mxu0 0.0
    %1467 = vmatprep.subr.mxu0 0.0
    %1468 = vmatpush1.xpose.msra.mxu0 0.0
    %1469 = vmatprep.subr.mxu0 0.0
    %1470 = vmatpush1.xpose.msra.mxu0 0.0
    %1471 = vmatprep.subr.mxu0 0.0
    %1472 = vmatpush1.xpose.msra.mxu0 0.0
    %1473 = vmatprep.subr.mxu0 0.0
    %1474 = vmatpush1.xpose.msra.mxu0 0.0
    %1475 = vmatprep.subr.mxu0 0.0
    %1476 = vmatpush1.xpose.msra.mxu0 0.0
    %1477 = vmatprep.subr.mxu0 0.0
    %1478 = vmatpush1.xpose.msra.mxu0 0.0
    %1479 = vmatprep.subr.mxu0 0.0
    %1480 = vmatpush1.xpose.msra.mxu0 0.0
    %1481 = vmatprep.subr.mxu0 0.0
    %1482 = vmatpush1.xpose.msra.mxu0 0.0
    %1483 = vmatprep.subr.mxu0 0.0
    %1484 = vmatpush1.xpose.msra.mxu0 0.0
    %1485 = vmatprep.subr.mxu0 0.0
    %1486 = vmatpush1.xpose.msra.mxu0 0.0
    %1487 = vmatprep.subr.mxu0 0.0
    %1488 = vmatpush1.xpose.msra.mxu0 0.0
    %1489 = vmatprep.subr.mxu0 0.0
    %1490 = vmatpush1.xpose.msra.mxu0 0.0
    %1491 = vmatprep.subr.mxu0 0.0
    %1492 = vmatpush1.xpose.msra.mxu0 0.0
    %1493 = vmatprep.subr.mxu0 0.0
    %1494 = vmatpush1.xpose.msra.mxu0 0.0
    %1495 = vmatprep.mubr.f32.mxu0 0.0
    %1496 = vmatmul.mubr.f32.gmra.mrb[0].mxu0 %v1402
    %v1497 = vpop.f32.mrb[0].mxu0
    %v1498 = vadd.f32 %v1399, %v1497
    %v1499 = vpop.f32.mrb[0].mxu0
    %1500 = vmatprep.mubr.f32.mxu0 0.0
    %1501 = vmatmul.mubr.f32.gmra.mrb[0].mxu0 %v1405
    %v1502 = vpop.f32.mrb[0].mxu0
    %v1503 = vadd.f32 %v1399, %v1502
    %v1504 = vpop.f32.mrb[0].mxu0
    %1505 = vdwg.mxu0
    %v1506 = vmax.f32 %v1498, 0.0
    %v1507 = vmax.f32 %v1503, 0.0
    %v1508 = vld [vmem:[#allocation8] sm:$0xff]
    %v1509 = vld [vmem:[#allocation8 + $0x8] sm:$0xff]
    %v1510 = vld [vmem:[#allocation8 + $0x10] sm:$0xff]
    %v1511 = vld [vmem:[#allocation8 + $0x18] sm:$0xff]
    %v1512 = vld [vmem:[%s12] sm:$0x1]
    %v1514 = vlaneseq
    %v1515 = vshrl.u32 %v1514, 7
    %v1516 = vsub.s32 0, %v1515
    %v1517 = vrot.slane %v1512, %v1516
    %vm1519 = vcmask 523264
    %v1521 = vsel %vm1519, %v1506, 0
    %v1524 = vsel %vm1519, %v1507, 0
    %v1527 = vsel %vm1519, %v1508, 0
    %v1530 = vsel %vm1519, %v1509, 0
    %v1533 = vsel %vm1519, %v1510, 0
    %v1536 = vsel %vm1519, %v1511, 0
    %1538 = vmatprep.subr.mxu0 0.0
    %1539 = vmatpush1.xpose.msra.mxu0 %v1527
    %1540 = vmatprep.subr.mxu0 0.0
    %1541 = vmatpush1.xpose.msra.mxu0 %v1530
    %1542 = vmatprep.subr.mxu0 0.0
    %1543 = vmatpush1.xpose.msra.mxu0 %v1533
    %1544 = vmatprep.subr.mxu0 0.0
    %1545 = vmatpush1.xpose.msra.mxu0 %v1536
    %1546 = vmatprep.subr.mxu0 0.0
    %1547 = vmatpush1.xpose.msra.mxu0 0.0
    %1548 = vmatprep.subr.mxu0 0.0
    %1549 = vmatpush1.xpose.msra.mxu0 0.0
    %1550 = vmatprep.subr.mxu0 0.0
    %1551 = vmatpush1.xpose.msra.mxu0 0.0
    %1552 = vmatprep.subr.mxu0 0.0
    %1553 = vmatpush1.xpose.msra.mxu0 0.0
    %1554 = vmatprep.subr.mxu0 0.0
    %1555 = vmatpush1.xpose.msra.mxu0 0.0
    %1556 = vmatprep.subr.mxu0 0.0
    %1557 = vmatpush1.xpose.msra.mxu0 0.0
    %1558 = vmatprep.subr.mxu0 0.0
    %1559 = vmatpush1.xpose.msra.mxu0 0.0
    %1560 = vmatprep.subr.mxu0 0.0
    %1561 = vmatpush1.xpose.msra.mxu0 0.0
    %1562 = vmatprep.subr.mxu0 0.0
    %1563 = vmatpush1.xpose.msra.mxu0 0.0
    %1564 = vmatprep.subr.mxu0 0.0
    %1565 = vmatpush1.xpose.msra.mxu0 0.0
    %1566 = vmatprep.subr.mxu0 0.0
    %1567 = vmatpush1.xpose.msra.mxu0 0.0
    %1568 = vmatprep.subr.mxu0 0.0
    %1569 = vmatpush1.xpose.msra.mxu0 0.0
    %1570 = vmatprep.subr.mxu0 0.0
    %1571 = vmatpush1.xpose.msra.mxu0 0.0
    %1572 = vmatprep.subr.mxu0 0.0
    %1573 = vmatpush1.xpose.msra.mxu0 0.0
    %1574 = vmatprep.subr.mxu0 0.0
    %1575 = vmatpush1.xpose.msra.mxu0 0.0
    %1576 = vmatprep.subr.mxu0 0.0
    %1577 = vmatpush1.xpose.msra.mxu0 0.0
    %1578 = vmatprep.subr.mxu0 0.0
    %1579 = vmatpush1.xpose.msra.mxu0 0.0
    %1580 = vmatprep.subr.mxu0 0.0
    %1581 = vmatpush1.xpose.msra.mxu0 0.0
    %1582 = vmatprep.subr.mxu0 0.0
    %1583 = vmatpush1.xpose.msra.mxu0 0.0
    %1584 = vmatprep.subr.mxu0 0.0
    %1585 = vmatpush1.xpose.msra.mxu0 0.0
    %1586 = vmatprep.subr.mxu0 0.0
    %1587 = vmatpush1.xpose.msra.mxu0 0.0
    %1588 = vmatprep.subr.mxu0 0.0
    %1589 = vmatpush1.xpose.msra.mxu0 0.0
    %1590 = vmatprep.subr.mxu0 0.0
    %1591 = vmatpush1.xpose.msra.mxu0 0.0
    %1592 = vmatprep.subr.mxu0 0.0
    %1593 = vmatpush1.xpose.msra.mxu0 0.0
    %1594 = vmatprep.subr.mxu0 0.0
    %1595 = vmatpush1.xpose.msra.mxu0 0.0
    %1596 = vmatprep.subr.mxu0 0.0
    %1597 = vmatpush1.xpose.msra.mxu0 0.0
    %1598 = vmatprep.subr.mxu0 0.0
    %1599 = vmatpush1.xpose.msra.mxu0 0.0
    %1600 = vmatprep.subr.mxu0 0.0
    %1601 = vmatpush1.xpose.msra.mxu0 0.0
    %1602 = vmatprep.mubr.f32.mxu0 0.0
    %1603 = vmatmul.mubr.f32.gmra.mrb[0].mxu0 %v1521
    %v1604 = vpop.f32.mrb[0].mxu0
    %v1605 = vadd.f32 %v1517, %v1604
    %v1606 = vpop.f32.mrb[0].mxu0
    %1607 = vmatprep.mubr.f32.mxu0 0.0
    %1608 = vmatmul.mubr.f32.gmra.mrb[0].mxu0 %v1524
    %v1609 = vpop.f32.mrb[0].mxu0
    %v1610 = vadd.f32 %v1517, %v1609
    %v1611 = vpop.f32.mrb[0].mxu0
    %1612 = vdwg.mxu0
    %v1613 = vadd.f32 %v1384, %v1605
    %v1614 = vadd.f32 %v1385, %v1610
    %v1615 = vld [vmem:[%s15] sm:$0x1]
    %v1616 = vld [vmem:[%s16] sm:$0x1]
    %v1617 = vsel %vm168, %v1613, 0.0
    %1618 = vadd.xlane.f32.xlu0 %v1617
    %v1619 = vpop.xlane.xlu0 %1618
    %v1620 = vsel %vm168, %v1614, 0.0
    %1621 = vadd.xlane.f32.xlu0 %v1620
    %v1622 = vpop.xlane.xlu0 %1621
    %v1623 = vmul.f32 %v1619, %v1349
    %v1624 = vmul.f32 %v1622, %v1349
    %v1625 = vsub.f32 %v1613, %v1623
    %v1626 = vsub.f32 %v1614, %v1624
    %v1627 = vmul.f32 %v1625, %v1625
    %v1628 = vmul.f32 %v1626, %v1626
    %v1629 = vsel %vm168, %v1627, 0.0
    %1630 = vadd.xlane.f32.xlu0 %v1629
    %v1631 = vpop.xlane.xlu0 %1630
    %v1632 = vsel %vm168, %v1628, 0.0
    %1633 = vadd.xlane.f32.xlu0 %v1632
    %v1634 = vpop.xlane.xlu0 %1633
    %v1635 = vmul.f32 %v1631, %v1349
    %v1636 = vmul.f32 %v1634, %v1349
    %v1637 = vadd.f32 %v1635, 1e-05
    %v1638 = vadd.f32 %v1636, 1e-05
    %v1639 = vrsqrt.pop %v1637
    %v1640 = vrsqrt.pop %v1638
    %v1641 = vmul.f32 %v1625, %v1639
    %v1642 = vmul.f32 %v1626, %v1640
    %v1644 = vlaneseq
    %v1645 = vshrl.u32 %v1644, 7
    %v1646 = vsub.s32 0, %v1645
    %v1647 = vrot.slane %v1615, %v1646
    %v1649 = vmul.f32 %v1641, %v1647
    %v1650 = vmul.f32 %v1642, %v1647
    %v1652 = vlaneseq
    %v1653 = vshrl.u32 %v1652, 7
    %v1654 = vsub.s32 0, %v1653
    %v1655 = vrot.slane %v1616, %v1654
    %v1657 = vadd.f32 %v1649, %v1655
    %v1658 = vadd.f32 %v1650, %v1655
    %s1659 = scalar_lea.vmem %s1, 32
    %v1660 = vld [vmem:[%s1659] sm:$0xff]
    %v1661 = vld [vmem:[%s1659 + $0x8] sm:$0xff]
    %v1662 = vld [vmem:[%s1659 + $0x10] sm:$0xff]
    %v1663 = vld [vmem:[%s1659 + $0x18] sm:$0xff]
    %s1664 = scalar_lea.vmem %s2, 1
    %v1665 = vld [vmem:[%s1664] sm:$0x1]
    %v1667 = vlaneseq
    %v1668 = vshrl.u32 %v1667, 7
    %v1669 = vsub.s32 0, %v1668
    %v1670 = vrot.slane %v1665, %v1669
    %v1673 = vsel %vm168, %v1657, 0
    %v1676 = vsel %vm168, %v1658, 0
    %v1679 = vsel %vm168, %v1660, 0
    %v1682 = vsel %vm168, %v1661, 0
    %v1685 = vsel %vm168, %v1662, 0
    %v1688 = vsel %vm168, %v1663, 0
    %1690 = vmatprep.subr.mxu0 0.0
    %1691 = vmatpush1.xpose.msra.mxu0 %v1679
    %1692 = vmatprep.subr.mxu0 0.0
    %1693 = vmatpush1.xpose.msra.mxu0 %v1682
    %1694 = vmatprep.subr.mxu0 0.0
    %1695 = vmatpush1.xpose.msra.mxu0 %v1685
    %1696 = vmatprep.subr.mxu0 0.0
    %1697 = vmatpush1.xpose.msra.mxu0 %v1688
    %1698 = vmatprep.subr.mxu0 0.0
    %1699 = vmatpush1.xpose.msra.mxu0 0.0
    %1700 = vmatprep.subr.mxu0 0.0
    %1701 = vmatpush1.xpose.msra.mxu0 0.0
    %1702 = vmatprep.subr.mxu0 0.0
    %1703 = vmatpush1.xpose.msra.mxu0 0.0
    %1704 = vmatprep.subr.mxu0 0.0
    %1705 = vmatpush1.xpose.msra.mxu0 0.0
    %1706 = vmatprep.subr.mxu0 0.0
    %1707 = vmatpush1.xpose.msra.mxu0 0.0
    %1708 = vmatprep.subr.mxu0 0.0
    %1709 = vmatpush1.xpose.msra.mxu0 0.0
    %1710 = vmatprep.subr.mxu0 0.0
    %1711 = vmatpush1.xpose.msra.mxu0 0.0
    %1712 = vmatprep.subr.mxu0 0.0
    %1713 = vmatpush1.xpose.msra.mxu0 0.0
    %1714 = vmatprep.subr.mxu0 0.0
    %1715 = vmatpush1.xpose.msra.mxu0 0.0
    %1716 = vmatprep.subr.mxu0 0.0
    %1717 = vmatpush1.xpose.msra.mxu0 0.0
    %1718 = vmatprep.subr.mxu0 0.0
    %1719 = vmatpush1.xpose.msra.mxu0 0.0
    %1720 = vmatprep.subr.mxu0 0.0
    %1721 = vmatpush1.xpose.msra.mxu0 0.0
    %1722 = vmatprep.subr.mxu0 0.0
    %1723 = vmatpush1.xpose.msra.mxu0 0.0
    %1724 = vmatprep.subr.mxu0 0.0
    %1725 = vmatpush1.xpose.msra.mxu0 0.0
    %1726 = vmatprep.subr.mxu0 0.0
    %1727 = vmatpush1.xpose.msra.mxu0 0.0
    %1728 = vmatprep.subr.mxu0 0.0
    %1729 = vmatpush1.xpose.msra.mxu0 0.0
    %1730 = vmatprep.subr.mxu0 0.0
    %1731 = vmatpush1.xpose.msra.mxu0 0.0
    %1732 = vmatprep.subr.mxu0 0.0
    %1733 = vmatpush1.xpose.msra.mxu0 0.0
    %1734 = vmatprep.subr.mxu0 0.0
    %1735 = vmatpush1.xpose.msra.mxu0 0.0
    %1736 = vmatprep.subr.mxu0 0.0
    %1737 = vmatpush1.xpose.msra.mxu0 0.0
    %1738 = vmatprep.subr.mxu0 0.0
    %1739 = vmatpush1.xpose.msra.mxu0 0.0
    %1740 = vmatprep.subr.mxu0 0.0
    %1741 = vmatpush1.xpose.msra.mxu0 0.0
    %1742 = vmatprep.subr.mxu0 0.0
    %1743 = vmatpush1.xpose.msra.mxu0 0.0
    %1744 = vmatprep.subr.mxu0 0.0
    %1745 = vmatpush1.xpose.msra.mxu0 0.0
    %1746 = vmatprep.subr.mxu0 0.0
    %1747 = vmatpush1.xpose.msra.mxu0 0.0
    %1748 = vmatprep.subr.mxu0 0.0
    %1749 = vmatpush1.xpose.msra.mxu0 0.0
    %1750 = vmatprep.subr.mxu0 0.0
    %1751 = vmatpush1.xpose.msra.mxu0 0.0
    %1752 = vmatprep.subr.mxu0 0.0
    %1753 = vmatpush1.xpose.msra.mxu0 0.0
    %1754 = vmatprep.mubr.f32.mxu0 0.0
    %1755 = vmatmul.mubr.f32.gmra.mrb[0].mxu0 %v1673
    %v1756 = vpop.f32.mrb[0].mxu0
    %v1757 = vadd.f32 %v1670, %v1756
    %v1758 = vpop.f32.mrb[0].mxu0
    %1759 = vmatprep.mubr.f32.mxu0 0.0
    %1760 = vmatmul.mubr.f32.gmra.mrb[0].mxu0 %v1676
    %v1761 = vpop.f32.mrb[0].mxu0
    %v1762 = vadd.f32 %v1670, %v1761
    %v1763 = vpop.f32.mrb[0].mxu0
    %1764 = vdwg.mxu0
    %v1765 = vmul.f32 %v1757, 0.35355338
    %v1766 = vmul.f32 %v1762, 0.35355338
    %s1767 = scalar_lea.vmem %s3, 32
    %v1768 = vld [vmem:[%s1767] sm:$0xff]
    %v1769 = vld [vmem:[%s1767 + $0x8] sm:$0xff]
    %v1770 = vld [vmem:[%s1767 + $0x10] sm:$0xff]
    %v1771 = vld [vmem:[%s1767 + $0x18] sm:$0xff]
    %s1772 = scalar_lea.vmem %s4, 1
    %v1773 = vld [vmem:[%s1772] sm:$0x1]
    %v1775 = vlaneseq
    %v1776 = vshrl.u32 %v1775, 7
    %v1777 = vsub.s32 0, %v1776
    %v1778 = vrot.slane %v1773, %v1777
    %v1781 = vsel %vm168, %v1768, 0
    %v1784 = vsel %vm168, %v1769, 0
    %v1787 = vsel %vm168, %v1770, 0
    %v1790 = vsel %vm168, %v1771, 0
    %1792 = vmatprep.subr.mxu0 0.0
    %1793 = vmatpush1.xpose.msra.mxu0 %v1781
    %1794 = vmatprep.subr.mxu0 0.0
    %1795 = vmatpush1.xpose.msra.mxu0 %v1784
    %1796 = vmatprep.subr.mxu0 0.0
    %1797 = vmatpush1.xpose.msra.mxu0 %v1787
    %1798 = vmatprep.subr.mxu0 0.0
    %1799 = vmatpush1.xpose.msra.mxu0 %v1790
    %1800 = vmatprep.subr.mxu0 0.0
    %1801 = vmatpush1.xpose.msra.mxu0 0.0
    %1802 = vmatprep.subr.mxu0 0.0
    %1803 = vmatpush1.xpose.msra.mxu0 0.0
    %1804 = vmatprep.subr.mxu0 0.0
    %1805 = vmatpush1.xpose.msra.mxu0 0.0
    %1806 = vmatprep.subr.mxu0 0.0
    %1807 = vmatpush1.xpose.msra.mxu0 0.0
    %1808 = vmatprep.subr.mxu0 0.0
    %1809 = vmatpush1.xpose.msra.mxu0 0.0
    %1810 = vmatprep.subr.mxu0 0.0
    %1811 = vmatpush1.xpose.msra.mxu0 0.0
    %1812 = vmatprep.subr.mxu0 0.0
    %1813 = vmatpush1.xpose.msra.mxu0 0.0
    %1814 = vmatprep.subr.mxu0 0.0
    %1815 = vmatpush1.xpose.msra.mxu0 0.0
    %1816 = vmatprep.subr.mxu0 0.0
    %1817 = vmatpush1.xpose.msra.mxu0 0.0
    %1818 = vmatprep.subr.mxu0 0.0
    %1819 = vmatpush1.xpose.msra.mxu0 0.0
    %1820 = vmatprep.subr.mxu0 0.0
    %1821 = vmatpush1.xpose.msra.mxu0 0.0
    %1822 = vmatprep.subr.mxu0 0.0
    %1823 = vmatpush1.xpose.msra.mxu0 0.0
    %1824 = vmatprep.subr.mxu0 0.0
    %1825 = vmatpush1.xpose.msra.mxu0 0.0
    %1826 = vmatprep.subr.mxu0 0.0
    %1827 = vmatpush1.xpose.msra.mxu0 0.0
    %1828 = vmatprep.subr.mxu0 0.0
    %1829 = vmatpush1.xpose.msra.mxu0 0.0
    %1830 = vmatprep.subr.mxu0 0.0
    %1831 = vmatpush1.xpose.msra.mxu0 0.0
    %1832 = vmatprep.subr.mxu0 0.0
    %1833 = vmatpush1.xpose.msra.mxu0 0.0
    %1834 = vmatprep.subr.mxu0 0.0
    %1835 = vmatpush1.xpose.msra.mxu0 0.0
    %1836 = vmatprep.subr.mxu0 0.0
    %1837 = vmatpush1.xpose.msra.mxu0 0.0
    %1838 = vmatprep.subr.mxu0 0.0
    %1839 = vmatpush1.xpose.msra.mxu0 0.0
    %1840 = vmatprep.subr.mxu0 0.0
    %1841 = vmatpush1.xpose.msra.mxu0 0.0
    %1842 = vmatprep.subr.mxu0 0.0
    %1843 = vmatpush1.xpose.msra.mxu0 0.0
    %1844 = vmatprep.subr.mxu0 0.0
    %1845 = vmatpush1.xpose.msra.mxu0 0.0
    %1846 = vmatprep.subr.mxu0 0.0
    %1847 = vmatpush1.xpose.msra.mxu0 0.0
    %1848 = vmatprep.subr.mxu0 0.0
    %1849 = vmatpush1.xpose.msra.mxu0 0.0
    %1850 = vmatprep.subr.mxu0 0.0
    %1851 = vmatpush1.xpose.msra.mxu0 0.0
    %1852 = vmatprep.subr.mxu0 0.0
    %1853 = vmatpush1.xpose.msra.mxu0 0.0
    %1854 = vmatprep.subr.mxu0 0.0
    %1855 = vmatpush1.xpose.msra.mxu0 0.0
    %1856 = vmatprep.mubr.f32.mxu0 0.0
    %1857 = vmatmul.mubr.f32.gmra.mrb[0].mxu0 %v1673
    %v1858 = vpop.f32.mrb[0].mxu0
    %v1859 = vadd.f32 %v1778, %v1858
    %v1860 = vpop.f32.mrb[0].mxu0
    %1861 = vmatprep.mubr.f32.mxu0 0.0
    %1862 = vmatmul.mubr.f32.gmra.mrb[0].mxu0 %v1676
    %v1863 = vpop.f32.mrb[0].mxu0
    %v1864 = vadd.f32 %v1778, %v1863
    %v1865 = vpop.f32.mrb[0].mxu0
    %1866 = vdwg.mxu0
    %s1867 = scalar_lea.vmem %s5, 32
    %v1868 = vld [vmem:[%s1867] sm:$0xff]
    %v1869 = vld [vmem:[%s1867 + $0x8] sm:$0xff]
    %v1870 = vld [vmem:[%s1867 + $0x10] sm:$0xff]
    %v1871 = vld [vmem:[%s1867 + $0x18] sm:$0xff]
    %s1872 = scalar_lea.vmem %s6, 1
    %v1873 = vld [vmem:[%s1872] sm:$0x1]
    %v1875 = vlaneseq
    %v1876 = vshrl.u32 %v1875, 7
    %v1877 = vsub.s32 0, %v1876
    %v1878 = vrot.slane %v1873, %v1877
    %v1881 = vsel %vm168, %v1868, 0
    %v1884 = vsel %vm168, %v1869, 0
    %v1887 = vsel %vm168, %v1870, 0
    %v1890 = vsel %vm168, %v1871, 0
    %1892 = vmatprep.subr.mxu0 0.0
    %1893 = vmatpush1.xpose.msra.mxu0 %v1881
    %1894 = vmatprep.subr.mxu0 0.0
    %1895 = vmatpush1.xpose.msra.mxu0 %v1884
    %1896 = vmatprep.subr.mxu0 0.0
    %1897 = vmatpush1.xpose.msra.mxu0 %v1887
    %1898 = vmatprep.subr.mxu0 0.0
    %1899 = vmatpush1.xpose.msra.mxu0 %v1890
    %1900 = vmatprep.subr.mxu0 0.0
    %1901 = vmatpush1.xpose.msra.mxu0 0.0
    %1902 = vmatprep.subr.mxu0 0.0
    %1903 = vmatpush1.xpose.msra.mxu0 0.0
    %1904 = vmatprep.subr.mxu0 0.0
    %1905 = vmatpush1.xpose.msra.mxu0 0.0
    %1906 = vmatprep.subr.mxu0 0.0
    %1907 = vmatpush1.xpose.msra.mxu0 0.0
    %1908 = vmatprep.subr.mxu0 0.0
    %1909 = vmatpush1.xpose.msra.mxu0 0.0
    %1910 = vmatprep.subr.mxu0 0.0
    %1911 = vmatpush1.xpose.msra.mxu0 0.0
    %1912 = vmatprep.subr.mxu0 0.0
    %1913 = vmatpush1.xpose.msra.mxu0 0.0
    %1914 = vmatprep.subr.mxu0 0.0
    %1915 = vmatpush1.xpose.msra.mxu0 0.0
    %1916 = vmatprep.subr.mxu0 0.0
    %1917 = vmatpush1.xpose.msra.mxu0 0.0
    %1918 = vmatprep.subr.mxu0 0.0
    %1919 = vmatpush1.xpose.msra.mxu0 0.0
    %1920 = vmatprep.subr.mxu0 0.0
    %1921 = vmatpush1.xpose.msra.mxu0 0.0
    %1922 = vmatprep.subr.mxu0 0.0
    %1923 = vmatpush1.xpose.msra.mxu0 0.0
    %1924 = vmatprep.subr.mxu0 0.0
    %1925 = vmatpush1.xpose.msra.mxu0 0.0
    %1926 = vmatprep.subr.mxu0 0.0
    %1927 = vmatpush1.xpose.msra.mxu0 0.0
    %1928 = vmatprep.subr.mxu0 0.0
    %1929 = vmatpush1.xpose.msra.mxu0 0.0
    %1930 = vmatprep.subr.mxu0 0.0
    %1931 = vmatpush1.xpose.msra.mxu0 0.0
    %1932 = vmatprep.subr.mxu0 0.0
    %1933 = vmatpush1.xpose.msra.mxu0 0.0
    %1934 = vmatprep.subr.mxu0 0.0
    %1935 = vmatpush1.xpose.msra.mxu0 0.0
    %1936 = vmatprep.subr.mxu0 0.0
    %1937 = vmatpush1.xpose.msra.mxu0 0.0
    %1938 = vmatprep.subr.mxu0 0.0
    %1939 = vmatpush1.xpose.msra.mxu0 0.0
    %1940 = vmatprep.subr.mxu0 0.0
    %1941 = vmatpush1.xpose.msra.mxu0 0.0
    %1942 = vmatprep.subr.mxu0 0.0
    %1943 = vmatpush1.xpose.msra.mxu0 0.0
    %1944 = vmatprep.subr.mxu0 0.0
    %1945 = vmatpush1.xpose.msra.mxu0 0.0
    %1946 = vmatprep.subr.mxu0 0.0
    %1947 = vmatpush1.xpose.msra.mxu0 0.0
    %1948 = vmatprep.subr.mxu0 0.0
    %1949 = vmatpush1.xpose.msra.mxu0 0.0
    %1950 = vmatprep.subr.mxu0 0.0
    %1951 = vmatpush1.xpose.msra.mxu0 0.0
    %1952 = vmatprep.subr.mxu0 0.0
    %1953 = vmatpush1.xpose.msra.mxu0 0.0
    %1954 = vmatprep.subr.mxu0 0.0
    %1955 = vmatpush1.xpose.msra.mxu0 0.0
    %1956 = vmatprep.mubr.f32.mxu0 0.0
    %1957 = vmatmul.mubr.f32.gmra.mrb[0].mxu0 %v1673
    %v1958 = vpop.f32.mrb[0].mxu0
    %v1959 = vadd.f32 %v1878, %v1958
    %v1960 = vpop.f32.mrb[0].mxu0
    %1961 = vmatprep.mubr.f32.mxu0 0.0
    %1962 = vmatmul.mubr.f32.gmra.mrb[0].mxu0 %v1676
    %v1963 = vpop.f32.mrb[0].mxu0
    %v1964 = vadd.f32 %v1878, %v1963
    %v1965 = vpop.f32.mrb[0].mxu0
    %1966 = vdwg.mxu0
    %v1967 = vmul.f32 %v1765, %v118
    %v1968 = vmul.f32 %v1766, %v118
    %v1970 = vsel %vm168, %v1967, 0
    %v1973 = vsel %vm168, %v1968, 0
    %v1976 = vsel %vm168, %v1859, 0
    %v1979 = vsel %vm168, %v1864, 0
    %1981 = vmatprep.subr.mxu0 0.0
    %1982 = vmatpush1.xpose.msra.mxu0 %v1976
    %1983 = vmatprep.subr.mxu0 0.0
    %1984 = vmatpush1.xpose.msra.mxu0 %v1979
    %1985 = vmatprep.subr.mxu0 0.0
    %1986 = vmatpush1.xpose.msra.mxu0 0.0
    %1987 = vmatprep.subr.mxu0 0.0
    %1988 = vmatpush1.xpose.msra.mxu0 0.0
    %1989 = vmatprep.subr.mxu0 0.0
    %1990 = vmatpush1.xpose.msra.mxu0 0.0
    %1991 = vmatprep.subr.mxu0 0.0
    %1992 = vmatpush1.xpose.msra.mxu0 0.0
    %1993 = vmatprep.subr.mxu0 0.0
    %1994 = vmatpush1.xpose.msra.mxu0 0.0
    %1995 = vmatprep.subr.mxu0 0.0
    %1996 = vmatpush1.xpose.msra.mxu0 0.0
    %1997 = vmatprep.subr.mxu0 0.0
    %1998 = vmatpush1.xpose.msra.mxu0 0.0
    %1999 = vmatprep.subr.mxu0 0.0
    %2000 = vmatpush1.xpose.msra.mxu0 0.0
    %2001 = vmatprep.subr.mxu0 0.0
    %2002 = vmatpush1.xpose.msra.mxu0 0.0
    %2003 = vmatprep.subr.mxu0 0.0
    %2004 = vmatpush1.xpose.msra.mxu0 0.0
    %2005 = vmatprep.subr.mxu0 0.0
    %2006 = vmatpush1.xpose.msra.mxu0 0.0
    %2007 = vmatprep.subr.mxu0 0.0
    %2008 = vmatpush1.xpose.msra.mxu0 0.0
    %2009 = vmatprep.subr.mxu0 0.0
    %2010 = vmatpush1.xpose.msra.mxu0 0.0
    %2011 = vmatprep.subr.mxu0 0.0
    %2012 = vmatpush1.xpose.msra.mxu0 0.0
    %2013 = vmatprep.subr.mxu0 0.0
    %2014 = vmatpush1.xpose.msra.mxu0 0.0
    %2015 = vmatprep.subr.mxu0 0.0
    %2016 = vmatpush1.xpose.msra.mxu0 0.0
    %2017 = vmatprep.subr.mxu0 0.0
    %2018 = vmatpush1.xpose.msra.mxu0 0.0
    %2019 = vmatprep.subr.mxu0 0.0
    %2020 = vmatpush1.xpose.msra.mxu0 0.0
    %2021 = vmatprep.subr.mxu0 0.0
    %2022 = vmatpush1.xpose.msra.mxu0 0.0
    %2023 = vmatprep.subr.mxu0 0.0
    %2024 = vmatpush1.xpose.msra.mxu0 0.0
    %2025 = vmatprep.subr.mxu0 0.0
    %2026 = vmatpush1.xpose.msra.mxu0 0.0
    %2027 = vmatprep.subr.mxu0 0.0
    %2028 = vmatpush1.xpose.msra.mxu0 0.0
    %2029 = vmatprep.subr.mxu0 0.0
    %2030 = vmatpush1.xpose.msra.mxu0 0.0
    %2031 = vmatprep.subr.mxu0 0.0
    %2032 = vmatpush1.xpose.msra.mxu0 0.0
    %2033 = vmatprep.subr.mxu0 0.0
    %2034 = vmatpush1.xpose.msra.mxu0 0.0
    %2035 = vmatprep.subr.mxu0 0.0
    %2036 = vmatpush1.xpose.msra.mxu0 0.0
    %2037 = vmatprep.subr.mxu0 0.0
    %2038 = vmatpush1.xpose.msra.mxu0 0.0
    %2039 = vmatprep.subr.mxu0 0.0
    %2040 = vmatpush1.xpose.msra.mxu0 0.0
    %2041 = vmatprep.subr.mxu0 0.0
    %2042 = vmatpush1.xpose.msra.mxu0 0.0
    %2043 = vmatprep.subr.mxu0 0.0
    %2044 = vmatpush1.xpose.msra.mxu0 0.0
    %2045 = vmatprep.mubr.f32.mxu0 0.0
    %2046 = vmatmul.mubr.f32.gmra.mrb[0].mxu0 %v1970
    %v2047 = vpop.f32.mrb[0].mxu0
    %v2048 = vadd.f32 0.0, %v2047
    %v2049 = vpop.f32.mrb[0].mxu0
    %2050 = vmatprep.mubr.f32.mxu0 0.0
    %2051 = vmatmul.mubr.f32.gmra.mrb[0].mxu0 %v1973
    %v2052 = vpop.f32.mrb[0].mxu0
    %v2053 = vadd.f32 0.0, %v2052
    %v2054 = vpop.f32.mrb[0].mxu0
    %2055 = vdwg.mxu0
    %v2056 = vsel %vm153, %v2048, -1e+30
    %v2057 = vsel %vm154, %v2053, -1e+30
    %v2058 = vsel %vm551, %v2056, -inf
    %2059 = vmax.xlane.f32.xlu0 %v2058
    %v2060 = vpop.xlane.xlu0 %2059
    %v2061 = vsel %vm551, %v2057, -inf
    %2062 = vmax.xlane.f32.xlu0 %v2061
    %v2063 = vpop.xlane.xlu0 %2062
    %v2064 = vsub.f32 %v2056, %v2060
    %v2065 = vsub.f32 %v2057, %v2063
    %v2066 = vmul.f32 %v2064, 1.442695
    %v2067 = vpow.pop %v2066
    %v2068 = vmul.f32 %v2065, 1.442695
    %v2069 = vpow.pop %v2068
    %v2070 = vsel %vm551, %v2067, 0.0
    %2071 = vadd.xlane.f32.xlu0 %v2070
    %v2072 = vpop.xlane.xlu0 %2071
    %v2073 = vsel %vm551, %v2069, 0.0
    %2074 = vadd.xlane.f32.xlu0 %v2073
    %v2075 = vpop.xlane.xlu0 %2074
    %v2076 = vrcp.pop %v2072
    %v2077 = vrcp.pop %v2075
    %v2078 = vmul.f32 %v2067, %v2076
    %v2079 = vmul.f32 %v2069, %v2077
    %v2081 = vsel %vm551, %v2078, 0
    %v2084 = vsel %vm551, %v2079, 0
    %2086 = vmatprep.subr.mxu0 0.0
    %2087 = vmatpush1.msra.mxu0 %v1959
    %2088 = vmatprep.subr.mxu0 0.0
    %2089 = vmatpush1.msra.mxu0 %v1964
    %2090 = vmatprep.subr.mxu0 0.0
    %2091 = vmatpush1.msra.mxu0 0.0
    %2092 = vmatprep.subr.mxu0 0.0
    %2093 = vmatpush1.msra.mxu0 0.0
    %2094 = vmatprep.subr.mxu0 0.0
    %2095 = vmatpush1.msra.mxu0 0.0
    %2096 = vmatprep.subr.mxu0 0.0
    %2097 = vmatpush1.msra.mxu0 0.0
    %2098 = vmatprep.subr.mxu0 0.0
    %2099 = vmatpush1.msra.mxu0 0.0
    %2100 = vmatprep.subr.mxu0 0.0
    %2101 = vmatpush1.msra.mxu0 0.0
    %2102 = vmatprep.subr.mxu0 0.0
    %2103 = vmatpush1.msra.mxu0 0.0
    %2104 = vmatprep.subr.mxu0 0.0
    %2105 = vmatpush1.msra.mxu0 0.0
    %2106 = vmatprep.subr.mxu0 0.0
    %2107 = vmatpush1.msra.mxu0 0.0
    %2108 = vmatprep.subr.mxu0 0.0
    %2109 = vmatpush1.msra.mxu0 0.0
    %2110 = vmatprep.subr.mxu0 0.0
    %2111 = vmatpush1.msra.mxu0 0.0
    %2112 = vmatprep.subr.mxu0 0.0
    %2113 = vmatpush1.msra.mxu0 0.0
    %2114 = vmatprep.subr.mxu0 0.0
    %2115 = vmatpush1.msra.mxu0 0.0
    %2116 = vmatprep.subr.mxu0 0.0
    %2117 = vmatpush1.msra.mxu0 0.0
    %2118 = vmatprep.subr.mxu0 0.0
    %2119 = vmatpush1.msra.mxu0 0.0
    %2120 = vmatprep.subr.mxu0 0.0
    %2121 = vmatpush1.msra.mxu0 0.0
    %2122 = vmatprep.subr.mxu0 0.0
    %2123 = vmatpush1.msra.mxu0 0.0
    %2124 = vmatprep.subr.mxu0 0.0
    %2125 = vmatpush1.msra.mxu0 0.0
    %2126 = vmatprep.subr.mxu0 0.0
    %2127 = vmatpush1.msra.mxu0 0.0
    %2128 = vmatprep.subr.mxu0 0.0
    %2129 = vmatpush1.msra.mxu0 0.0
    %2130 = vmatprep.subr.mxu0 0.0
    %2131 = vmatpush1.msra.mxu0 0.0
    %2132 = vmatprep.subr.mxu0 0.0
    %2133 = vmatpush1.msra.mxu0 0.0
    %2134 = vmatprep.subr.mxu0 0.0
    %2135 = vmatpush1.msra.mxu0 0.0
    %2136 = vmatprep.subr.mxu0 0.0
    %2137 = vmatpush1.msra.mxu0 0.0
    %2138 = vmatprep.subr.mxu0 0.0
    %2139 = vmatpush1.msra.mxu0 0.0
    %2140 = vmatprep.subr.mxu0 0.0
    %2141 = vmatpush1.msra.mxu0 0.0
    %2142 = vmatprep.subr.mxu0 0.0
    %2143 = vmatpush1.msra.mxu0 0.0
    %2144 = vmatprep.subr.mxu0 0.0
    %2145 = vmatpush1.msra.mxu0 0.0
    %2146 = vmatprep.subr.mxu0 0.0
    %2147 = vmatpush1.msra.mxu0 0.0
    %2148 = vmatprep.subr.mxu0 0.0
    %2149 = vmatpush1.msra.mxu0 0.0
    %2150 = vmatprep.mubr.f32.mxu0 0.0
    %2151 = vmatmul.mubr.f32.gmra.mrb[0].mxu0 %v2081
    %v2152 = vpop.f32.mrb[0].mxu0
    %v2153 = vadd.f32 0.0, %v2152
    %v2154 = vpop.f32.mrb[0].mxu0
    %2155 = vmatprep.mubr.f32.mxu0 0.0
    %2156 = vmatmul.mubr.f32.gmra.mrb[0].mxu0 %v2084
    %v2157 = vpop.f32.mrb[0].mxu0
    %v2158 = vadd.f32 0.0, %v2157
    %v2159 = vpop.f32.mrb[0].mxu0
    %2160 = vdwg.mxu0
    %v2161 = vmul.f32 %v2153, %v118
    %v2162 = vmul.f32 %v2158, %v118
    %v2163 = vadd.f32 %v2161, 0.0
    %v2164 = vadd.f32 %v2162, 0.0
    %v2165 = vmul.f32 %v1765, %v123
    %v2166 = vmul.f32 %v1766, %v123
    %v2168 = vsel %vm168, %v2165, 0
    %v2171 = vsel %vm168, %v2166, 0
    %2173 = vmatprep.subr.mxu0 0.0
    %2174 = vmatpush1.xpose.msra.mxu0 %v1976
    %2175 = vmatprep.subr.mxu0 0.0
    %2176 = vmatpush1.xpose.msra.mxu0 %v1979
    %2177 = vmatprep.subr.mxu0 0.0
    %2178 = vmatpush1.xpose.msra.mxu0 0.0
    %2179 = vmatprep.subr.mxu0 0.0
    %2180 = vmatpush1.xpose.msra.mxu0 0.0
    %2181 = vmatprep.subr.mxu0 0.0
    %2182 = vmatpush1.xpose.msra.mxu0 0.0
    %2183 = vmatprep.subr.mxu0 0.0
    %2184 = vmatpush1.xpose.msra.mxu0 0.0
    %2185 = vmatprep.subr.mxu0 0.0
    %2186 = vmatpush1.xpose.msra.mxu0 0.0
    %2187 = vmatprep.subr.mxu0 0.0
    %2188 = vmatpush1.xpose.msra.mxu0 0.0
    %2189 = vmatprep.subr.mxu0 0.0
    %2190 = vmatpush1.xpose.msra.mxu0 0.0
    %2191 = vmatprep.subr.mxu0 0.0
    %2192 = vmatpush1.xpose.msra.mxu0 0.0
    %2193 = vmatprep.subr.mxu0 0.0
    %2194 = vmatpush1.xpose.msra.mxu0 0.0
    %2195 = vmatprep.subr.mxu0 0.0
    %2196 = vmatpush1.xpose.msra.mxu0 0.0
    %2197 = vmatprep.subr.mxu0 0.0
    %2198 = vmatpush1.xpose.msra.mxu0 0.0
    %2199 = vmatprep.subr.mxu0 0.0
    %2200 = vmatpush1.xpose.msra.mxu0 0.0
    %2201 = vmatprep.subr.mxu0 0.0
    %2202 = vmatpush1.xpose.msra.mxu0 0.0
    %2203 = vmatprep.subr.mxu0 0.0
    %2204 = vmatpush1.xpose.msra.mxu0 0.0
    %2205 = vmatprep.subr.mxu0 0.0
    %2206 = vmatpush1.xpose.msra.mxu0 0.0
    %2207 = vmatprep.subr.mxu0 0.0
    %2208 = vmatpush1.xpose.msra.mxu0 0.0
    %2209 = vmatprep.subr.mxu0 0.0
    %2210 = vmatpush1.xpose.msra.mxu0 0.0
    %2211 = vmatprep.subr.mxu0 0.0
    %2212 = vmatpush1.xpose.msra.mxu0 0.0
    %2213 = vmatprep.subr.mxu0 0.0
    %2214 = vmatpush1.xpose.msra.mxu0 0.0
    %2215 = vmatprep.subr.mxu0 0.0
    %2216 = vmatpush1.xpose.msra.mxu0 0.0
    %2217 = vmatprep.subr.mxu0 0.0
    %2218 = vmatpush1.xpose.msra.mxu0 0.0
    %2219 = vmatprep.subr.mxu0 0.0
    %2220 = vmatpush1.xpose.msra.mxu0 0.0
    %2221 = vmatprep.subr.mxu0 0.0
    %2222 = vmatpush1.xpose.msra.mxu0 0.0
    %2223 = vmatprep.subr.mxu0 0.0
    %2224 = vmatpush1.xpose.msra.mxu0 0.0
    %2225 = vmatprep.subr.mxu0 0.0
    %2226 = vmatpush1.xpose.msra.mxu0 0.0
    %2227 = vmatprep.subr.mxu0 0.0
    %2228 = vmatpush1.xpose.msra.mxu0 0.0
    %2229 = vmatprep.subr.mxu0 0.0
    %2230 = vmatpush1.xpose.msra.mxu0 0.0
    %2231 = vmatprep.subr.mxu0 0.0
    %2232 = vmatpush1.xpose.msra.mxu0 0.0
    %2233 = vmatprep.subr.mxu0 0.0
    %2234 = vmatpush1.xpose.msra.mxu0 0.0
    %2235 = vmatprep.subr.mxu0 0.0
    %2236 = vmatpush1.xpose.msra.mxu0 0.0
    %2237 = vmatprep.mubr.f32.mxu0 0.0
    %2238 = vmatmul.mubr.f32.gmra.mrb[0].mxu0 %v2168
    %v2239 = vpop.f32.mrb[0].mxu0
    %v2240 = vadd.f32 0.0, %v2239
    %v2241 = vpop.f32.mrb[0].mxu0
    %2242 = vmatprep.mubr.f32.mxu0 0.0
    %2243 = vmatmul.mubr.f32.gmra.mrb[0].mxu0 %v2171
    %v2244 = vpop.f32.mrb[0].mxu0
    %v2245 = vadd.f32 0.0, %v2244
    %v2246 = vpop.f32.mrb[0].mxu0
    %2247 = vdwg.mxu0
    %v2248 = vsel %vm153, %v2240, -1e+30
    %v2249 = vsel %vm154, %v2245, -1e+30
    %v2250 = vsel %vm551, %v2248, -inf
    %2251 = vmax.xlane.f32.xlu0 %v2250
    %v2252 = vpop.xlane.xlu0 %2251
    %v2253 = vsel %vm551, %v2249, -inf
    %2254 = vmax.xlane.f32.xlu0 %v2253
    %v2255 = vpop.xlane.xlu0 %2254
    %v2256 = vsub.f32 %v2248, %v2252
    %v2257 = vsub.f32 %v2249, %v2255
    %v2258 = vmul.f32 %v2256, 1.442695
    %v2259 = vpow.pop %v2258
    %v2260 = vmul.f32 %v2257, 1.442695
    %v2261 = vpow.pop %v2260
    %v2262 = vsel %vm551, %v2259, 0.0
    %2263 = vadd.xlane.f32.xlu0 %v2262
    %v2264 = vpop.xlane.xlu0 %2263
    %v2265 = vsel %vm551, %v2261, 0.0
    %2266 = vadd.xlane.f32.xlu0 %v2265
    %v2267 = vpop.xlane.xlu0 %2266
    %v2268 = vrcp.pop %v2264
    %v2269 = vrcp.pop %v2267
    %v2270 = vmul.f32 %v2259, %v2268
    %v2271 = vmul.f32 %v2261, %v2269
    %v2273 = vsel %vm551, %v2270, 0
    %v2276 = vsel %vm551, %v2271, 0
    %2278 = vmatprep.subr.mxu0 0.0
    %2279 = vmatpush1.msra.mxu0 %v1959
    %2280 = vmatprep.subr.mxu0 0.0
    %2281 = vmatpush1.msra.mxu0 %v1964
    %2282 = vmatprep.subr.mxu0 0.0
    %2283 = vmatpush1.msra.mxu0 0.0
    %2284 = vmatprep.subr.mxu0 0.0
    %2285 = vmatpush1.msra.mxu0 0.0
    %2286 = vmatprep.subr.mxu0 0.0
    %2287 = vmatpush1.msra.mxu0 0.0
    %2288 = vmatprep.subr.mxu0 0.0
    %2289 = vmatpush1.msra.mxu0 0.0
    %2290 = vmatprep.subr.mxu0 0.0
    %2291 = vmatpush1.msra.mxu0 0.0
    %2292 = vmatprep.subr.mxu0 0.0
    %2293 = vmatpush1.msra.mxu0 0.0
    %2294 = vmatprep.subr.mxu0 0.0
    %2295 = vmatpush1.msra.mxu0 0.0
    %2296 = vmatprep.subr.mxu0 0.0
    %2297 = vmatpush1.msra.mxu0 0.0
    %2298 = vmatprep.subr.mxu0 0.0
    %2299 = vmatpush1.msra.mxu0 0.0
    %2300 = vmatprep.subr.mxu0 0.0
    %2301 = vmatpush1.msra.mxu0 0.0
    %2302 = vmatprep.subr.mxu0 0.0
    %2303 = vmatpush1.msra.mxu0 0.0
    %2304 = vmatprep.subr.mxu0 0.0
    %2305 = vmatpush1.msra.mxu0 0.0
    %2306 = vmatprep.subr.mxu0 0.0
    %2307 = vmatpush1.msra.mxu0 0.0
    %2308 = vmatprep.subr.mxu0 0.0
    %2309 = vmatpush1.msra.mxu0 0.0
    %2310 = vmatprep.subr.mxu0 0.0
    %2311 = vmatpush1.msra.mxu0 0.0
    %2312 = vmatprep.subr.mxu0 0.0
    %2313 = vmatpush1.msra.mxu0 0.0
    %2314 = vmatprep.subr.mxu0 0.0
    %2315 = vmatpush1.msra.mxu0 0.0
    %2316 = vmatprep.subr.mxu0 0.0
    %2317 = vmatpush1.msra.mxu0 0.0
    %2318 = vmatprep.subr.mxu0 0.0
    %2319 = vmatpush1.msra.mxu0 0.0
    %2320 = vmatprep.subr.mxu0 0.0
    %2321 = vmatpush1.msra.mxu0 0.0
    %2322 = vmatprep.subr.mxu0 0.0
    %2323 = vmatpush1.msra.mxu0 0.0
    %2324 = vmatprep.subr.mxu0 0.0
    %2325 = vmatpush1.msra.mxu0 0.0
    %2326 = vmatprep.subr.mxu0 0.0
    %2327 = vmatpush1.msra.mxu0 0.0
    %2328 = vmatprep.subr.mxu0 0.0
    %2329 = vmatpush1.msra.mxu0 0.0
    %2330 = vmatprep.subr.mxu0 0.0
    %2331 = vmatpush1.msra.mxu0 0.0
    %2332 = vmatprep.subr.mxu0 0.0
    %2333 = vmatpush1.msra.mxu0 0.0
    %2334 = vmatprep.subr.mxu0 0.0
    %2335 = vmatpush1.msra.mxu0 0.0
    %2336 = vmatprep.subr.mxu0 0.0
    %2337 = vmatpush1.msra.mxu0 0.0
    %2338 = vmatprep.subr.mxu0 0.0
    %2339 = vmatpush1.msra.mxu0 0.0
    %2340 = vmatprep.subr.mxu0 0.0
    %2341 = vmatpush1.msra.mxu0 0.0
    %2342 = vmatprep.mubr.f32.mxu0 0.0
    %2343 = vmatmul.mubr.f32.gmra.mrb[0].mxu0 %v2273
    %v2344 = vpop.f32.mrb[0].mxu0
    %v2345 = vadd.f32 0.0, %v2344
    %v2346 = vpop.f32.mrb[0].mxu0
    %2347 = vmatprep.mubr.f32.mxu0 0.0
    %2348 = vmatmul.mubr.f32.gmra.mrb[0].mxu0 %v2276
    %v2349 = vpop.f32.mrb[0].mxu0
    %v2350 = vadd.f32 0.0, %v2349
    %v2351 = vpop.f32.mrb[0].mxu0
    %2352 = vdwg.mxu0
    %v2353 = vmul.f32 %v2345, %v123
    %v2354 = vmul.f32 %v2350, %v123
    %v2355 = vadd.f32 %v2163, %v2353
    %v2356 = vadd.f32 %v2164, %v2354
    %v2357 = vmul.f32 %v1765, %v128
    %v2358 = vmul.f32 %v1766, %v128
    %v2360 = vsel %vm168, %v2357, 0
    %v2363 = vsel %vm168, %v2358, 0
    %2365 = vmatprep.subr.mxu0 0.0
    %2366 = vmatpush1.xpose.msra.mxu0 %v1976
    %2367 = vmatprep.subr.mxu0 0.0
    %2368 = vmatpush1.xpose.msra.mxu0 %v1979
    %2369 = vmatprep.subr.mxu0 0.0
    %2370 = vmatpush1.xpose.msra.mxu0 0.0
    %2371 = vmatprep.subr.mxu0 0.0
    %2372 = vmatpush1.xpose.msra.mxu0 0.0
    %2373 = vmatprep.subr.mxu0 0.0
    %2374 = vmatpush1.xpose.msra.mxu0 0.0
    %2375 = vmatprep.subr.mxu0 0.0
    %2376 = vmatpush1.xpose.msra.mxu0 0.0
    %2377 = vmatprep.subr.mxu0 0.0
    %2378 = vmatpush1.xpose.msra.mxu0 0.0
    %2379 = vmatprep.subr.mxu0 0.0
    %2380 = vmatpush1.xpose.msra.mxu0 0.0
    %2381 = vmatprep.subr.mxu0 0.0
    %2382 = vmatpush1.xpose.msra.mxu0 0.0
    %2383 = vmatprep.subr.mxu0 0.0
    %2384 = vmatpush1.xpose.msra.mxu0 0.0
    %2385 = vmatprep.subr.mxu0 0.0
    %2386 = vmatpush1.xpose.msra.mxu0 0.0
    %2387 = vmatprep.subr.mxu0 0.0
    %2388 = vmatpush1.xpose.msra.mxu0 0.0
    %2389 = vmatprep.subr.mxu0 0.0
    %2390 = vmatpush1.xpose.msra.mxu0 0.0
    %2391 = vmatprep.subr.mxu0 0.0
    %2392 = vmatpush1.xpose.msra.mxu0 0.0
    %2393 = vmatprep.subr.mxu0 0.0
    %2394 = vmatpush1.xpose.msra.mxu0 0.0
    %2395 = vmatprep.subr.mxu0 0.0
    %2396 = vmatpush1.xpose.msra.mxu0 0.0
    %2397 = vmatprep.subr.mxu0 0.0
    %2398 = vmatpush1.xpose.msra.mxu0 0.0
    %2399 = vmatprep.subr.mxu0 0.0
    %2400 = vmatpush1.xpose.msra.mxu0 0.0
    %2401 = vmatprep.subr.mxu0 0.0
    %2402 = vmatpush1.xpose.msra.mxu0 0.0
    %2403 = vmatprep.subr.mxu0 0.0
    %2404 = vmatpush1.xpose.msra.mxu0 0.0
    %2405 = vmatprep.subr.mxu0 0.0
    %2406 = vmatpush1.xpose.msra.mxu0 0.0
    %2407 = vmatprep.subr.mxu0 0.0
    %2408 = vmatpush1.xpose.msra.mxu0 0.0
    %2409 = vmatprep.subr.mxu0 0.0
    %2410 = vmatpush1.xpose.msra.mxu0 0.0
    %2411 = vmatprep.subr.mxu0 0.0
    %2412 = vmatpush1.xpose.msra.mxu0 0.0
    %2413 = vmatprep.subr.mxu0 0.0
    %2414 = vmatpush1.xpose.msra.mxu0 0.0
    %2415 = vmatprep.subr.mxu0 0.0
    %2416 = vmatpush1.xpose.msra.mxu0 0.0
    %2417 = vmatprep.subr.mxu0 0.0
    %2418 = vmatpush1.xpose.msra.mxu0 0.0
    %2419 = vmatprep.subr.mxu0 0.0
    %2420 = vmatpush1.xpose.msra.mxu0 0.0
    %2421 = vmatprep.subr.mxu0 0.0
    %2422 = vmatpush1.xpose.msra.mxu0 0.0
    %2423 = vmatprep.subr.mxu0 0.0
    %2424 = vmatpush1.xpose.msra.mxu0 0.0
    %2425 = vmatprep.subr.mxu0 0.0
    %2426 = vmatpush1.xpose.msra.mxu0 0.0
    %2427 = vmatprep.subr.mxu0 0.0
    %2428 = vmatpush1.xpose.msra.mxu0 0.0
    %2429 = vmatprep.mubr.f32.mxu0 0.0
    %2430 = vmatmul.mubr.f32.gmra.mrb[0].mxu0 %v2360
    %v2431 = vpop.f32.mrb[0].mxu0
    %v2432 = vadd.f32 0.0, %v2431
    %v2433 = vpop.f32.mrb[0].mxu0
    %2434 = vmatprep.mubr.f32.mxu0 0.0
    %2435 = vmatmul.mubr.f32.gmra.mrb[0].mxu0 %v2363
    %v2436 = vpop.f32.mrb[0].mxu0
    %v2437 = vadd.f32 0.0, %v2436
    %v2438 = vpop.f32.mrb[0].mxu0
    %2439 = vdwg.mxu0
    %v2440 = vsel %vm153, %v2432, -1e+30
    %v2441 = vsel %vm154, %v2437, -1e+30
    %v2442 = vsel %vm551, %v2440, -inf
    %2443 = vmax.xlane.f32.xlu0 %v2442
    %v2444 = vpop.xlane.xlu0 %2443
    %v2445 = vsel %vm551, %v2441, -inf
    %2446 = vmax.xlane.f32.xlu0 %v2445
    %v2447 = vpop.xlane.xlu0 %2446
    %v2448 = vsub.f32 %v2440, %v2444
    %v2449 = vsub.f32 %v2441, %v2447
    %v2450 = vmul.f32 %v2448, 1.442695
    %v2451 = vpow.pop %v2450
    %v2452 = vmul.f32 %v2449, 1.442695
    %v2453 = vpow.pop %v2452
    %v2454 = vsel %vm551, %v2451, 0.0
    %2455 = vadd.xlane.f32.xlu0 %v2454
    %v2456 = vpop.xlane.xlu0 %2455
    %v2457 = vsel %vm551, %v2453, 0.0
    %2458 = vadd.xlane.f32.xlu0 %v2457
    %v2459 = vpop.xlane.xlu0 %2458
    %v2460 = vrcp.pop %v2456
    %v2461 = vrcp.pop %v2459
    %v2462 = vmul.f32 %v2451, %v2460
    %v2463 = vmul.f32 %v2453, %v2461
    %v2465 = vsel %vm551, %v2462, 0
    %v2468 = vsel %vm551, %v2463, 0
    %2470 = vmatprep.subr.mxu0 0.0
    %2471 = vmatpush1.msra.mxu0 %v1959
    %2472 = vmatprep.subr.mxu0 0.0
    %2473 = vmatpush1.msra.mxu0 %v1964
    %2474 = vmatprep.subr.mxu0 0.0
    %2475 = vmatpush1.msra.mxu0 0.0
    %2476 = vmatprep.subr.mxu0 0.0
    %2477 = vmatpush1.msra.mxu0 0.0
    %2478 = vmatprep.subr.mxu0 0.0
    %2479 = vmatpush1.msra.mxu0 0.0
    %2480 = vmatprep.subr.mxu0 0.0
    %2481 = vmatpush1.msra.mxu0 0.0
    %2482 = vmatprep.subr.mxu0 0.0
    %2483 = vmatpush1.msra.mxu0 0.0
    %2484 = vmatprep.subr.mxu0 0.0
    %2485 = vmatpush1.msra.mxu0 0.0
    %2486 = vmatprep.subr.mxu0 0.0
    %2487 = vmatpush1.msra.mxu0 0.0
    %2488 = vmatprep.subr.mxu0 0.0
    %2489 = vmatpush1.msra.mxu0 0.0
    %2490 = vmatprep.subr.mxu0 0.0
    %2491 = vmatpush1.msra.mxu0 0.0
    %2492 = vmatprep.subr.mxu0 0.0
    %2493 = vmatpush1.msra.mxu0 0.0
    %2494 = vmatprep.subr.mxu0 0.0
    %2495 = vmatpush1.msra.mxu0 0.0
    %2496 = vmatprep.subr.mxu0 0.0
    %2497 = vmatpush1.msra.mxu0 0.0
    %2498 = vmatprep.subr.mxu0 0.0
    %2499 = vmatpush1.msra.mxu0 0.0
    %2500 = vmatprep.subr.mxu0 0.0
    %2501 = vmatpush1.msra.mxu0 0.0
    %2502 = vmatprep.subr.mxu0 0.0
    %2503 = vmatpush1.msra.mxu0 0.0
    %2504 = vmatprep.subr.mxu0 0.0
    %2505 = vmatpush1.msra.mxu0 0.0
    %2506 = vmatprep.subr.mxu0 0.0
    %2507 = vmatpush1.msra.mxu0 0.0
    %2508 = vmatprep.subr.mxu0 0.0
    %2509 = vmatpush1.msra.mxu0 0.0
    %2510 = vmatprep.subr.mxu0 0.0
    %2511 = vmatpush1.msra.mxu0 0.0
    %2512 = vmatprep.subr.mxu0 0.0
    %2513 = vmatpush1.msra.mxu0 0.0
    %2514 = vmatprep.subr.mxu0 0.0
    %2515 = vmatpush1.msra.mxu0 0.0
    %2516 = vmatprep.subr.mxu0 0.0
    %2517 = vmatpush1.msra.mxu0 0.0
    %2518 = vmatprep.subr.mxu0 0.0
    %2519 = vmatpush1.msra.mxu0 0.0
    %2520 = vmatprep.subr.mxu0 0.0
    %2521 = vmatpush1.msra.mxu0 0.0
    %2522 = vmatprep.subr.mxu0 0.0
    %2523 = vmatpush1.msra.mxu0 0.0
    %2524 = vmatprep.subr.mxu0 0.0
    %2525 = vmatpush1.msra.mxu0 0.0
    %2526 = vmatprep.subr.mxu0 0.0
    %2527 = vmatpush1.msra.mxu0 0.0
    %2528 = vmatprep.subr.mxu0 0.0
    %2529 = vmatpush1.msra.mxu0 0.0
    %2530 = vmatprep.subr.mxu0 0.0
    %2531 = vmatpush1.msra.mxu0 0.0
    %2532 = vmatprep.subr.mxu0 0.0
    %2533 = vmatpush1.msra.mxu0 0.0
    %2534 = vmatprep.mubr.f32.mxu0 0.0
    %2535 = vmatmul.mubr.f32.gmra.mrb[0].mxu0 %v2465
    %v2536 = vpop.f32.mrb[0].mxu0
    %v2537 = vadd.f32 0.0, %v2536
    %v2538 = vpop.f32.mrb[0].mxu0
    %2539 = vmatprep.mubr.f32.mxu0 0.0
    %2540 = vmatmul.mubr.f32.gmra.mrb[0].mxu0 %v2468
    %v2541 = vpop.f32.mrb[0].mxu0
    %v2542 = vadd.f32 0.0, %v2541
    %v2543 = vpop.f32.mrb[0].mxu0
    %2544 = vdwg.mxu0
    %v2545 = vmul.f32 %v2537, %v128
    %v2546 = vmul.f32 %v2542, %v128
    %v2547 = vadd.f32 %v2355, %v2545
    %v2548 = vadd.f32 %v2356, %v2546
    %v2549 = vmul.f32 %v1765, %v133
    %v2550 = vmul.f32 %v1766, %v133
    %v2552 = vsel %vm168, %v2549, 0
    %v2555 = vsel %vm168, %v2550, 0
    %2557 = vmatprep.subr.mxu0 0.0
    %2558 = vmatpush1.xpose.msra.mxu0 %v1976
    %2559 = vmatprep.subr.mxu0 0.0
    %2560 = vmatpush1.xpose.msra.mxu0 %v1979
    %2561 = vmatprep.subr.mxu0 0.0
    %2562 = vmatpush1.xpose.msra.mxu0 0.0
    %2563 = vmatprep.subr.mxu0 0.0
    %2564 = vmatpush1.xpose.msra.mxu0 0.0
    %2565 = vmatprep.subr.mxu0 0.0
    %2566 = vmatpush1.xpose.msra.mxu0 0.0
    %2567 = vmatprep.subr.mxu0 0.0
    %2568 = vmatpush1.xpose.msra.mxu0 0.0
    %2569 = vmatprep.subr.mxu0 0.0
    %2570 = vmatpush1.xpose.msra.mxu0 0.0
    %2571 = vmatprep.subr.mxu0 0.0
    %2572 = vmatpush1.xpose.msra.mxu0 0.0
    %2573 = vmatprep.subr.mxu0 0.0
    %2574 = vmatpush1.xpose.msra.mxu0 0.0
    %2575 = vmatprep.subr.mxu0 0.0
    %2576 = vmatpush1.xpose.msra.mxu0 0.0
    %2577 = vmatprep.subr.mxu0 0.0
    %2578 = vmatpush1.xpose.msra.mxu0 0.0
    %2579 = vmatprep.subr.mxu0 0.0
    %2580 = vmatpush1.xpose.msra.mxu0 0.0
    %2581 = vmatprep.subr.mxu0 0.0
    %2582 = vmatpush1.xpose.msra.mxu0 0.0
    %2583 = vmatprep.subr.mxu0 0.0
    %2584 = vmatpush1.xpose.msra.mxu0 0.0
    %2585 = vmatprep.subr.mxu0 0.0
    %2586 = vmatpush1.xpose.msra.mxu0 0.0
    %2587 = vmatprep.subr.mxu0 0.0
    %2588 = vmatpush1.xpose.msra.mxu0 0.0
    %2589 = vmatprep.subr.mxu0 0.0
    %2590 = vmatpush1.xpose.msra.mxu0 0.0
    %2591 = vmatprep.subr.mxu0 0.0
    %2592 = vmatpush1.xpose.msra.mxu0 0.0
    %2593 = vmatprep.subr.mxu0 0.0
    %2594 = vmatpush1.xpose.msra.mxu0 0.0
    %2595 = vmatprep.subr.mxu0 0.0
    %2596 = vmatpush1.xpose.msra.mxu0 0.0
    %2597 = vmatprep.subr.mxu0 0.0
    %2598 = vmatpush1.xpose.msra.mxu0 0.0
    %2599 = vmatprep.subr.mxu0 0.0
    %2600 = vmatpush1.xpose.msra.mxu0 0.0
    %2601 = vmatprep.subr.mxu0 0.0
    %2602 = vmatpush1.xpose.msra.mxu0 0.0
    %2603 = vmatprep.subr.mxu0 0.0
    %2604 = vmatpush1.xpose.msra.mxu0 0.0
    %2605 = vmatprep.subr.mxu0 0.0
    %2606 = vmatpush1.xpose.msra.mxu0 0.0
    %2607 = vmatprep.subr.mxu0 0.0
    %2608 = vmatpush1.xpose.msra.mxu0 0.0
    %2609 = vmatprep.subr.mxu0 0.0
    %2610 = vmatpush1.xpose.msra.mxu0 0.0
    %2611 = vmatprep.subr.mxu0 0.0
    %2612 = vmatpush1.xpose.msra.mxu0 0.0
    %2613 = vmatprep.subr.mxu0 0.0
    %2614 = vmatpush1.xpose.msra.mxu0 0.0
    %2615 = vmatprep.subr.mxu0 0.0
    %2616 = vmatpush1.xpose.msra.mxu0 0.0
    %2617 = vmatprep.subr.mxu0 0.0
    %2618 = vmatpush1.xpose.msra.mxu0 0.0
    %2619 = vmatprep.subr.mxu0 0.0
    %2620 = vmatpush1.xpose.msra.mxu0 0.0
    %2621 = vmatprep.mubr.f32.mxu0 0.0
    %2622 = vmatmul.mubr.f32.gmra.mrb[0].mxu0 %v2552
    %v2623 = vpop.f32.mrb[0].mxu0
    %v2624 = vadd.f32 0.0, %v2623
    %v2625 = vpop.f32.mrb[0].mxu0
    %2626 = vmatprep.mubr.f32.mxu0 0.0
    %2627 = vmatmul.mubr.f32.gmra.mrb[0].mxu0 %v2555
    %v2628 = vpop.f32.mrb[0].mxu0
    %v2629 = vadd.f32 0.0, %v2628
    %v2630 = vpop.f32.mrb[0].mxu0
    %2631 = vdwg.mxu0
    %v2632 = vsel %vm153, %v2624, -1e+30
    %v2633 = vsel %vm154, %v2629, -1e+30
    %v2634 = vsel %vm551, %v2632, -inf
    %2635 = vmax.xlane.f32.xlu0 %v2634
    %v2636 = vpop.xlane.xlu0 %2635
    %v2637 = vsel %vm551, %v2633, -inf
    %2638 = vmax.xlane.f32.xlu0 %v2637
    %v2639 = vpop.xlane.xlu0 %2638
    %v2640 = vsub.f32 %v2632, %v2636
    %v2641 = vsub.f32 %v2633, %v2639
    %v2642 = vmul.f32 %v2640, 1.442695
    %v2643 = vpow.pop %v2642
    %v2644 = vmul.f32 %v2641, 1.442695
    %v2645 = vpow.pop %v2644
    %v2646 = vsel %vm551, %v2643, 0.0
    %2647 = vadd.xlane.f32.xlu0 %v2646
    %v2648 = vpop.xlane.xlu0 %2647
    %v2649 = vsel %vm551, %v2645, 0.0
    %2650 = vadd.xlane.f32.xlu0 %v2649
    %v2651 = vpop.xlane.xlu0 %2650
    %v2652 = vrcp.pop %v2648
    %v2653 = vrcp.pop %v2651
    %v2654 = vmul.f32 %v2643, %v2652
    %v2655 = vmul.f32 %v2645, %v2653
    %v2657 = vsel %vm551, %v2654, 0
    %v2660 = vsel %vm551, %v2655, 0
    %2662 = vmatprep.subr.mxu0 0.0
    %2663 = vmatpush1.msra.mxu0 %v1959
    %2664 = vmatprep.subr.mxu0 0.0
    %2665 = vmatpush1.msra.mxu0 %v1964
    %2666 = vmatprep.subr.mxu0 0.0
    %2667 = vmatpush1.msra.mxu0 0.0
    %2668 = vmatprep.subr.mxu0 0.0
    %2669 = vmatpush1.msra.mxu0 0.0
    %2670 = vmatprep.subr.mxu0 0.0
    %2671 = vmatpush1.msra.mxu0 0.0
    %2672 = vmatprep.subr.mxu0 0.0
    %2673 = vmatpush1.msra.mxu0 0.0
    %2674 = vmatprep.subr.mxu0 0.0
    %2675 = vmatpush1.msra.mxu0 0.0
    %2676 = vmatprep.subr.mxu0 0.0
    %2677 = vmatpush1.msra.mxu0 0.0
    %2678 = vmatprep.subr.mxu0 0.0
    %2679 = vmatpush1.msra.mxu0 0.0
    %2680 = vmatprep.subr.mxu0 0.0
    %2681 = vmatpush1.msra.mxu0 0.0
    %2682 = vmatprep.subr.mxu0 0.0
    %2683 = vmatpush1.msra.mxu0 0.0
    %2684 = vmatprep.subr.mxu0 0.0
    %2685 = vmatpush1.msra.mxu0 0.0
    %2686 = vmatprep.subr.mxu0 0.0
    %2687 = vmatpush1.msra.mxu0 0.0
    %2688 = vmatprep.subr.mxu0 0.0
    %2689 = vmatpush1.msra.mxu0 0.0
    %2690 = vmatprep.subr.mxu0 0.0
    %2691 = vmatpush1.msra.mxu0 0.0
    %2692 = vmatprep.subr.mxu0 0.0
    %2693 = vmatpush1.msra.mxu0 0.0
    %2694 = vmatprep.subr.mxu0 0.0
    %2695 = vmatpush1.msra.mxu0 0.0
    %2696 = vmatprep.subr.mxu0 0.0
    %2697 = vmatpush1.msra.mxu0 0.0
    %2698 = vmatprep.subr.mxu0 0.0
    %2699 = vmatpush1.msra.mxu0 0.0
    %2700 = vmatprep.subr.mxu0 0.0
    %2701 = vmatpush1.msra.mxu0 0.0
    %2702 = vmatprep.subr.mxu0 0.0
    %2703 = vmatpush1.msra.mxu0 0.0
    %2704 = vmatprep.subr.mxu0 0.0
    %2705 = vmatpush1.msra.mxu0 0.0
    %2706 = vmatprep.subr.mxu0 0.0
    %2707 = vmatpush1.msra.mxu0 0.0
    %2708 = vmatprep.subr.mxu0 0.0
    %2709 = vmatpush1.msra.mxu0 0.0
    %2710 = vmatprep.subr.mxu0 0.0
    %2711 = vmatpush1.msra.mxu0 0.0
    %2712 = vmatprep.subr.mxu0 0.0
    %2713 = vmatpush1.msra.mxu0 0.0
    %2714 = vmatprep.subr.mxu0 0.0
    %2715 = vmatpush1.msra.mxu0 0.0
    %2716 = vmatprep.subr.mxu0 0.0
    %2717 = vmatpush1.msra.mxu0 0.0
    %2718 = vmatprep.subr.mxu0 0.0
    %2719 = vmatpush1.msra.mxu0 0.0
    %2720 = vmatprep.subr.mxu0 0.0
    %2721 = vmatpush1.msra.mxu0 0.0
    %2722 = vmatprep.subr.mxu0 0.0
    %2723 = vmatpush1.msra.mxu0 0.0
    %2724 = vmatprep.subr.mxu0 0.0
    %2725 = vmatpush1.msra.mxu0 0.0
    %2726 = vmatprep.mubr.f32.mxu0 0.0
    %2727 = vmatmul.mubr.f32.gmra.mrb[0].mxu0 %v2657
    %v2728 = vpop.f32.mrb[0].mxu0
    %v2729 = vadd.f32 0.0, %v2728
    %v2730 = vpop.f32.mrb[0].mxu0
    %2731 = vmatprep.mubr.f32.mxu0 0.0
    %2732 = vmatmul.mubr.f32.gmra.mrb[0].mxu0 %v2660
    %v2733 = vpop.f32.mrb[0].mxu0
    %v2734 = vadd.f32 0.0, %v2733
    %v2735 = vpop.f32.mrb[0].mxu0
    %2736 = vdwg.mxu0
    %v2737 = vmul.f32 %v2729, %v133
    %v2738 = vmul.f32 %v2734, %v133
    %v2739 = vadd.f32 %v2547, %v2737
    %v2740 = vadd.f32 %v2548, %v2738
    %s2741 = scalar_lea.vmem [#allocation5], 32
    %v2742 = vld [vmem:[%s2741] sm:$0xff]
    %v2743 = vld [vmem:[%s2741 + $0x8] sm:$0xff]
    %v2744 = vld [vmem:[%s2741 + $0x10] sm:$0xff]
    %v2745 = vld [vmem:[%s2741 + $0x18] sm:$0xff]
    %s2746 = scalar_lea.vmem %s8, 1
    %v2747 = vld [vmem:[%s2746] sm:$0x1]
    %v2749 = vlaneseq
    %v2750 = vshrl.u32 %v2749, 7
    %v2751 = vsub.s32 0, %v2750
    %v2752 = vrot.slane %v2747, %v2751
    %v2755 = vsel %vm168, %v2739, 0
    %v2758 = vsel %vm168, %v2740, 0
    %v2761 = vsel %vm168, %v2742, 0
    %v2764 = vsel %vm168, %v2743, 0
    %v2767 = vsel %vm168, %v2744, 0
    %v2770 = vsel %vm168, %v2745, 0
    %2772 = vmatprep.subr.mxu0 0.0
    %2773 = vmatpush1.xpose.msra.mxu0 %v2761
    %2774 = vmatprep.subr.mxu0 0.0
    %2775 = vmatpush1.xpose.msra.mxu0 %v2764
    %2776 = vmatprep.subr.mxu0 0.0
    %2777 = vmatpush1.xpose.msra.mxu0 %v2767
    %2778 = vmatprep.subr.mxu0 0.0
    %2779 = vmatpush1.xpose.msra.mxu0 %v2770
    %2780 = vmatprep.subr.mxu0 0.0
    %2781 = vmatpush1.xpose.msra.mxu0 0.0
    %2782 = vmatprep.subr.mxu0 0.0
    %2783 = vmatpush1.xpose.msra.mxu0 0.0
    %2784 = vmatprep.subr.mxu0 0.0
    %2785 = vmatpush1.xpose.msra.mxu0 0.0
    %2786 = vmatprep.subr.mxu0 0.0
    %2787 = vmatpush1.xpose.msra.mxu0 0.0
    %2788 = vmatprep.subr.mxu0 0.0
    %2789 = vmatpush1.xpose.msra.mxu0 0.0
    %2790 = vmatprep.subr.mxu0 0.0
    %2791 = vmatpush1.xpose.msra.mxu0 0.0
    %2792 = vmatprep.subr.mxu0 0.0
    %2793 = vmatpush1.xpose.msra.mxu0 0.0
    %2794 = vmatprep.subr.mxu0 0.0
    %2795 = vmatpush1.xpose.msra.mxu0 0.0
    %2796 = vmatprep.subr.mxu0 0.0
    %2797 = vmatpush1.xpose.msra.mxu0 0.0
    %2798 = vmatprep.subr.mxu0 0.0
    %2799 = vmatpush1.xpose.msra.mxu0 0.0
    %2800 = vmatprep.subr.mxu0 0.0
    %2801 = vmatpush1.xpose.msra.mxu0 0.0
    %2802 = vmatprep.subr.mxu0 0.0
    %2803 = vmatpush1.xpose.msra.mxu0 0.0
    %2804 = vmatprep.subr.mxu0 0.0
    %2805 = vmatpush1.xpose.msra.mxu0 0.0
    %2806 = vmatprep.subr.mxu0 0.0
    %2807 = vmatpush1.xpose.msra.mxu0 0.0
    %2808 = vmatprep.subr.mxu0 0.0
    %2809 = vmatpush1.xpose.msra.mxu0 0.0
    %2810 = vmatprep.subr.mxu0 0.0
    %2811 = vmatpush1.xpose.msra.mxu0 0.0
    %2812 = vmatprep.subr.mxu0 0.0
    %2813 = vmatpush1.xpose.msra.mxu0 0.0
    %2814 = vmatprep.subr.mxu0 0.0
    %2815 = vmatpush1.xpose.msra.mxu0 0.0
    %2816 = vmatprep.subr.mxu0 0.0
    %2817 = vmatpush1.xpose.msra.mxu0 0.0
    %2818 = vmatprep.subr.mxu0 0.0
    %2819 = vmatpush1.xpose.msra.mxu0 0.0
    %2820 = vmatprep.subr.mxu0 0.0
    %2821 = vmatpush1.xpose.msra.mxu0 0.0
    %2822 = vmatprep.subr.mxu0 0.0
    %2823 = vmatpush1.xpose.msra.mxu0 0.0
    %2824 = vmatprep.subr.mxu0 0.0
    %2825 = vmatpush1.xpose.msra.mxu0 0.0
    %2826 = vmatprep.subr.mxu0 0.0
    %2827 = vmatpush1.xpose.msra.mxu0 0.0
    %2828 = vmatprep.subr.mxu0 0.0
    %2829 = vmatpush1.xpose.msra.mxu0 0.0
    %2830 = vmatprep.subr.mxu0 0.0
    %2831 = vmatpush1.xpose.msra.mxu0 0.0
    %2832 = vmatprep.subr.mxu0 0.0
    %2833 = vmatpush1.xpose.msra.mxu0 0.0
    %2834 = vmatprep.subr.mxu0 0.0
    %2835 = vmatpush1.xpose.msra.mxu0 0.0
    %2836 = vmatprep.mubr.f32.mxu0 0.0
    %2837 = vmatmul.mubr.f32.gmra.mrb[0].mxu0 %v2755
    %v2838 = vpop.f32.mrb[0].mxu0
    %v2839 = vadd.f32 %v2752, %v2838
    %v2840 = vpop.f32.mrb[0].mxu0
    %2841 = vmatprep.mubr.f32.mxu0 0.0
    %2842 = vmatmul.mubr.f32.gmra.mrb[0].mxu0 %v2758
    %v2843 = vpop.f32.mrb[0].mxu0
    %v2844 = vadd.f32 %v2752, %v2843
    %v2845 = vpop.f32.mrb[0].mxu0
    %2846 = vdwg.mxu0
    %v2847 = vadd.f32 %v1657, %v2839
    %v2848 = vadd.f32 %v1658, %v2844
    %s2849 = scalar_lea.vmem %s13, 1
    %v2850 = vld [vmem:[%s2849] sm:$0x1]
    %s2851 = scalar_lea.vmem %s14, 1
    %v2852 = vld [vmem:[%s2851] sm:$0x1]
    %v2853 = vsel %vm168, %v2847, 0.0
    %2854 = vadd.xlane.f32.xlu0 %v2853
    %v2855 = vpop.xlane.xlu0 %2854
    %v2856 = vsel %vm168, %v2848, 0.0
    %2857 = vadd.xlane.f32.xlu0 %v2856
    %v2858 = vpop.xlane.xlu0 %2857
    %v2859 = vmul.f32 %v2855, %v1349
    %v2860 = vmul.f32 %v2858, %v1349
    %v2861 = vsub.f32 %v2847, %v2859
    %v2862 = vsub.f32 %v2848, %v2860
    %v2863 = vmul.f32 %v2861, %v2861
    %v2864 = vmul.f32 %v2862, %v2862
    %v2865 = vsel %vm168, %v2863, 0.0
    %2866 = vadd.xlane.f32.xlu0 %v2865
    %v2867 = vpop.xlane.xlu0 %2866
    %v2868 = vsel %vm168, %v2864, 0.0
    %2869 = vadd.xlane.f32.xlu0 %v2868
    %v2870 = vpop.xlane.xlu0 %2869
    %v2871 = vmul.f32 %v2867, %v1349
    %v2872 = vmul.f32 %v2870, %v1349
    %v2873 = vadd.f32 %v2871, 1e-05
    %v2874 = vadd.f32 %v2872, 1e-05
    %v2875 = vrsqrt.pop %v2873
    %v2876 = vrsqrt.pop %v2874
    %v2877 = vmul.f32 %v2861, %v2875
    %v2878 = vmul.f32 %v2862, %v2876
    %v2880 = vlaneseq
    %v2881 = vshrl.u32 %v2880, 7
    %v2882 = vsub.s32 0, %v2881
    %v2883 = vrot.slane %v2850, %v2882
    %v2885 = vmul.f32 %v2877, %v2883
    %v2886 = vmul.f32 %v2878, %v2883
    %v2888 = vlaneseq
    %v2889 = vshrl.u32 %v2888, 7
    %v2890 = vsub.s32 0, %v2889
    %v2891 = vrot.slane %v2852, %v2890
    %v2893 = vadd.f32 %v2885, %v2891
    %v2894 = vadd.f32 %v2886, %v2891
    %s2895 = scalar_lea.vmem %s9, 64
    %v2896 = vld [vmem:[%s2895] sm:$0xff]
    %v2897 = vld [vmem:[%s2895 + $0x8] sm:$0xff]
    %v2898 = vld [vmem:[%s2895 + $0x10] sm:$0xff]
    %v2899 = vld [vmem:[%s2895 + $0x18] sm:$0xff]
    %v2900 = vld [vmem:[%s2895 + $0x20] sm:$0xff]
    %v2901 = vld [vmem:[%s2895 + $0x28] sm:$0xff]
    %v2902 = vld [vmem:[%s2895 + $0x30] sm:$0xff]
    %v2903 = vld [vmem:[%s2895 + $0x38] sm:$0xff]
    %s2904 = scalar_lea.vmem [#allocation7], 1
    %v2905 = vld [vmem:[%s2904] sm:$0x1]
    %v2907 = vlaneseq
    %v2908 = vshrl.u32 %v2907, 7
    %v2909 = vsub.s32 0, %v2908
    %v2910 = vrot.slane %v2905, %v2909
    %v2913 = vsel %vm168, %v2893, 0
    %v2916 = vsel %vm168, %v2894, 0
    %v2919 = vsel %vm168, %v2896, 0
    %v2922 = vsel %vm168, %v2897, 0
    %v2925 = vsel %vm168, %v2898, 0
    %v2928 = vsel %vm168, %v2899, 0
    %v2931 = vsel %vm168, %v2900, 0
    %v2934 = vsel %vm168, %v2901, 0
    %v2937 = vsel %vm168, %v2902, 0
    %v2940 = vsel %vm168, %v2903, 0
    %2942 = vmatprep.subr.mxu0 0.0
    %2943 = vmatpush1.xpose.msra.mxu0 %v2919
    %2944 = vmatprep.subr.mxu0 0.0
    %2945 = vmatpush1.xpose.msra.mxu0 %v2922
    %2946 = vmatprep.subr.mxu0 0.0
    %2947 = vmatpush1.xpose.msra.mxu0 %v2925
    %2948 = vmatprep.subr.mxu0 0.0
    %2949 = vmatpush1.xpose.msra.mxu0 %v2928
    %2950 = vmatprep.subr.mxu0 0.0
    %2951 = vmatpush1.xpose.msra.mxu0 %v2931
    %2952 = vmatprep.subr.mxu0 0.0
    %2953 = vmatpush1.xpose.msra.mxu0 %v2934
    %2954 = vmatprep.subr.mxu0 0.0
    %2955 = vmatpush1.xpose.msra.mxu0 %v2937
    %2956 = vmatprep.subr.mxu0 0.0
    %2957 = vmatpush1.xpose.msra.mxu0 %v2940
    %2958 = vmatprep.subr.mxu0 0.0
    %2959 = vmatpush1.xpose.msra.mxu0 0.0
    %2960 = vmatprep.subr.mxu0 0.0
    %2961 = vmatpush1.xpose.msra.mxu0 0.0
    %2962 = vmatprep.subr.mxu0 0.0
    %2963 = vmatpush1.xpose.msra.mxu0 0.0
    %2964 = vmatprep.subr.mxu0 0.0
    %2965 = vmatpush1.xpose.msra.mxu0 0.0
    %2966 = vmatprep.subr.mxu0 0.0
    %2967 = vmatpush1.xpose.msra.mxu0 0.0
    %2968 = vmatprep.subr.mxu0 0.0
    %2969 = vmatpush1.xpose.msra.mxu0 0.0
    %2970 = vmatprep.subr.mxu0 0.0
    %2971 = vmatpush1.xpose.msra.mxu0 0.0
    %2972 = vmatprep.subr.mxu0 0.0
    %2973 = vmatpush1.xpose.msra.mxu0 0.0
    %2974 = vmatprep.subr.mxu0 0.0
    %2975 = vmatpush1.xpose.msra.mxu0 0.0
    %2976 = vmatprep.subr.mxu0 0.0
    %2977 = vmatpush1.xpose.msra.mxu0 0.0
    %2978 = vmatprep.subr.mxu0 0.0
    %2979 = vmatpush1.xpose.msra.mxu0 0.0
    %2980 = vmatprep.subr.mxu0 0.0
    %2981 = vmatpush1.xpose.msra.mxu0 0.0
    %2982 = vmatprep.subr.mxu0 0.0
    %2983 = vmatpush1.xpose.msra.mxu0 0.0
    %2984 = vmatprep.subr.mxu0 0.0
    %2985 = vmatpush1.xpose.msra.mxu0 0.0
    %2986 = vmatprep.subr.mxu0 0.0
    %2987 = vmatpush1.xpose.msra.mxu0 0.0
    %2988 = vmatprep.subr.mxu0 0.0
    %2989 = vmatpush1.xpose.msra.mxu0 0.0
    %2990 = vmatprep.subr.mxu0 0.0
    %2991 = vmatpush1.xpose.msra.mxu0 0.0
    %2992 = vmatprep.subr.mxu0 0.0
    %2993 = vmatpush1.xpose.msra.mxu0 0.0
    %2994 = vmatprep.subr.mxu0 0.0
    %2995 = vmatpush1.xpose.msra.mxu0 0.0
    %2996 = vmatprep.subr.mxu0 0.0
    %2997 = vmatpush1.xpose.msra.mxu0 0.0
    %2998 = vmatprep.subr.mxu0 0.0
    %2999 = vmatpush1.xpose.msra.mxu0 0.0
    %3000 = vmatprep.subr.mxu0 0.0
    %3001 = vmatpush1.xpose.msra.mxu0 0.0
    %3002 = vmatprep.subr.mxu0 0.0
    %3003 = vmatpush1.xpose.msra.mxu0 0.0
    %3004 = vmatprep.subr.mxu0 0.0
    %3005 = vmatpush1.xpose.msra.mxu0 0.0
    %3006 = vmatprep.mubr.f32.mxu0 0.0
    %3007 = vmatmul.mubr.f32.gmra.mrb[0].mxu0 %v2913
    %v3008 = vpop.f32.mrb[0].mxu0
    %v3009 = vadd.f32 %v2910, %v3008
    %v3010 = vpop.f32.mrb[0].mxu0
    %3011 = vmatprep.mubr.f32.mxu0 0.0
    %3012 = vmatmul.mubr.f32.gmra.mrb[0].mxu0 %v2916
    %v3013 = vpop.f32.mrb[0].mxu0
    %v3014 = vadd.f32 %v2910, %v3013
    %v3015 = vpop.f32.mrb[0].mxu0
    %3016 = vdwg.mxu0
    %v3017 = vmax.f32 %v3009, 0.0
    %v3018 = vmax.f32 %v3014, 0.0
    %s3019 = scalar_lea.vmem [#allocation8], 32
    %v3020 = vld [vmem:[%s3019] sm:$0xff]
    %v3021 = vld [vmem:[%s3019 + $0x8] sm:$0xff]
    %v3022 = vld [vmem:[%s3019 + $0x10] sm:$0xff]
    %v3023 = vld [vmem:[%s3019 + $0x18] sm:$0xff]
    %s3024 = scalar_lea.vmem %s12, 1
    %v3025 = vld [vmem:[%s3024] sm:$0x1]
    %v3027 = vlaneseq
    %v3028 = vshrl.u32 %v3027, 7
    %v3029 = vsub.s32 0, %v3028
    %v3030 = vrot.slane %v3025, %v3029
    %v3033 = vsel %vm1519, %v3017, 0
    %v3036 = vsel %vm1519, %v3018, 0
    %v3039 = vsel %vm1519, %v3020, 0
    %v3042 = vsel %vm1519, %v3021, 0
    %v3045 = vsel %vm1519, %v3022, 0
    %v3048 = vsel %vm1519, %v3023, 0
    %3050 = vmatprep.subr.mxu0 0.0
    %3051 = vmatpush1.xpose.msra.mxu0 %v3039
    %3052 = vmatprep.subr.mxu0 0.0
    %3053 = vmatpush1.xpose.msra.mxu0 %v3042
    %3054 = vmatprep.subr.mxu0 0.0
    %3055 = vmatpush1.xpose.msra.mxu0 %v3045
    %3056 = vmatprep.subr.mxu0 0.0
    %3057 = vmatpush1.xpose.msra.mxu0 %v3048
    %3058 = vmatprep.subr.mxu0 0.0
    %3059 = vmatpush1.xpose.msra.mxu0 0.0
    %3060 = vmatprep.subr.mxu0 0.0
    %3061 = vmatpush1.xpose.msra.mxu0 0.0
    %3062 = vmatprep.subr.mxu0 0.0
    %3063 = vmatpush1.xpose.msra.mxu0 0.0
    %3064 = vmatprep.subr.mxu0 0.0
    %3065 = vmatpush1.xpose.msra.mxu0 0.0
    %3066 = vmatprep.subr.mxu0 0.0
    %3067 = vmatpush1.xpose.msra.mxu0 0.0
    %3068 = vmatprep.subr.mxu0 0.0
    %3069 = vmatpush1.xpose.msra.mxu0 0.0
    %3070 = vmatprep.subr.mxu0 0.0
    %3071 = vmatpush1.xpose.msra.mxu0 0.0
    %3072 = vmatprep.subr.mxu0 0.0
    %3073 = vmatpush1.xpose.msra.mxu0 0.0
    %3074 = vmatprep.subr.mxu0 0.0
    %3075 = vmatpush1.xpose.msra.mxu0 0.0
    %3076 = vmatprep.subr.mxu0 0.0
    %3077 = vmatpush1.xpose.msra.mxu0 0.0
    %3078 = vmatprep.subr.mxu0 0.0
    %3079 = vmatpush1.xpose.msra.mxu0 0.0
    %3080 = vmatprep.subr.mxu0 0.0
    %3081 = vmatpush1.xpose.msra.mxu0 0.0
    %3082 = vmatprep.subr.mxu0 0.0
    %3083 = vmatpush1.xpose.msra.mxu0 0.0
    %3084 = vmatprep.subr.mxu0 0.0
    %3085 = vmatpush1.xpose.msra.mxu0 0.0
    %3086 = vmatprep.subr.mxu0 0.0
    %3087 = vmatpush1.xpose.msra.mxu0 0.0
    %3088 = vmatprep.subr.mxu0 0.0
    %3089 = vmatpush1.xpose.msra.mxu0 0.0
    %3090 = vmatprep.subr.mxu0 0.0
    %3091 = vmatpush1.xpose.msra.mxu0 0.0
    %3092 = vmatprep.subr.mxu0 0.0
    %3093 = vmatpush1.xpose.msra.mxu0 0.0
    %3094 = vmatprep.subr.mxu0 0.0
    %3095 = vmatpush1.xpose.msra.mxu0 0.0
    %3096 = vmatprep.subr.mxu0 0.0
    %3097 = vmatpush1.xpose.msra.mxu0 0.0
    %3098 = vmatprep.subr.mxu0 0.0
    %3099 = vmatpush1.xpose.msra.mxu0 0.0
    %3100 = vmatprep.subr.mxu0 0.0
    %3101 = vmatpush1.xpose.msra.mxu0 0.0
    %3102 = vmatprep.subr.mxu0 0.0
    %3103 = vmatpush1.xpose.msra.mxu0 0.0
    %3104 = vmatprep.subr.mxu0 0.0
    %3105 = vmatpush1.xpose.msra.mxu0 0.0
    %3106 = vmatprep.subr.mxu0 0.0
    %3107 = vmatpush1.xpose.msra.mxu0 0.0
    %3108 = vmatprep.subr.mxu0 0.0
    %3109 = vmatpush1.xpose.msra.mxu0 0.0
    %3110 = vmatprep.subr.mxu0 0.0
    %3111 = vmatpush1.xpose.msra.mxu0 0.0
    %3112 = vmatprep.subr.mxu0 0.0
    %3113 = vmatpush1.xpose.msra.mxu0 0.0
    %3114 = vmatprep.mubr.f32.mxu0 0.0
    %3115 = vmatmul.mubr.f32.gmra.mrb[0].mxu0 %v3033
    %v3116 = vpop.f32.mrb[0].mxu0
    %v3117 = vadd.f32 %v3030, %v3116
    %v3118 = vpop.f32.mrb[0].mxu0
    %3119 = vmatprep.mubr.f32.mxu0 0.0
    %3120 = vmatmul.mubr.f32.gmra.mrb[0].mxu0 %v3036
    %v3121 = vpop.f32.mrb[0].mxu0
    %v3122 = vadd.f32 %v3030, %v3121
    %v3123 = vpop.f32.mrb[0].mxu0
    %3124 = vdwg.mxu0
    %v3125 = vadd.f32 %v2893, %v3117
    %v3126 = vadd.f32 %v2894, %v3122
    %s3127 = scalar_lea.vmem %s15, 1
    %v3128 = vld [vmem:[%s3127] sm:$0x1]
    %s3129 = scalar_lea.vmem %s16, 1
    %v3130 = vld [vmem:[%s3129] sm:$0x1]
    %v3131 = vsel %vm168, %v3125, 0.0
    %3132 = vadd.xlane.f32.xlu0 %v3131
    %v3133 = vpop.xlane.xlu0 %3132
    %v3134 = vsel %vm168, %v3126, 0.0
    %3135 = vadd.xlane.f32.xlu0 %v3134
    %v3136 = vpop.xlane.xlu0 %3135
    %v3137 = vmul.f32 %v3133, %v1349
    %v3138 = vmul.f32 %v3136, %v1349
    %v3139 = vsub.f32 %v3125, %v3137
    %v3140 = vsub.f32 %v3126, %v3138
    %v3141 = vmul.f32 %v3139, %v3139
    %v3142 = vmul.f32 %v3140, %v3140
    %v3143 = vsel %vm168, %v3141, 0.0
    %3144 = vadd.xlane.f32.xlu0 %v3143
    %v3145 = vpop.xlane.xlu0 %3144
    %v3146 = vsel %vm168, %v3142, 0.0
    %3147 = vadd.xlane.f32.xlu0 %v3146
    %v3148 = vpop.xlane.xlu0 %3147
    %v3149 = vmul.f32 %v3145, %v1349
    %v3150 = vmul.f32 %v3148, %v1349
    %v3151 = vadd.f32 %v3149, 1e-05
    %v3152 = vadd.f32 %v3150, 1e-05
    %v3153 = vrsqrt.pop %v3151
    %v3154 = vrsqrt.pop %v3152
    %v3155 = vmul.f32 %v3139, %v3153
    %v3156 = vmul.f32 %v3140, %v3154
    %v3158 = vlaneseq
    %v3159 = vshrl.u32 %v3158, 7
    %v3160 = vsub.s32 0, %v3159
    %v3161 = vrot.slane %v3128, %v3160
    %v3163 = vmul.f32 %v3155, %v3161
    %v3164 = vmul.f32 %v3156, %v3161
    %v3166 = vlaneseq
    %v3167 = vshrl.u32 %v3166, 7
    %v3168 = vsub.s32 0, %v3167
    %v3169 = vrot.slane %v3130, %v3168
    %v3171 = vadd.f32 %v3163, %v3169
    %v3172 = vadd.f32 %v3164, %v3169
    %3173 = vst.msk [vmem:[#allocation10] sm:$0xff] %vm168, %v3171
    %3174 = vst.msk [vmem:[#allocation10 + $0x8] sm:$0xff] %vm168, %v3172
    // Predicated region
    $region86: #{transformer_layer.1} parent=1 // pred_check
      _
    $region87: #{transformer_layer.1} parent=1 // pred_check_branch
      %3176 = sbr.rel (0) target = $region89
    $region88: #{transformer_layer.1} parent=1 // pred_region
      %s3178 = ssub.s32 256, 256
      %3179 = vsyncadd [#allocation4], %s3178
      %s3180 = sshll.u32 [#allocation10], 4
      %s3181 = int_to_ptr.vmem [resolvable:$true] %s3180
      %3186 = dma.vmem_to_hbm [thread:$0]  %s3181, 256, %s17, [#allocation4], 128, 128, 8
    $region89: #{transformer_layer.1} parent=1 // pred_fallthru
      _
    // Predicated region
    $region90: #{transformer_layer.1} parent=1 // pred_check
      _
    $region91: #{transformer_layer.1} parent=1 // pred_check_branch
      %3188 = sbr.rel (0) target = $region93
    $region92: #{transformer_layer.1} parent=1 // pred_region
      %3189 = dma.done [#allocation4], 256
    $region93: #{transformer_layer.1} parent=1 // pred_fallthru
      _
    %3190 = vsyncpa [#allocation3], 1
    %3191 = vsyncpa [#allocation6], 1
    %3192 = vsyncpa [#allocation9], 1
    %3193 = vsyncpa [#allocation4], 1

</llo_original>
